<compile_context>
chip_gen: v7x
topology: tpu7x:2x2x1
jax: 0.10.0
libtpu: 0.0.40
codegen_flags: <defaults>
</compile_context>

<pallas_src>
import numpy as np
import jax
import jax.numpy as jnp
from jax.experimental import pallas as pl
from jax.experimental.pallas import tpu as pltpu


# --------------------------------------------------------------------------- #
# Kernel A: core decoder step (@ j==0) + streamed logits tiles + online max/sum
# Grid: (num_vocab_tiles,)  -- "arbitrary" (carried reduction for m / l).
# --------------------------------------------------------------------------- #
def core_stats_kernel(
    # resident activations
    tgt_ref,        # (B, E)      embedded target tokens
    h0_ref,         # (B, H)      previous LSTM hidden
    c0_ref,         # (B, H)      previous LSTM cell
    enc_feat_ref,   # (B, M, 2H)  encoder features (W_h * enc_outputs)
    mask_ref,       # (B, M)      enc_padding_mask (1 = pad)
    cont_ref,       # (B, 2H)     input context vector
    cov_ref,        # (B, M)      coverage
    # resident params (all (in, out) layout, biases are (1, out))
    wxc_c_ref, wxc_t_ref, bxc_ref,          # x_context split: cont_v part / target part
    wih_ref, whh_ref, blstm_ref,            # LSTM (gate order i,f,g,o), blstm = b_ih + b_hh
    wdp_h_ref, wdp_c_ref, bdp_ref,          # attention decode_proj split: h part / c part
    wc_ref,                                 # attention w_c  (1, 2H)
    v_ref,                                  # attention v    (1, 2H)
    wpg_c_ref, wpg_h_ref, wpg_cc_ref, wpg_x_ref, bpg_ref,   # p_gen_linear split
    w1_h_ref, w1_c_ref, b1_ref,             # out1 split: lstm_out part / cont_v part
    # streamed over the vocab grid
    w2_ref,         # (H, TILE_V) tile of (zero-padded) out2 weight
    b2_ref,         # (1, TILE_V) tile of out2 bias (-1e30 on padded columns)
    # outputs
    h_ref,          # (B, H)
    c_ref,          # (B, H)
    attn_ref,       # (B, M)
    pgen_ref,       # (B, 1)
    cov_out_ref,    # (B, M)
    attn_bd_ref,    # (B, B*M)    block-diagonal (1-p_gen)*attn (for MXU scatter)
    logits_ref,     # (B, TILE_V) tile of padded logits
    m_ref,          # (B, 1)      row max of logits
    pgscale_ref,    # (B, 1)      p_gen / sum(exp(logits - m))
    # scratch
    out1_scr,       # (B, H)
    pg_scr,         # (B, 1)
    m_scr,          # (B, 1)
    l_scr,          # (B, 1)
):
    f32 = jnp.float32
    j = pl.program_id(0)
    nj = pl.num_programs(0)
    H = h_ref.shape[1]

    # ---------------- core decoder step: runs only on the first vocab tile ----
    @pl.when(j == 0)
    def _core():
        cont_v = cont_ref[...]
        tgt = tgt_ref[...]

        # x = x_context(cat(cont_v, target_embbed))  (concat removed via split weights)
        x = (jnp.dot(cont_v, wxc_c_ref[...], preferred_element_type=f32)
             + jnp.dot(tgt, wxc_t_ref[...], preferred_element_type=f32)
             + bxc_ref[...])

        # single-step LSTM cell
        gates = (jnp.dot(x, wih_ref[...], preferred_element_type=f32)
                 + jnp.dot(h0_ref[...], whh_ref[...], preferred_element_type=f32)
                 + blstm_ref[...])
        i_g = jax.nn.sigmoid(gates[:, 0 * H:1 * H])
        f_g = jax.nn.sigmoid(gates[:, 1 * H:2 * H])
        g_g = jnp.tanh(gates[:, 2 * H:3 * H])
        o_g = jax.nn.sigmoid(gates[:, 3 * H:4 * H])
        c_new = f_g * c0_ref[...] + i_g * g_g
        h_new = o_g * jnp.tanh(c_new)
        h_ref[...] = h_new
        c_ref[...] = c_new

        # attention with coverage (dec_proj concat removed via split weights)
        dec_feat = (jnp.dot(h_new, wdp_h_ref[...], preferred_element_type=f32)
                    + jnp.dot(c_new, wdp_c_ref[...], preferred_element_type=f32)
                    + bdp_ref[...])
        cov = cov_ref[...]
        att = (enc_feat_ref[...] + dec_feat[:, None, :]
               + cov[:, :, None] * wc_ref[...][None, :, :])                # (B, M, 2H)
        scores = jnp.sum(jnp.tanh(att) * v_ref[...][None, :, :], axis=2)   # (B, M)
        scores = scores - jnp.max(scores, axis=1, keepdims=True)
        e = jnp.exp(scores)
        sm = e / jnp.sum(e, axis=1, keepdims=True)
        attn = sm * (1.0 - mask_ref[...])
        attn = attn / jnp.sum(attn, axis=1, keepdims=True)
        attn_ref[...] = attn
        cov_out_ref[...] = cov + attn
        # context_vec = bmm(attn, enc_outputs) is dead code in the PyTorch forward.

        # p_gen (concat removed via split weights)
        p_gen = jax.nn.sigmoid(
            jnp.dot(cont_v, wpg_c_ref[...], preferred_element_type=f32)
            + jnp.dot(h_new, wpg_h_ref[...], preferred_element_type=f32)
            + jnp.dot(c_new, wpg_cc_ref[...], preferred_element_type=f32)
            + jnp.dot(x, wpg_x_ref[...], preferred_element_type=f32)
            + bpg_ref[...])
        pgen_ref[...] = p_gen
        pg_scr[...] = p_gen

        # out1 (no nonlinearity in the original module)
        out1_scr[...] = (jnp.dot(h_new, w1_h_ref[...], preferred_element_type=f32)
                         + jnp.dot(cont_v, w1_c_ref[...], preferred_element_type=f32)
                         + b1_ref[...])

        # Block-diagonal (1 - p_gen) * attn, so the pointer scatter in pass 2 becomes a
        # single 2-D MXU matmul with a per-tile one-hot:   (B, B*M) @ (B*M, TILE_V).
        nb, nm = attn.shape
        attn_p = (1.0 - p_gen) * attn                                      # (B, M)
        tiled = jnp.concatenate([attn_p] * nb, axis=1)                     # (B, B*M)
        colb = jax.lax.broadcasted_iota(jnp.int32, (nb, nb * nm), 1)
        rowb = jax.lax.broadcasted_iota(jnp.int32, (nb, nb * nm), 0)
        keep = (colb >= rowb * nm) & (colb < (rowb + 1) * nm)
        attn_bd_ref[...] = jnp.where(keep, tiled, 0.0)

        # init online softmax stats
        m_scr[...] = jnp.full_like(m_scr, -1e30)
        l_scr[...] = jnp.zeros_like(l_scr)

    # ---------------- every vocab tile: logits + online max / sum-exp ---------
    logits = (jnp.dot(out1_scr[...], w2_ref[...], preferred_element_type=f32)
              + b2_ref[...])                                               # (B, TILE_V)
    logits_ref[...] = logits
    m_old = m_scr[...]
    m_new = jnp.maximum(m_old, jnp.max(logits, axis=1, keepdims=True))
    l_scr[...] = (l_scr[...] * jnp.exp(m_old - m_new)
                  + jnp.sum(jnp.exp(logits - m_new), axis=1, keepdims=True))
    m_scr[...] = m_new

    @pl.when(j == nj - 1)
    def _finalize():
        m_ref[...] = m_scr[...]
        # Fold p_gen and the softmax denominator into one per-row scale: removes the
        # per-element divide from the (B, V) vocab path entirely.
        pgscale_ref[...] = pg_scr[...] / l_scr[...]


# --------------------------------------------------------------------------- #
# Kernel B: per-vocab-tile finalize  final = (p_gen/l)*exp(logit-m) + scatter.
# Grid: (num_vocab_tiles,)  -- "parallel" (independent tiles; megacore on v7x).
# --------------------------------------------------------------------------- #
def finalize_kernel(logits_ref, m_ref, pgscale_ref, attn_bd_ref, ids_ref, final_ref):
    f32 = jnp.float32
    j = pl.program_id(0)
    T = final_ref.shape[1]
    BM = ids_ref.shape[0]

    # vocab part of the mixture (padded columns have logit = -1e30 -> exp == 0)
    vocab_part = pgscale_ref[...] * jnp.exp(logits_ref[...] - m_ref[...])   # (B, T)

    # pointer scatter for this tile: one-hot (B*M, T) fed to the MXU.
    col = jax.lax.broadcasted_iota(jnp.int32, (BM, T), 1) + j * T
    onehot = (col == ids_ref[...]).astype(f32)                              # (B*M, T)
    scat = jnp.dot(attn_bd_ref[...], onehot, preferred_element_type=f32)    # (B, T)

    final_ref[...] = vocab_part + scat


# --------------------------------------------------------------------------- #
# Wrapper: weight splitting / padding, two pallas_calls, output slicing.
# --------------------------------------------------------------------------- #
def decoder_forward(params, emb_table, target, h_c_1, enc_outputs, enc_feature,
                    enc_padding_mask, cont_v, enc_oov_len, enc_batch, coverage,
                    tile_v=512):
    B, M, N = enc_outputs.shape
    H = N // 2
    V = params['w2'].shape[1]

    # torch.max(enc_oov_len) -> static host-side int (sets output width); the padded
    # width below is bucketed to a multiple of tile_v so one compiled kernel stays hot.
    max_oov = int(np.max(np.asarray(enc_oov_len)))
    Vext = V + max_oov

    tile_v = max(128, 128 * (tile_v // 128))
    nT = -(-Vext // tile_v)
    Vp = nT * tile_v
    pad_cols = Vp - V

    # ---- split / pad weights (removes in-kernel concats; pads out2 over vocab) ----
    wxc_c, wxc_t = params['wxc'][:N, :], params['wxc'][N:, :]
    wdp_h, wdp_c = params['wdp'][:H, :], params['wdp'][H:, :]
    wpg = params['wpg']                      # rows: [cont_v(2H) | h(H) | c(H) | x(E)]
    wpg_c, wpg_h = wpg[:N, :], wpg[N:N + H, :]
    wpg_cc, wpg_x = wpg[N + H:N + 2 * H, :], wpg[N + 2 * H:, :]
    w1_h, w1_c = params['w1'][:H, :], params['w1'][H:, :]
    w2p = jnp.pad(params['w2'], ((0, 0), (0, pad_cols)))
    b2p = jnp.pad(params['b2'], ((0, 0), (0, pad_cols)), constant_values=-1e30)

    # ---- activations (glue) ----
    tgt_emb = emb_table[target].astype(jnp.float32)
    h0 = h_c_1[0].reshape(B, H).astype(jnp.float32)
    c0 = h_c_1[1].reshape(B, H).astype(jnp.float32)
    enc_feat3 = enc_feature.reshape(B, M, N).astype(jnp.float32)
    ids_col = enc_batch.reshape(B * M, 1).astype(jnp.int32)

    resident_inputs = (
        tgt_emb, h0, c0, enc_feat3,
        enc_padding_mask.astype(jnp.float32),
        cont_v.astype(jnp.float32), coverage.astype(jnp.float32),
        wxc_c, wxc_t, params['bxc'],
        params['wih'], params['whh'], params['blstm'],
        wdp_h, wdp_c, params['bdp'], params['wc'], params['v'],
        wpg_c, wpg_h, wpg_cc, wpg_x, params['bpg'],
        w1_h, w1_c, params['b1'],
    )

    def res_in(a):
        return pl.BlockSpec(a.shape, lambda j: (0,) * a.ndim)

    def res_out(shape):
        return pl.BlockSpec(shape, lambda j: (0,) * len(shape))

    in_specs_a = [res_in(a) for a in resident_inputs] + [
        pl.BlockSpec((H, tile_v), lambda j: (0, j)),     # w2 tiles (streamed)
        pl.BlockSpec((1, tile_v), lambda j: (0, j)),     # b2 tiles
    ]
    out_shapes_a = (
        jax.ShapeDtypeStruct((B, H), jnp.float32),       # h_new
        jax.ShapeDtypeStruct((B, H), jnp.float32),       # c_new
        jax.ShapeDtypeStruct((B, M), jnp.float32),       # attn_dist
        jax.ShapeDtypeStruct((B, 1), jnp.float32),       # p_gen
        jax.ShapeDtypeStruct((B, M), jnp.float32),       # coverage'
        jax.ShapeDtypeStruct((B, B * M), jnp.float32),   # block-diag (1-p_gen)*attn
        jax.ShapeDtypeStruct((B, Vp), jnp.float32),      # padded logits
        jax.ShapeDtypeStruct((B, 1), jnp.float32),       # m
        jax.ShapeDtypeStruct((B, 1), jnp.float32),       # p_gen / l
    )
    out_specs_a = (
        res_out((B, H)), res_out((B, H)), res_out((B, M)), res_out((B, 1)),
        res_out((B, M)), res_out((B, B * M)),
        pl.BlockSpec((B, tile_v), lambda j: (0, j)),
        res_out((B, 1)), res_out((B, 1)),
    )
    scratch_a = [
        pltpu.VMEM((B, H), jnp.float32),   # out1 activation
        pltpu.VMEM((B, 1), jnp.float32),   # p_gen
        pltpu.VMEM((B, 1), jnp.float32),   # running max
        pltpu.VMEM((B, 1), jnp.float32),   # running sum-exp
    ]

    (h_new, c_new, attn, p_gen, cov_new, attn_bd, logits, m_row, pg_scale) = pl.pallas_call(
        core_stats_kernel,
        out_shape=out_shapes_a,
        grid=(nT,),
        in_specs=in_specs_a,
        out_specs=out_specs_a,
        scratch_shapes=scratch_a,
        compiler_params=pltpu.CompilerParams(
            dimension_semantics=("arbitrary",),
            vmem_limit_bytes=48 * 1024 * 1024),
    )(*resident_inputs, w2p, b2p)

    final_p = pl.pallas_call(
        finalize_kernel,
        out_shape=jax.ShapeDtypeStruct((B, Vp), jnp.float32),
        grid=(nT,),
        in_specs=[
            pl.BlockSpec((B, tile_v), lambda j: (0, j)),   # logits tiles
            res_out((B, 1)),                                # m
            res_out((B, 1)),                                # p_gen / l
            res_out((B, B * M)),                            # block-diag attn
            res_out((B * M, 1)),                            # source token ids
        ],
        out_specs=pl.BlockSpec((B, tile_v), lambda j: (0, j)),
        compiler_params=pltpu.CompilerParams(
            dimension_semantics=("parallel",),
            vmem_limit_bytes=48 * 1024 * 1024),
    )(logits, m_row, pg_scale, attn_bd, ids_col)

    final = final_p[:, :Vext]
    h_c = (h_new.reshape(1, B, H), c_new.reshape(1, B, H))
    # PyTorch returns the *input* cont_v unchanged.
    return final, h_c, cont_v, attn, p_gen, cov_new


# --------------------------------------------------------------------------- #
# Deterministic parameter init (shapes from the module's __init__)
# --------------------------------------------------------------------------- #
def init_params(key, hid, emb, vocab):
    def linear(k, fi, fo, bias=True):
        k1, k2 = jax.random.split(k)
        bound = 1.0 / np.sqrt(fi)
        w = jax.random.uniform(k1, (fi, fo), jnp.float32, -bound, bound)
        b = (jax.random.uniform(k2, (1, fo), jnp.float32, -bound, bound)
             if bias else None)
        return w, b

    ks = jax.random.split(key, 9)
    p = {}
    p['wxc'], p['bxc'] = linear(ks[0], 2 * hid + emb, emb)        # x_context
    p['wih'], bih = linear(ks[1], emb, 4 * hid)                   # LSTM
    p['whh'], bhh = linear(ks[2], hid, 4 * hid)
    p['blstm'] = bih + bhh
    p['wdp'], p['bdp'] = linear(ks[3], 2 * hid, 2 * hid)          # decode_proj
    p['wc'], _ = linear(ks[4], 1, 2 * hid, bias=False)            # w_c   (1, 2H)
    v, _ = linear(ks[5], 2 * hid, 1, bias=False)                  # v
    p['v'] = v.reshape(1, 2 * hid)
    p['wpg'], p['bpg'] = linear(ks[6], 4 * hid + emb, 1)          # p_gen_linear
    p['w1'], p['b1'] = linear(ks[7], 3 * hid, hid)                # out1
    p['w2'], p['b2'] = linear(ks[8], hid, vocab)                  # out2
    return p


# --------------------------------------------------------------------------- #
# Pure-JAX reference (mirrors the PyTorch math) for verification
# --------------------------------------------------------------------------- #
def reference_forward(params, emb_table, target, h0, c0, enc_outputs, enc_feature,
                      mask, cont_v, enc_batch, coverage, max_oov):
    hp = lambda a, b: jnp.dot(a, b, precision=jax.lax.Precision.HIGHEST)
    B, M, N = enc_outputs.shape
    H = h0.shape[-1]
    tgt = emb_table[target]
    x = hp(jnp.concatenate([cont_v, tgt], 1), params['wxc']) + params['bxc']
    gates = hp(x, params['wih']) + hp(h0, params['whh']) + params['blstm']
    i = jax.nn.sigmoid(gates[:, :H]); f = jax.nn.sigmoid(gates[:, H:2 * H])
    g = jnp.tanh(gates[:, 2 * H:3 * H]); o = jax.nn.sigmoid(gates[:, 3 * H:])
    c_new = f * c0 + i * g
    h_new = o * jnp.tanh(c_new)
    h_c_hat = jnp.concatenate([h_new, c_new], 1)
    dec_feat = hp(h_c_hat, params['wdp']) + params['bdp']
    att = (enc_feature.reshape(B, M, N) + dec_feat[:, None, :]
           + coverage[:, :, None] * params['wc'][None, :, :])
    scores = jnp.sum(jnp.tanh(att) * params['v'][None, :, :], axis=2)
    scores = scores - scores.max(1, keepdims=True)
    e = jnp.exp(scores); sm = e / e.sum(1, keepdims=True)
    attn = sm * (1 - mask)
    attn = attn / attn.sum(1, keepdims=True)
    cov_new = coverage + attn
    p_gen = jax.nn.sigmoid(
        hp(jnp.concatenate([cont_v, h_c_hat, x], 1), params['wpg']) + params['bpg'])
    out = hp(jnp.concatenate([h_new, cont_v], 1), params['w1']) + params['b1']
    logits = hp(out, params['w2']) + params['b2']
    logits = logits - logits.max(1, keepdims=True)
    ev = jnp.exp(logits)
    vd = ev / ev.sum(1, keepdims=True)
    vdp = p_gen * vd
    adp = (1 - p_gen) * attn
    ext = jnp.concatenate([vdp, jnp.zeros((B, max_oov), jnp.float32)], 1)
    final = ext.at[jnp.arange(B)[:, None], enc_batch].add(adp)
    return final, h_new, c_new, attn, p_gen, cov_new


if __name__ == "__main__":
    # batch, hid_size, emb_size, src len, vocab (V chosen so the vocab grid has 3 tiles)
    B, H, E, M, V = 2, 32, 32, 8, 300
    key = jax.random.PRNGKey(0)
    kp, ke, k0, k1, k2, k3, k4 = jax.random.split(key, 7)

    params = init_params(kp, H, E, V)
    emb_table = jax.random.normal(ke, (V, E), jnp.float32) * 0.1   # embedding_headline

    target = jnp.array([3, 7], jnp.int32)
    h0 = jax.random.normal(k0, (1, B, H), jnp.float32) * 0.1
    c0 = jax.random.normal(k1, (1, B, H), jnp.float32) * 0.1
    enc_outputs = jax.random.normal(k2, (B, M, 2 * H), jnp.float32) * 0.1
    enc_feature = jax.random.normal(k3, (B * M, 2 * H), jnp.float32) * 0.1
    mask = jnp.zeros((B, M), jnp.float32).at[0, -2:].set(1.0).at[1, -3:].set(1.0)
    cont_v = jnp.zeros((B, 2 * H), jnp.float32)
    coverage = jnp.zeros((B, M), jnp.float32)
    enc_oov_len = np.array([3, 5], np.int32)
    max_oov = int(enc_oov_len.max())
    enc_batch = jax.random.randint(k4, (B, M), 0, V + max_oov, jnp.int32)

    final, h_c, cont_out, attn, p_gen, cov_new = decoder_forward(
        params, emb_table, target, (h0, c0), enc_outputs, enc_feature,
        mask, cont_v, enc_oov_len, enc_batch, coverage, tile_v=128)
    jax.block_until_ready(final)

    rf, rh, rc, ra, rp, rcov = reference_forward(
        params, emb_table, target, h0.reshape(B, H), c0.reshape(B, H),
        enc_outputs, enc_feature, mask, cont_v, enc_batch, coverage, max_oov)

    np.testing.assert_allclose(np.asarray(final), np.asarray(rf), rtol=1e-3, atol=1e-4)
    np.testing.assert_allclose(np.asarray(h_c[0]).reshape(B, H), np.asarray(rh),
                               rtol=1e-3, atol=1e-4)
    np.testing.assert_allclose(np.asarray(h_c[1]).reshape(B, H), np.asarray(rc),
                               rtol=1e-3, atol=1e-4)
    np.testing.assert_allclose(np.asarray(attn), np.asarray(ra), rtol=1e-3, atol=1e-4)
    np.testing.assert_allclose(np.asarray(p_gen), np.asarray(rp), rtol=1e-3, atol=1e-4)
    np.testing.assert_allclose(np.asarray(cov_new), np.asarray(rcov), rtol=1e-3, atol=1e-4)

    print("KERNEL_OK")
</pallas_src>

<mosaic_0001>
module attributes {stable_mosaic.version = 11 : i64} {
  func.func @core_stats_kernel(%arg0: i32, %arg1: memref<2x32xf32, #tpu.memory_space<vmem>>, %arg2: memref<2x32xf32, #tpu.memory_space<vmem>>, %arg3: memref<2x32xf32, #tpu.memory_space<vmem>>, %arg4: memref<2x8x64xf32, #tpu.memory_space<vmem>>, %arg5: memref<2x8xf32, #tpu.memory_space<vmem>>, %arg6: memref<2x64xf32, #tpu.memory_space<vmem>>, %arg7: memref<2x8xf32, #tpu.memory_space<vmem>>, %arg8: memref<64x32xf32, #tpu.memory_space<vmem>>, %arg9: memref<32x32xf32, #tpu.memory_space<vmem>>, %arg10: memref<1x32xf32, #tpu.memory_space<vmem>>, %arg11: memref<32x128xf32, #tpu.memory_space<vmem>>, %arg12: memref<32x128xf32, #tpu.memory_space<vmem>>, %arg13: memref<1x128xf32, #tpu.memory_space<vmem>>, %arg14: memref<32x64xf32, #tpu.memory_space<vmem>>, %arg15: memref<32x64xf32, #tpu.memory_space<vmem>>, %arg16: memref<1x64xf32, #tpu.memory_space<vmem>>, %arg17: memref<1x64xf32, #tpu.memory_space<vmem>>, %arg18: memref<1x64xf32, #tpu.memory_space<vmem>>, %arg19: memref<64x1xf32, #tpu.memory_space<vmem>>, %arg20: memref<32x1xf32, #tpu.memory_space<vmem>>, %arg21: memref<32x1xf32, #tpu.memory_space<vmem>>, %arg22: memref<32x1xf32, #tpu.memory_space<vmem>>, %arg23: memref<1x1xf32, #tpu.memory_space<vmem>>, %arg24: memref<32x32xf32, #tpu.memory_space<vmem>>, %arg25: memref<64x32xf32, #tpu.memory_space<vmem>>, %arg26: memref<1x32xf32, #tpu.memory_space<vmem>>, %arg27: memref<32x128xf32, #tpu.memory_space<vmem>>, %arg28: memref<1x128xf32, #tpu.memory_space<vmem>>, %arg29: memref<2x32xf32, #tpu.memory_space<vmem>>, %arg30: memref<2x32xf32, #tpu.memory_space<vmem>>, %arg31: memref<2x8xf32, #tpu.memory_space<vmem>>, %arg32: memref<2x1xf32, #tpu.memory_space<vmem>>, %arg33: memref<2x8xf32, #tpu.memory_space<vmem>>, %arg34: memref<2x16xf32, #tpu.memory_space<vmem>>, %arg35: memref<2x128xf32, #tpu.memory_space<vmem>>, %arg36: memref<2x1xf32, #tpu.memory_space<vmem>>, %arg37: memref<2x1xf32, #tpu.memory_space<vmem>>, %arg38: memref<2x32xf32, #tpu.memory_space<vmem>>, %arg39: memref<2x1xf32, #tpu.memory_space<vmem>>, %arg40: memref<2x1xf32, #tpu.memory_space<vmem>>, %arg41: memref<2x1xf32, #tpu.memory_space<vmem>>) attributes {dimension_semantics = [#tpu.dimension_semantics<arbitrary>], iteration_bounds = array<i64: 3>, scalar_prefetch = 0 : i64, scratch_operands = 4 : i64, tpu.core_type = #tpu.core_type<tc>, window_params = [{pipeline_mode = #tpu.pipeline_mode<synchronous>, transform_indices = @transform_0, window_bounds = array<i64: 2, 32>}, {pipeline_mode = #tpu.pipeline_mode<synchronous>, transform_indices = @transform_1, window_bounds = array<i64: 2, 32>}, {pipeline_mode = #tpu.pipeline_mode<synchronous>, transform_indices = @transform_2, window_bounds = array<i64: 2, 32>}, {pipeline_mode = #tpu.pipeline_mode<synchronous>, transform_indices = @transform_3, window_bounds = array<i64: 2, 8, 64>}, {pipeline_mode = #tpu.pipeline_mode<synchronous>, transform_indices = @transform_4, window_bounds = array<i64: 2, 8>}, {pipeline_mode = #tpu.pipeline_mode<synchronous>, transform_indices = @transform_5, window_bounds = array<i64: 2, 64>}, {pipeline_mode = #tpu.pipeline_mode<synchronous>, transform_indices = @transform_6, window_bounds = array<i64: 2, 8>}, {pipeline_mode = #tpu.pipeline_mode<synchronous>, transform_indices = @transform_7, window_bounds = array<i64: 64, 32>}, {pipeline_mode = #tpu.pipeline_mode<synchronous>, transform_indices = @transform_8, window_bounds = array<i64: 32, 32>}, {pipeline_mode = #tpu.pipeline_mode<synchronous>, transform_indices = @transform_9, window_bounds = array<i64: 1, 32>}, {pipeline_mode = #tpu.pipeline_mode<synchronous>, transform_indices = @transform_10, window_bounds = array<i64: 32, 128>}, {pipeline_mode = #tpu.pipeline_mode<synchronous>, transform_indices = @transform_11, window_bounds = array<i64: 32, 128>}, {pipeline_mode = #tpu.pipeline_mode<synchronous>, transform_indices = @transform_12, window_bounds = array<i64: 1, 128>}, {pipeline_mode = #tpu.pipeline_mode<synchronous>, transform_indices = @transform_13, window_bounds = array<i64: 32, 64>}, {pipeline_mode = #tpu.pipeline_mode<synchronous>, transform_indices = @transform_14, window_bounds = array<i64: 32, 64>}, {pipeline_mode = #tpu.pipeline_mode<synchronous>, transform_indices = @transform_15, window_bounds = array<i64: 1, 64>}, {pipeline_mode = #tpu.pipeline_mode<synchronous>, transform_indices = @transform_16, window_bounds = array<i64: 1, 64>}, {pipeline_mode = #tpu.pipeline_mode<synchronous>, transform_indices = @transform_17, window_bounds = array<i64: 1, 64>}, {pipeline_mode = #tpu.pipeline_mode<synchronous>, transform_indices = @transform_18, window_bounds = array<i64: 64, 1>}, {pipeline_mode = #tpu.pipeline_mode<synchronous>, transform_indices = @transform_19, window_bounds = array<i64: 32, 1>}, {pipeline_mode = #tpu.pipeline_mode<synchronous>, transform_indices = @transform_20, window_bounds = array<i64: 32, 1>}, {pipeline_mode = #tpu.pipeline_mode<synchronous>, transform_indices = @transform_21, window_bounds = array<i64: 32, 1>}, {pipeline_mode = #tpu.pipeline_mode<synchronous>, transform_indices = @transform_22, window_bounds = array<i64: 1, 1>}, {pipeline_mode = #tpu.pipeline_mode<synchronous>, transform_indices = @transform_23, window_bounds = array<i64: 32, 32>}, {pipeline_mode = #tpu.pipeline_mode<synchronous>, transform_indices = @transform_24, window_bounds = array<i64: 64, 32>}, {pipeline_mode = #tpu.pipeline_mode<synchronous>, transform_indices = @transform_25, window_bounds = array<i64: 1, 32>}, {transform_indices = @transform_26, window_bounds = array<i64: 32, 128>}, {transform_indices = @transform_27, window_bounds = array<i64: 1, 128>}, {pipeline_mode = #tpu.pipeline_mode<synchronous>, transform_indices = @transform_28, window_bounds = array<i64: 2, 32>}, {pipeline_mode = #tpu.pipeline_mode<synchronous>, transform_indices = @transform_29, window_bounds = array<i64: 2, 32>}, {pipeline_mode = #tpu.pipeline_mode<synchronous>, transform_indices = @transform_30, window_bounds = array<i64: 2, 8>}, {pipeline_mode = #tpu.pipeline_mode<synchronous>, transform_indices = @transform_31, window_bounds = array<i64: 2, 1>}, {pipeline_mode = #tpu.pipeline_mode<synchronous>, transform_indices = @transform_32, window_bounds = array<i64: 2, 8>}, {pipeline_mode = #tpu.pipeline_mode<synchronous>, transform_indices = @transform_33, window_bounds = array<i64: 2, 16>}, {transform_indices = @transform_34, window_bounds = array<i64: 2, 128>}, {pipeline_mode = #tpu.pipeline_mode<synchronous>, transform_indices = @transform_35, window_bounds = array<i64: 2, 1>}, {pipeline_mode = #tpu.pipeline_mode<synchronous>, transform_indices = @transform_36, window_bounds = array<i64: 2, 1>}]} {
    %c0_i32 = arith.constant 0 : i32
    %0 = arith.cmpi eq, %arg0, %c0_i32 : i32
    %1 = arith.extui %0 : i1 to i32
    %c0_i32_0 = arith.constant 0 : i32
    %2 = arith.cmpi ne, %1, %c0_i32_0 : i32
    scf.if %2 {
      %c0_19 = arith.constant 0 : index
      %c0_20 = arith.constant 0 : index
      %29 = vector.load %arg6[%c0_19, %c0_20] : memref<2x64xf32, #tpu.memory_space<vmem>>, vector<2x64xf32>
      %c0_21 = arith.constant 0 : index
      %c0_22 = arith.constant 0 : index
      %30 = vector.load %arg1[%c0_21, %c0_22] : memref<2x32xf32, #tpu.memory_space<vmem>>, vector<2x32xf32>
      %c0_23 = arith.constant 0 : index
      %c0_24 = arith.constant 0 : index
      %31 = vector.load %arg8[%c0_23, %c0_24] : memref<64x32xf32, #tpu.memory_space<vmem>>, vector<64x32xf32>
      %cst_25 = arith.constant dense<0.000000e+00> : vector<2x32xf32>
      %32 = tpu.matmul %29, %31, %cst_25 {dimension_numbers = #tpu.dot_dimension_numbers<[1], [0], [0], [1], [0, 0, 1, 1], [], []>} : vector<2x64xf32>, vector<64x32xf32>, vector<2x32xf32> -> vector<2x32xf32>
      %c0_26 = arith.constant 0 : index
      %c0_27 = arith.constant 0 : index
      %33 = vector.load %arg9[%c0_26, %c0_27] : memref<32x32xf32, #tpu.memory_space<vmem>>, vector<32x32xf32>
      %cst_28 = arith.constant dense<0.000000e+00> : vector<2x32xf32>
      %34 = tpu.matmul %30, %33, %cst_28 {dimension_numbers = #tpu.dot_dimension_numbers<[1], [0], [0], [1], [0, 0, 1, 1], [], []>} : vector<2x32xf32>, vector<32x32xf32>, vector<2x32xf32> -> vector<2x32xf32>
      %35 = arith.addf %32, %34 : vector<2x32xf32>
      %c0_29 = arith.constant 0 : index
      %c0_30 = arith.constant 0 : index
      %36 = vector.load %arg10[%c0_29, %c0_30] : memref<1x32xf32, #tpu.memory_space<vmem>>, vector<1x32xf32>
      %37 = vector.broadcast %36 : vector<1x32xf32> to vector<2x32xf32>
      %38 = arith.addf %35, %37 : vector<2x32xf32>
      %c0_31 = arith.constant 0 : index
      %c0_32 = arith.constant 0 : index
      %39 = vector.load %arg11[%c0_31, %c0_32] : memref<32x128xf32, #tpu.memory_space<vmem>>, vector<32x128xf32>
      %cst_33 = arith.constant dense<0.000000e+00> : vector<2x128xf32>
      %40 = tpu.matmul %38, %39, %cst_33 {dimension_numbers = #tpu.dot_dimension_numbers<[1], [0], [0], [1], [0, 0, 1, 1], [], []>} : vector<2x32xf32>, vector<32x128xf32>, vector<2x128xf32> -> vector<2x128xf32>
      %c0_34 = arith.constant 0 : index
      %c0_35 = arith.constant 0 : index
      %41 = vector.load %arg2[%c0_34, %c0_35] : memref<2x32xf32, #tpu.memory_space<vmem>>, vector<2x32xf32>
      %c0_36 = arith.constant 0 : index
      %c0_37 = arith.constant 0 : index
      %42 = vector.load %arg12[%c0_36, %c0_37] : memref<32x128xf32, #tpu.memory_space<vmem>>, vector<32x128xf32>
      %cst_38 = arith.constant dense<0.000000e+00> : vector<2x128xf32>
      %43 = tpu.matmul %41, %42, %cst_38 {dimension_numbers = #tpu.dot_dimension_numbers<[1], [0], [0], [1], [0, 0, 1, 1], [], []>} : vector<2x32xf32>, vector<32x128xf32>, vector<2x128xf32> -> vector<2x128xf32>
      %44 = arith.addf %40, %43 : vector<2x128xf32>
      %c0_39 = arith.constant 0 : index
      %c0_40 = arith.constant 0 : index
      %45 = vector.load %arg13[%c0_39, %c0_40] : memref<1x128xf32, #tpu.memory_space<vmem>>, vector<1x128xf32>
      %46 = vector.broadcast %45 : vector<1x128xf32> to vector<2x128xf32>
      %47 = arith.addf %44, %46 : vector<2x128xf32>
      %48 = vector.extract_strided_slice %47 {offsets = [0, 0], sizes = [2, 32], strides = [1, 1]} : vector<2x128xf32> to vector<2x32xf32>
      %49 = arith.negf %48 : vector<2x32xf32>
      %50 = math.exp %49 : vector<2x32xf32>
      %cst_41 = arith.constant 1.000000e+00 : f32
      %51 = vector.broadcast %cst_41 : f32 to vector<2x32xf32>
      %52 = arith.addf %51, %50 : vector<2x32xf32>
      %53 = arith.divf %51, %52 : vector<2x32xf32>
      %54 = vector.extract_strided_slice %47 {offsets = [0, 32], sizes = [2, 32], strides = [1, 1]} : vector<2x128xf32> to vector<2x32xf32>
      %55 = arith.negf %54 : vector<2x32xf32>
      %56 = math.exp %55 : vector<2x32xf32>
      %cst_42 = arith.constant 1.000000e+00 : f32
      %57 = vector.broadcast %cst_42 : f32 to vector<2x32xf32>
      %58 = arith.addf %57, %56 : vector<2x32xf32>
      %59 = arith.divf %57, %58 : vector<2x32xf32>
      %60 = vector.extract_strided_slice %47 {offsets = [0, 64], sizes = [2, 32], strides = [1, 1]} : vector<2x128xf32> to vector<2x32xf32>
      %61 = math.tanh %60 : vector<2x32xf32>
      %62 = vector.extract_strided_slice %47 {offsets = [0, 96], sizes = [2, 32], strides = [1, 1]} : vector<2x128xf32> to vector<2x32xf32>
      %63 = arith.negf %62 : vector<2x32xf32>
      %64 = math.exp %63 : vector<2x32xf32>
      %cst_43 = arith.constant 1.000000e+00 : f32
      %65 = vector.broadcast %cst_43 : f32 to vector<2x32xf32>
      %66 = arith.addf %65, %64 : vector<2x32xf32>
      %67 = arith.divf %65, %66 : vector<2x32xf32>
      %c0_44 = arith.constant 0 : index
      %c0_45 = arith.constant 0 : index
      %68 = vector.load %arg3[%c0_44, %c0_45] : memref<2x32xf32, #tpu.memory_space<vmem>>, vector<2x32xf32>
      %69 = arith.mulf %59, %68 : vector<2x32xf32>
      %70 = arith.mulf %53, %61 : vector<2x32xf32>
      %71 = arith.addf %69, %70 : vector<2x32xf32>
      %72 = math.tanh %71 : vector<2x32xf32>
      %73 = arith.mulf %67, %72 : vector<2x32xf32>
      %c0_46 = arith.constant 0 : index
      %c0_47 = arith.constant 0 : index
      %74 = vector.load %arg29[%c0_46, %c0_47] : memref<2x32xf32, #tpu.memory_space<vmem>>, vector<2x32xf32>
      tpu.vector_store %arg29[%c0_46, %c0_47], %73 {strides = array<i32>} : memref<2x32xf32, #tpu.memory_space<vmem>>, vector<2x32xf32>,
      %c0_48 = arith.constant 0 : index
      %c0_49 = arith.constant 0 : index
      %75 = vector.load %arg30[%c0_48, %c0_49] : memref<2x32xf32, #tpu.memory_space<vmem>>, vector<2x32xf32>
      tpu.vector_store %arg30[%c0_48, %c0_49], %71 {strides = array<i32>} : memref<2x32xf32, #tpu.memory_space<vmem>>, vector<2x32xf32>,
      %c0_50 = arith.constant 0 : index
      %c0_51 = arith.constant 0 : index
      %76 = vector.load %arg14[%c0_50, %c0_51] : memref<32x64xf32, #tpu.memory_space<vmem>>, vector<32x64xf32>
      %cst_52 = arith.constant dense<0.000000e+00> : vector<2x64xf32>
      %77 = tpu.matmul %73, %76, %cst_52 {dimension_numbers = #tpu.dot_dimension_numbers<[1], [0], [0], [1], [0, 0, 1, 1], [], []>} : vector<2x32xf32>, vector<32x64xf32>, vector<2x64xf32> -> vector<2x64xf32>
      %c0_53 = arith.constant 0 : index
      %c0_54 = arith.constant 0 : index
      %78 = vector.load %arg15[%c0_53, %c0_54] : memref<32x64xf32, #tpu.memory_space<vmem>>, vector<32x64xf32>
      %cst_55 = arith.constant dense<0.000000e+00> : vector<2x64xf32>
      %79 = tpu.matmul %71, %78, %cst_55 {dimension_numbers = #tpu.dot_dimension_numbers<[1], [0], [0], [1], [0, 0, 1, 1], [], []>} : vector<2x32xf32>, vector<32x64xf32>, vector<2x64xf32> -> vector<2x64xf32>
      %80 = arith.addf %77, %79 : vector<2x64xf32>
      %c0_56 = arith.constant 0 : index
      %c0_57 = arith.constant 0 : index
      %81 = vector.load %arg16[%c0_56, %c0_57] : memref<1x64xf32, #tpu.memory_space<vmem>>, vector<1x64xf32>
      %82 = vector.broadcast %81 : vector<1x64xf32> to vector<2x64xf32>
      %83 = arith.addf %80, %82 : vector<2x64xf32>
      %c0_58 = arith.constant 0 : index
      %c0_59 = arith.constant 0 : index
      %84 = vector.load %arg7[%c0_58, %c0_59] : memref<2x8xf32, #tpu.memory_space<vmem>>, vector<2x8xf32>
      %c0_60 = arith.constant 0 : index
      %c0_61 = arith.constant 0 : index
      %c0_62 = arith.constant 0 : index
      %85 = vector.load %arg4[%c0_60, %c0_61, %c0_62] : memref<2x8x64xf32, #tpu.memory_space<vmem>>, vector<2x8x64xf32>
      %86 = vector.shape_cast %83 : vector<2x64xf32> to vector<2x1x64xf32>
      %87 = vector.broadcast %86 : vector<2x1x64xf32> to vector<2x8x64xf32>
      %88 = arith.addf %85, %87 : vector<2x8x64xf32>
      %89 = vector.shape_cast %84 : vector<2x8xf32> to vector<2x8x1xf32>
      %c0_63 = arith.constant 0 : index
      %c0_64 = arith.constant 0 : index
      %90 = vector.load %arg17[%c0_63, %c0_64] : memref<1x64xf32, #tpu.memory_space<vmem>>, vector<1x64xf32>
      %91 = vector.shape_cast %90 : vector<1x64xf32> to vector<1x1x64xf32>
      %92 = vector.broadcast %89 : vector<2x8x1xf32> to vector<2x8x64xf32>
      %93 = vector.broadcast %91 : vector<1x1x64xf32> to vector<2x8x64xf32>
      %94 = arith.mulf %92, %93 : vector<2x8x64xf32>
      %95 = arith.addf %88, %94 : vector<2x8x64xf32>
      %96 = math.tanh %95 : vector<2x8x64xf32>
      %c0_65 = arith.constant 0 : index
      %c0_66 = arith.constant 0 : index
      %97 = vector.load %arg18[%c0_65, %c0_66] : memref<1x64xf32, #tpu.memory_space<vmem>>, vector<1x64xf32>
      %98 = vector.shape_cast %97 : vector<1x64xf32> to vector<1x1x64xf32>
      %99 = vector.broadcast %98 : vector<1x1x64xf32> to vector<2x8x64xf32>
      %100 = arith.mulf %96, %99 : vector<2x8x64xf32>
      %cst_67 = arith.constant dense<0.000000e+00> : vector<2x8xf32>
      %101 = vector.multi_reduction <add>, %100, %cst_67 [2] : vector<2x8x64xf32> to vector<2x8xf32>
      %cst_68 = arith.constant dense<0xFF800000> : vector<2xf32>
      %102 = vector.multi_reduction <maximumf>, %101, %cst_68 [1] : vector<2x8xf32> to vector<2xf32>
      %103 = vector.shape_cast %102 : vector<2xf32> to vector<2x1xf32>
      %104 = vector.broadcast %103 : vector<2x1xf32> to vector<2x8xf32>
      %105 = arith.subf %101, %104 : vector<2x8xf32>
      %106 = math.exp %105 : vector<2x8xf32>
      %cst_69 = arith.constant dense<0.000000e+00> : vector<2xf32>
      %107 = vector.multi_reduction <add>, %106, %cst_69 [1] : vector<2x8xf32> to vector<2xf32>
      %108 = vector.shape_cast %107 : vector<2xf32> to vector<2x1xf32>
      %109 = vector.broadcast %108 : vector<2x1xf32> to vector<2x8xf32>
      %110 = arith.divf %106, %109 : vector<2x8xf32>
      %c0_70 = arith.constant 0 : index
      %c0_71 = arith.constant 0 : index
      %111 = vector.load %arg5[%c0_70, %c0_71] : memref<2x8xf32, #tpu.memory_space<vmem>>, vector<2x8xf32>
      %cst_72 = arith.constant 1.000000e+00 : f32
      %112 = vector.broadcast %cst_72 : f32 to vector<2x8xf32>
      %113 = arith.subf %112, %111 : vector<2x8xf32>
      %114 = arith.mulf %110, %113 : vector<2x8xf32>
      %cst_73 = arith.constant dense<0.000000e+00> : vector<2xf32>
      %115 = vector.multi_reduction <add>, %114, %cst_73 [1] : vector<2x8xf32> to vector<2xf32>
      %116 = vector.shape_cast %115 : vector<2xf32> to vector<2x1xf32>
      %117 = vector.broadcast %116 : vector<2x1xf32> to vector<2x8xf32>
      %118 = arith.divf %114, %117 : vector<2x8xf32>
      %c0_74 = arith.constant 0 : index
      %c0_75 = arith.constant 0 : index
      %119 = vector.load %arg31[%c0_74, %c0_75] : memref<2x8xf32, #tpu.memory_space<vmem>>, vector<2x8xf32>
      tpu.vector_store %arg31[%c0_74, %c0_75], %118 {strides = array<i32>} : memref<2x8xf32, #tpu.memory_space<vmem>>, vector<2x8xf32>,
      %120 = arith.addf %84, %118 : vector<2x8xf32>
      %c0_76 = arith.constant 0 : index
      %c0_77 = arith.constant 0 : index
      %121 = vector.load %arg33[%c0_76, %c0_77] : memref<2x8xf32, #tpu.memory_space<vmem>>, vector<2x8xf32>
      tpu.vector_store %arg33[%c0_76, %c0_77], %120 {strides = array<i32>} : memref<2x8xf32, #tpu.memory_space<vmem>>, vector<2x8xf32>,
      %c0_78 = arith.constant 0 : index
      %c0_79 = arith.constant 0 : index
      %122 = vector.load %arg19[%c0_78, %c0_79] : memref<64x1xf32, #tpu.memory_space<vmem>>, vector<64x1xf32>
      %cst_80 = arith.constant dense<0.000000e+00> : vector<2x1xf32>
      %123 = tpu.matmul %29, %122, %cst_80 {dimension_numbers = #tpu.dot_dimension_numbers<[1], [0], [0], [1], [0, 0, 1, 1], [], []>} : vector<2x64xf32>, vector<64x1xf32>, vector<2x1xf32> -> vector<2x1xf32>
      %c0_81 = arith.constant 0 : index
      %c0_82 = arith.constant 0 : index
      %124 = vector.load %arg20[%c0_81, %c0_82] : memref<32x1xf32, #tpu.memory_space<vmem>>, vector<32x1xf32>
      %cst_83 = arith.constant dense<0.000000e+00> : vector<2x1xf32>
      %125 = tpu.matmul %73, %124, %cst_83 {dimension_numbers = #tpu.dot_dimension_numbers<[1], [0], [0], [1], [0, 0, 1, 1], [], []>} : vector<2x32xf32>, vector<32x1xf32>, vector<2x1xf32> -> vector<2x1xf32>
      %126 = arith.addf %123, %125 : vector<2x1xf32>
      %c0_84 = arith.constant 0 : index
      %c0_85 = arith.constant 0 : index
      %127 = vector.load %arg21[%c0_84, %c0_85] : memref<32x1xf32, #tpu.memory_space<vmem>>, vector<32x1xf32>
      %cst_86 = arith.constant dense<0.000000e+00> : vector<2x1xf32>
      %128 = tpu.matmul %71, %127, %cst_86 {dimension_numbers = #tpu.dot_dimension_numbers<[1], [0], [0], [1], [0, 0, 1, 1], [], []>} : vector<2x32xf32>, vector<32x1xf32>, vector<2x1xf32> -> vector<2x1xf32>
      %129 = arith.addf %126, %128 : vector<2x1xf32>
      %c0_87 = arith.constant 0 : index
      %c0_88 = arith.constant 0 : index
      %130 = vector.load %arg22[%c0_87, %c0_88] : memref<32x1xf32, #tpu.memory_space<vmem>>, vector<32x1xf32>
      %cst_89 = arith.constant dense<0.000000e+00> : vector<2x1xf32>
      %131 = tpu.matmul %38, %130, %cst_89 {dimension_numbers = #tpu.dot_dimension_numbers<[1], [0], [0], [1], [0, 0, 1, 1], [], []>} : vector<2x32xf32>, vector<32x1xf32>, vector<2x1xf32> -> vector<2x1xf32>
      %132 = arith.addf %129, %131 : vector<2x1xf32>
      %c0_90 = arith.constant 0 : index
      %c0_91 = arith.constant 0 : index
      %133 = vector.load %arg23[%c0_90, %c0_91] : memref<1x1xf32, #tpu.memory_space<vmem>>, vector<1x1xf32>
      %134 = vector.broadcast %133 : vector<1x1xf32> to vector<2x1xf32>
      %135 = arith.addf %132, %134 : vector<2x1xf32>
      %136 = arith.negf %135 : vector<2x1xf32>
      %137 = math.exp %136 : vector<2x1xf32>
      %cst_92 = arith.constant 1.000000e+00 : f32
      %138 = vector.broadcast %cst_92 : f32 to vector<2x1xf32>
      %139 = arith.addf %138, %137 : vector<2x1xf32>
      %140 = arith.divf %138, %139 : vector<2x1xf32>
      %c0_93 = arith.constant 0 : index
      %c0_94 = arith.constant 0 : index
      %141 = vector.load %arg32[%c0_93, %c0_94] : memref<2x1xf32, #tpu.memory_space<vmem>>, vector<2x1xf32>
      tpu.vector_store %arg32[%c0_93, %c0_94], %140 {strides = array<i32>} : memref<2x1xf32, #tpu.memory_space<vmem>>, vector<2x1xf32>,
      %c0_95 = arith.constant 0 : index
      %c0_96 = arith.constant 0 : index
      %142 = vector.load %arg39[%c0_95, %c0_96] : memref<2x1xf32, #tpu.memory_space<vmem>>, vector<2x1xf32>
      tpu.vector_store %arg39[%c0_95, %c0_96], %140 {strides = array<i32>} : memref<2x1xf32, #tpu.memory_space<vmem>>, vector<2x1xf32>,
      %c0_97 = arith.constant 0 : index
      %c0_98 = arith.constant 0 : index
      %143 = vector.load %arg24[%c0_97, %c0_98] : memref<32x32xf32, #tpu.memory_space<vmem>>, vector<32x32xf32>
      %cst_99 = arith.constant dense<0.000000e+00> : vector<2x32xf32>
      %144 = tpu.matmul %73, %143, %cst_99 {dimension_numbers = #tpu.dot_dimension_numbers<[1], [0], [0], [1], [0, 0, 1, 1], [], []>} : vector<2x32xf32>, vector<32x32xf32>, vector<2x32xf32> -> vector<2x32xf32>
      %c0_100 = arith.constant 0 : index
      %c0_101 = arith.constant 0 : index
      %145 = vector.load %arg25[%c0_100, %c0_101] : memref<64x32xf32, #tpu.memory_space<vmem>>, vector<64x32xf32>
      %cst_102 = arith.constant dense<0.000000e+00> : vector<2x32xf32>
      %146 = tpu.matmul %29, %145, %cst_102 {dimension_numbers = #tpu.dot_dimension_numbers<[1], [0], [0], [1], [0, 0, 1, 1], [], []>} : vector<2x64xf32>, vector<64x32xf32>, vector<2x32xf32> -> vector<2x32xf32>
      %147 = arith.addf %144, %146 : vector<2x32xf32>
      %c0_103 = arith.constant 0 : index
      %c0_104 = arith.constant 0 : index
      %148 = vector.load %arg26[%c0_103, %c0_104] : memref<1x32xf32, #tpu.memory_space<vmem>>, vector<1x32xf32>
      %149 = vector.broadcast %148 : vector<1x32xf32> to vector<2x32xf32>
      %150 = arith.addf %147, %149 : vector<2x32xf32>
      %c0_105 = arith.constant 0 : index
      %c0_106 = arith.constant 0 : index
      %151 = vector.load %arg38[%c0_105, %c0_106] : memref<2x32xf32, #tpu.memory_space<vmem>>, vector<2x32xf32>
      tpu.vector_store %arg38[%c0_105, %c0_106], %150 {strides = array<i32>} : memref<2x32xf32, #tpu.memory_space<vmem>>, vector<2x32xf32>,
      %cst_107 = arith.constant 1.000000e+00 : f32
      %152 = vector.broadcast %cst_107 : f32 to vector<2x1xf32>
      %153 = arith.subf %152, %140 : vector<2x1xf32>
      %154 = vector.broadcast %153 : vector<2x1xf32> to vector<2x8xf32>
      %155 = arith.mulf %154, %118 : vector<2x8xf32>
      %156 = tpu.concatenate %155, %155 in 1 : vector<2x8xf32>, vector<2x8xf32> -> vector<2x16xf32>
      %157 = tpu.iota {dimensions = array<i32: 1>} : vector<2x16xi32>
      %158 = tpu.iota {dimensions = array<i32: 0>} : vector<2x16xi32>
      %c8_i32 = arith.constant 8 : i32
      %159 = vector.broadcast %c8_i32 : i32 to vector<2x16xi32>
      %160 = arith.muli %158, %159 : vector<2x16xi32>
      %161 = arith.cmpi sge, %157, %160 : vector<2x16xi32>
      %c1_i32 = arith.constant 1 : i32
      %162 = vector.broadcast %c1_i32 : i32 to vector<2x16xi32>
      %163 = arith.addi %158, %162 : vector<2x16xi32>
      %c8_i32_108 = arith.constant 8 : i32
      %164 = vector.broadcast %c8_i32_108 : i32 to vector<2x16xi32>
      %165 = arith.muli %163, %164 : vector<2x16xi32>
      %166 = arith.cmpi slt, %157, %165 : vector<2x16xi32>
      %167 = arith.andi %161, %166 : vector<2x16xi1>
      %cst_109 = arith.constant 0.000000e+00 : f32
      %168 = vector.broadcast %cst_109 : f32 to vector<2x16xf32>
      %169 = arith.select %167, %156, %168 : vector<2x16xi1>, vector<2x16xf32>
      %c0_110 = arith.constant 0 : index
      %c0_111 = arith.constant 0 : index
      %170 = vector.load %arg34[%c0_110, %c0_111] : memref<2x16xf32, #tpu.memory_space<vmem>>, vector<2x16xf32>
      tpu.vector_store %arg34[%c0_110, %c0_111], %169 {strides = array<i32>} : memref<2x16xf32, #tpu.memory_space<vmem>>, vector<2x16xf32>,
      %cst_112 = arith.constant -1.000000e+30 : f32
      %171 = vector.broadcast %cst_112 : f32 to vector<2x1xf32>
      %c0_113 = arith.constant 0 : index
      %c0_114 = arith.constant 0 : index
      %172 = vector.load %arg40[%c0_113, %c0_114] : memref<2x1xf32, #tpu.memory_space<vmem>>, vector<2x1xf32>
      tpu.vector_store %arg40[%c0_113, %c0_114], %171 {strides = array<i32>} : memref<2x1xf32, #tpu.memory_space<vmem>>, vector<2x1xf32>,
      %cst_115 = arith.constant 0.000000e+00 : f32
      %173 = vector.broadcast %cst_115 : f32 to vector<2x1xf32>
      %c0_116 = arith.constant 0 : index
      %c0_117 = arith.constant 0 : index
      %174 = vector.load %arg41[%c0_116, %c0_117] : memref<2x1xf32, #tpu.memory_space<vmem>>, vector<2x1xf32>
      tpu.vector_store %arg41[%c0_116, %c0_117], %173 {strides = array<i32>} : memref<2x1xf32, #tpu.memory_space<vmem>>, vector<2x1xf32>,
    } else {
    }
    %c0 = arith.constant 0 : index
    %c0_1 = arith.constant 0 : index
    %3 = vector.load %arg38[%c0, %c0_1] : memref<2x32xf32, #tpu.memory_space<vmem>>, vector<2x32xf32>
    %c0_2 = arith.constant 0 : index
    %c0_3 = arith.constant 0 : index
    %4 = vector.load %arg27[%c0_2, %c0_3] : memref<32x128xf32, #tpu.memory_space<vmem>>, vector<32x128xf32>
    %cst = arith.constant dense<0.000000e+00> : vector<2x128xf32>
    %5 = tpu.matmul %3, %4, %cst {dimension_numbers = #tpu.dot_dimension_numbers<[1], [0], [0], [1], [0, 0, 1, 1], [], []>} : vector<2x32xf32>, vector<32x128xf32>, vector<2x128xf32> -> vector<2x128xf32>
    %c0_4 = arith.constant 0 : index
    %c0_5 = arith.constant 0 : index
    %6 = vector.load %arg28[%c0_4, %c0_5] : memref<1x128xf32, #tpu.memory_space<vmem>>, vector<1x128xf32>
    %7 = vector.broadcast %6 : vector<1x128xf32> to vector<2x128xf32>
    %8 = arith.addf %5, %7 : vector<2x128xf32>
    %c0_6 = arith.constant 0 : index
    %c0_7 = arith.constant 0 : index
    %9 = vector.load %arg35[%c0_6, %c0_7] : memref<2x128xf32, #tpu.memory_space<vmem>>, vector<2x128xf32>
    tpu.vector_store %arg35[%c0_6, %c0_7], %8 {strides = array<i32>} : memref<2x128xf32, #tpu.memory_space<vmem>>, vector<2x128xf32>,
    %c0_8 = arith.constant 0 : index
    %c0_9 = arith.constant 0 : index
    %10 = vector.load %arg40[%c0_8, %c0_9] : memref<2x1xf32, #tpu.memory_space<vmem>>, vector<2x1xf32>
    %cst_10 = arith.constant dense<0xFF800000> : vector<2xf32>
    %11 = vector.multi_reduction <maximumf>, %8, %cst_10 [1] : vector<2x128xf32> to vector<2xf32>
    %12 = vector.shape_cast %11 : vector<2xf32> to vector<2x1xf32>
    %13 = arith.maximumf %10, %12 : vector<2x1xf32>
    %c0_11 = arith.constant 0 : index
    %c0_12 = arith.constant 0 : index
    %14 = vector.load %arg41[%c0_11, %c0_12] : memref<2x1xf32, #tpu.memory_space<vmem>>, vector<2x1xf32>
    %15 = arith.subf %10, %13 : vector<2x1xf32>
    %16 = math.exp %15 : vector<2x1xf32>
    %17 = arith.mulf %14, %16 : vector<2x1xf32>
    %18 = vector.broadcast %13 : vector<2x1xf32> to vector<2x128xf32>
    %19 = arith.subf %8, %18 : vector<2x128xf32>
    %20 = math.exp %19 : vector<2x128xf32>
    %cst_13 = arith.constant dense<0.000000e+00> : vector<2xf32>
    %21 = vector.multi_reduction <add>, %20, %cst_13 [1] : vector<2x128xf32> to vector<2xf32>
    %22 = vector.shape_cast %21 : vector<2xf32> to vector<2x1xf32>
    %23 = arith.addf %17, %22 : vector<2x1xf32>
    %c0_14 = arith.constant 0 : index
    %c0_15 = arith.constant 0 : index
    %24 = vector.load %arg41[%c0_14, %c0_15] : memref<2x1xf32, #tpu.memory_space<vmem>>, vector<2x1xf32>
    tpu.vector_store %arg41[%c0_14, %c0_15], %23 {strides = array<i32>} : memref<2x1xf32, #tpu.memory_space<vmem>>, vector<2x1xf32>,
    %c0_16 = arith.constant 0 : index
    %c0_17 = arith.constant 0 : index
    %25 = vector.load %arg40[%c0_16, %c0_17] : memref<2x1xf32, #tpu.memory_space<vmem>>, vector<2x1xf32>
    tpu.vector_store %arg40[%c0_16, %c0_17], %13 {strides = array<i32>} : memref<2x1xf32, #tpu.memory_space<vmem>>, vector<2x1xf32>,
    %c2_i32 = arith.constant 2 : i32
    %26 = arith.cmpi eq, %arg0, %c2_i32 : i32
    %27 = arith.extui %26 : i1 to i32
    %c0_i32_18 = arith.constant 0 : i32
    %28 = arith.cmpi ne, %27, %c0_i32_18 : i32
    scf.if %28 {
      %c0_19 = arith.constant 0 : index
      %c0_20 = arith.constant 0 : index
      %29 = vector.load %arg40[%c0_19, %c0_20] : memref<2x1xf32, #tpu.memory_space<vmem>>, vector<2x1xf32>
      %c0_21 = arith.constant 0 : index
      %c0_22 = arith.constant 0 : index
      %30 = vector.load %arg36[%c0_21, %c0_22] : memref<2x1xf32, #tpu.memory_space<vmem>>, vector<2x1xf32>
      tpu.vector_store %arg36[%c0_21, %c0_22], %29 {strides = array<i32>} : memref<2x1xf32, #tpu.memory_space<vmem>>, vector<2x1xf32>,
      %c0_23 = arith.constant 0 : index
      %c0_24 = arith.constant 0 : index
      %31 = vector.load %arg39[%c0_23, %c0_24] : memref<2x1xf32, #tpu.memory_space<vmem>>, vector<2x1xf32>
      %c0_25 = arith.constant 0 : index
      %c0_26 = arith.constant 0 : index
      %32 = vector.load %arg41[%c0_25, %c0_26] : memref<2x1xf32, #tpu.memory_space<vmem>>, vector<2x1xf32>
      %33 = arith.divf %31, %32 : vector<2x1xf32>
      %c0_27 = arith.constant 0 : index
      %c0_28 = arith.constant 0 : index
      %34 = vector.load %arg37[%c0_27, %c0_28] : memref<2x1xf32, #tpu.memory_space<vmem>>, vector<2x1xf32>
      tpu.vector_store %arg37[%c0_27, %c0_28], %33 {strides = array<i32>} : memref<2x1xf32, #tpu.memory_space<vmem>>, vector<2x1xf32>,
    } else {
    }
    return
  }
  func.func @transform_0(%arg0: i32) -> (i32, i32) {
    %c0_i32 = arith.constant 0 : i32
    %c0_i32_0 = arith.constant 0 : i32
    %c0_i32_1 = arith.constant 0 : i32
    return %c0_i32, %c0_i32_0 : i32, i32
  }
  func.func @transform_1(%arg0: i32) -> (i32, i32) {
    %c0_i32 = arith.constant 0 : i32
    %c0_i32_0 = arith.constant 0 : i32
    %c0_i32_1 = arith.constant 0 : i32
    return %c0_i32, %c0_i32_0 : i32, i32
  }
  func.func @transform_2(%arg0: i32) -> (i32, i32) {
    %c0_i32 = arith.constant 0 : i32
    %c0_i32_0 = arith.constant 0 : i32
    %c0_i32_1 = arith.constant 0 : i32
    return %c0_i32, %c0_i32_0 : i32, i32
  }
  func.func @transform_3(%arg0: i32) -> (i32, i32, i32) {
    %c0_i32 = arith.constant 0 : i32
    %c0_i32_0 = arith.constant 0 : i32
    %c0_i32_1 = arith.constant 0 : i32
    %c0_i32_2 = arith.constant 0 : i32
    return %c0_i32, %c0_i32_0, %c0_i32_1 : i32, i32, i32
  }
  func.func @transform_4(%arg0: i32) -> (i32, i32) {
    %c0_i32 = arith.constant 0 : i32
    %c0_i32_0 = arith.constant 0 : i32
    %c0_i32_1 = arith.constant 0 : i32
    return %c0_i32, %c0_i32_0 : i32, i32
  }
  func.func @transform_5(%arg0: i32) -> (i32, i32) {
    %c0_i32 = arith.constant 0 : i32
    %c0_i32_0 = arith.constant 0 : i32
    %c0_i32_1 = arith.constant 0 : i32
    return %c0_i32, %c0_i32_0 : i32, i32
  }
  func.func @transform_6(%arg0: i32) -> (i32, i32) {
    %c0_i32 = arith.constant 0 : i32
    %c0_i32_0 = arith.constant 0 : i32
    %c0_i32_1 = arith.constant 0 : i32
    return %c0_i32, %c0_i32_0 : i32, i32
  }
  func.func @transform_7(%arg0: i32) -> (i32, i32) {
    %c0_i32 = arith.constant 0 : i32
    %c0_i32_0 = arith.constant 0 : i32
    %c0_i32_1 = arith.constant 0 : i32
    return %c0_i32, %c0_i32_0 : i32, i32
  }
  func.func @transform_8(%arg0: i32) -> (i32, i32) {
    %c0_i32 = arith.constant 0 : i32
    %c0_i32_0 = arith.constant 0 : i32
    %c0_i32_1 = arith.constant 0 : i32
    return %c0_i32, %c0_i32_0 : i32, i32
  }
  func.func @transform_9(%arg0: i32) -> (i32, i32) {
    %c0_i32 = arith.constant 0 : i32
    %c0_i32_0 = arith.constant 0 : i32
    %c0_i32_1 = arith.constant 0 : i32
    return %c0_i32, %c0_i32_0 : i32, i32
  }
  func.func @transform_10(%arg0: i32) -> (i32, i32) {
    %c0_i32 = arith.constant 0 : i32
    %c0_i32_0 = arith.constant 0 : i32
    %c0_i32_1 = arith.constant 0 : i32
    return %c0_i32, %c0_i32_0 : i32, i32
  }
  func.func @transform_11(%arg0: i32) -> (i32, i32) {
    %c0_i32 = arith.constant 0 : i32
    %c0_i32_0 = arith.constant 0 : i32
    %c0_i32_1 = arith.constant 0 : i32
    return %c0_i32, %c0_i32_0 : i32, i32
  }
  func.func @transform_12(%arg0: i32) -> (i32, i32) {
    %c0_i32 = arith.constant 0 : i32
    %c0_i32_0 = arith.constant 0 : i32
    %c0_i32_1 = arith.constant 0 : i32
    return %c0_i32, %c0_i32_0 : i32, i32
  }
  func.func @transform_13(%arg0: i32) -> (i32, i32) {
    %c0_i32 = arith.constant 0 : i32
    %c0_i32_0 = arith.constant 0 : i32
    %c0_i32_1 = arith.constant 0 : i32
    return %c0_i32, %c0_i32_0 : i32, i32
  }
  func.func @transform_14(%arg0: i32) -> (i32, i32) {
    %c0_i32 = arith.constant 0 : i32
    %c0_i32_0 = arith.constant 0 : i32
    %c0_i32_1 = arith.constant 0 : i32
    return %c0_i32, %c0_i32_0 : i32, i32
  }
  func.func @transform_15(%arg0: i32) -> (i32, i32) {
    %c0_i32 = arith.constant 0 : i32
    %c0_i32_0 = arith.constant 0 : i32
    %c0_i32_1 = arith.constant 0 : i32
    return %c0_i32, %c0_i32_0 : i32, i32
  }
  func.func @transform_16(%arg0: i32) -> (i32, i32) {
    %c0_i32 = arith.constant 0 : i32
    %c0_i32_0 = arith.constant 0 : i32
    %c0_i32_1 = arith.constant 0 : i32
    return %c0_i32, %c0_i32_0 : i32, i32
  }
  func.func @transform_17(%arg0: i32) -> (i32, i32) {
    %c0_i32 = arith.constant 0 : i32
    %c0_i32_0 = arith.constant 0 : i32
    %c0_i32_1 = arith.constant 0 : i32
    return %c0_i32, %c0_i32_0 : i32, i32
  }
  func.func @transform_18(%arg0: i32) -> (i32, i32) {
    %c0_i32 = arith.constant 0 : i32
    %c0_i32_0 = arith.constant 0 : i32
    %c0_i32_1 = arith.constant 0 : i32
    return %c0_i32, %c0_i32_0 : i32, i32
  }
  func.func @transform_19(%arg0: i32) -> (i32, i32) {
    %c0_i32 = arith.constant 0 : i32
    %c0_i32_0 = arith.constant 0 : i32
    %c0_i32_1 = arith.constant 0 : i32
    return %c0_i32, %c0_i32_0 : i32, i32
  }
  func.func @transform_20(%arg0: i32) -> (i32, i32) {
    %c0_i32 = arith.constant 0 : i32
    %c0_i32_0 = arith.constant 0 : i32
    %c0_i32_1 = arith.constant 0 : i32
    return %c0_i32, %c0_i32_0 : i32, i32
  }
  func.func @transform_21(%arg0: i32) -> (i32, i32) {
    %c0_i32 = arith.constant 0 : i32
    %c0_i32_0 = arith.constant 0 : i32
    %c0_i32_1 = arith.constant 0 : i32
    return %c0_i32, %c0_i32_0 : i32, i32
  }
  func.func @transform_22(%arg0: i32) -> (i32, i32) {
    %c0_i32 = arith.constant 0 : i32
    %c0_i32_0 = arith.constant 0 : i32
    %c0_i32_1 = arith.constant 0 : i32
    return %c0_i32, %c0_i32_0 : i32, i32
  }
  func.func @transform_23(%arg0: i32) -> (i32, i32) {
    %c0_i32 = arith.constant 0 : i32
    %c0_i32_0 = arith.constant 0 : i32
    %c0_i32_1 = arith.constant 0 : i32
    return %c0_i32, %c0_i32_0 : i32, i32
  }
  func.func @transform_24(%arg0: i32) -> (i32, i32) {
    %c0_i32 = arith.constant 0 : i32
    %c0_i32_0 = arith.constant 0 : i32
    %c0_i32_1 = arith.constant 0 : i32
    return %c0_i32, %c0_i32_0 : i32, i32
  }
  func.func @transform_25(%arg0: i32) -> (i32, i32) {
    %c0_i32 = arith.constant 0 : i32
    %c0_i32_0 = arith.constant 0 : i32
    %c0_i32_1 = arith.constant 0 : i32
    return %c0_i32, %c0_i32_0 : i32, i32
  }
  func.func @transform_26(%arg0: i32) -> (i32, i32) {
    %c0_i32 = arith.constant 0 : i32
    %c0_i32_0 = arith.constant 0 : i32
    return %c0_i32, %arg0 : i32, i32
  }
  func.func @transform_27(%arg0: i32) -> (i32, i32) {
    %c0_i32 = arith.constant 0 : i32
    %c0_i32_0 = arith.constant 0 : i32
    return %c0_i32, %arg0 : i32, i32
  }
  func.func @transform_28(%arg0: i32) -> (i32, i32) {
    %c0_i32 = arith.constant 0 : i32
    %c0_i32_0 = arith.constant 0 : i32
    %c0_i32_1 = arith.constant 0 : i32
    return %c0_i32, %c0_i32_0 : i32, i32
  }
  func.func @transform_29(%arg0: i32) -> (i32, i32) {
    %c0_i32 = arith.constant 0 : i32
    %c0_i32_0 = arith.constant 0 : i32
    %c0_i32_1 = arith.constant 0 : i32
    return %c0_i32, %c0_i32_0 : i32, i32
  }
  func.func @transform_30(%arg0: i32) -> (i32, i32) {
    %c0_i32 = arith.constant 0 : i32
    %c0_i32_0 = arith.constant 0 : i32
    %c0_i32_1 = arith.constant 0 : i32
    return %c0_i32, %c0_i32_0 : i32, i32
  }
  func.func @transform_31(%arg0: i32) -> (i32, i32) {
    %c0_i32 = arith.constant 0 : i32
    %c0_i32_0 = arith.constant 0 : i32
    %c0_i32_1 = arith.constant 0 : i32
    return %c0_i32, %c0_i32_0 : i32, i32
  }
  func.func @transform_32(%arg0: i32) -> (i32, i32) {
    %c0_i32 = arith.constant 0 : i32
    %c0_i32_0 = arith.constant 0 : i32
    %c0_i32_1 = arith.constant 0 : i32
    return %c0_i32, %c0_i32_0 : i32, i32
  }
  func.func @transform_33(%arg0: i32) -> (i32, i32) {
    %c0_i32 = arith.constant 0 : i32
    %c0_i32_0 = arith.constant 0 : i32
    %c0_i32_1 = arith.constant 0 : i32
    return %c0_i32, %c0_i32_0 : i32, i32
  }
  func.func @transform_34(%arg0: i32) -> (i32, i32) {
    %c0_i32 = arith.constant 0 : i32
    %c0_i32_0 = arith.constant 0 : i32
    return %c0_i32, %arg0 : i32, i32
  }
  func.func @transform_35(%arg0: i32) -> (i32, i32) {
    %c0_i32 = arith.constant 0 : i32
    %c0_i32_0 = arith.constant 0 : i32
    %c0_i32_1 = arith.constant 0 : i32
    return %c0_i32, %c0_i32_0 : i32, i32
  }
  func.func @transform_36(%arg0: i32) -> (i32, i32) {
    %c0_i32 = arith.constant 0 : i32
    %c0_i32_0 = arith.constant 0 : i32
    %c0_i32_1 = arith.constant 0 : i32
    return %c0_i32, %c0_i32_0 : i32, i32
  }
}

</mosaic_0001>

<llo_original>
// kernel: tpu_custom_call.1
$region0: #{tpu_custom_call.1}
  #allocation0 [shape = 'u32[]', space=smem, size = 0x4, offset = 0x4, fixed_abs, tag = 'smem constant byte address 0x4 - core index']
  #allocation1 [shape = 'u32[144,128]{1,0:T(1,128)}', space=vmem, size = 0x12000, scoped, tag = 'internal scratch']
  #allocation2 [shape = 'f32[2,32]{1,0:T(2,128)}', space=vmem, size = 0x400, scoped, tag = 'scratch operand']
  #allocation3 [shape = 'f32[2,1]{1,0:T(2,128)}', space=vmem, size = 0x400, scoped, tag = 'scratch operand']
  #allocation4 [shape = 'f32[2,1]{1,0:T(2,128)}', space=vmem, size = 0x400, scoped, tag = 'scratch operand']
  #allocation5 [shape = 'f32[2,1]{1,0:T(2,128)}', space=vmem, size = 0x400, scoped, tag = 'scratch operand']
  #allocation6 [shape = 'f32[1,1]{1,0:T(1,128)S(1)}', space=vmem, size = 0x200, scoped, tag = 'scoped memory for tpu_custom_call.1']
  %s0 = inlined_call_operand.smem [shape: u32[37], index: -1, kind: input, shape index: {}]
  %s1 = sld [smem:[%s0]]
  %s2 = scalar_lea.smem %s0, 1
  %s3 = sld [smem:[%s2]]
  %s4 = scalar_lea.smem %s0, 2
  %s5 = sld [smem:[%s4]]
  %s6 = scalar_lea.smem %s0, 3
  %s7 = sld [smem:[%s6]]
  %s8 = scalar_lea.smem %s0, 4
  %s9 = sld [smem:[%s8]]
  %s10 = scalar_lea.smem %s0, 5
  %s11 = sld [smem:[%s10]]
  %s12 = scalar_lea.smem %s0, 6
  %s13 = sld [smem:[%s12]]
  %s14 = scalar_lea.smem %s0, 7
  %s15 = sld [smem:[%s14]]
  %s16 = scalar_lea.smem %s0, 8
  %s17 = sld [smem:[%s16]]
  %s18 = scalar_lea.smem %s0, 9
  %s19 = sld [smem:[%s18]]
  %s20 = scalar_lea.smem %s0, 10
  %s21 = sld [smem:[%s20]]
  %s22 = scalar_lea.smem %s0, 11
  %s23 = sld [smem:[%s22]]
  %s24 = scalar_lea.smem %s0, 12
  %s25 = sld [smem:[%s24]]
  %s26 = scalar_lea.smem %s0, 13
  %s27 = sld [smem:[%s26]]
  %s28 = scalar_lea.smem %s0, 14
  %s29 = sld [smem:[%s28]]
  %s30 = scalar_lea.smem %s0, 15
  %s31 = sld [smem:[%s30]]
  %s32 = scalar_lea.smem %s0, 16
  %s33 = sld [smem:[%s32]]
  %s34 = scalar_lea.smem %s0, 17
  %s35 = sld [smem:[%s34]]
  %s36 = scalar_lea.smem %s0, 18
  %s37 = sld [smem:[%s36]]
  %s38 = scalar_lea.smem %s0, 19
  %s39 = sld [smem:[%s38]]
  %s40 = scalar_lea.smem %s0, 20
  %s41 = sld [smem:[%s40]]
  %s42 = scalar_lea.smem %s0, 21
  %s43 = sld [smem:[%s42]]
  %s44 = scalar_lea.smem %s0, 22
  %s45 = sld [smem:[%s44]]
  %s46 = scalar_lea.smem %s0, 23
  %s47 = sld [smem:[%s46]]
  %s48 = scalar_lea.smem %s0, 24
  %s49 = sld [smem:[%s48]]
  %s50 = scalar_lea.smem %s0, 25
  %s51 = sld [smem:[%s50]]
  %s52 = scalar_lea.smem %s0, 26
  %s53 = sld [smem:[%s52]]
  %s54 = scalar_lea.smem %s0, 27
  %s55 = sld [smem:[%s54]]
  %s56 = scalar_lea.smem %s0, 28
  %s57 = sld [smem:[%s56]]
  %s58 = scalar_lea.smem %s0, 29
  %s59 = sld [smem:[%s58]]
  %s60 = scalar_lea.smem %s0, 30
  %s61 = sld [smem:[%s60]]
  %s62 = scalar_lea.smem %s0, 31
  %s63 = sld [smem:[%s62]]
  %s64 = scalar_lea.smem %s0, 32
  %s65 = sld [smem:[%s64]]
  %s66 = scalar_lea.smem %s0, 33
  %s67 = sld [smem:[%s66]]
  %s68 = scalar_lea.smem %s0, 34
  %s69 = sld [smem:[%s68]]
  %s70 = scalar_lea.smem %s0, 35
  %s71 = sld [smem:[%s70]]
  %s72 = scalar_lea.smem %s0, 36
  %s73 = sld [smem:[%s72]]
  %74 = xla_tuple %s57, %s59, %s61, %s63, %s65, %s67, %s69, %s71, %s73
  %s75 = sld [smem:[#allocation0]]
  $region267: #{tpu_custom_call.1} parent=0
    _
  %s77 = ssub.s32 1, %s75
  %s78 = scalar_select 0, %s77, %s75
  %v79 = vstv %s45
  %80 = vst [vmem:[#allocation6] sm:$0x1] %v79
  $region1: #{tpu_custom_call.1} parent=0
    #allocation7 [shape = 'u8[1024]{0}', space=vmem, size = 0x400, scoped, tag = 'input window, operand 0, single buffered']
    #allocation8 [shape = 's32[2]{0}', space=sflag, size = 0x8, scoped, tag = 'scoped memory for tpu_custom_call.1']
    #allocation9 [shape = 's32[2]{0}', space=sflag, size = 0x8, scoped, tag = 'scoped memory for tpu_custom_call.1']
    #allocation10 [shape = 'u8[1024]{0}', space=vmem, size = 0x400, scoped, tag = 'input window, operand 1, single buffered']
    #allocation11 [shape = 's32[1]{0}', space=sflag, size = 0x4, scoped, tag = 'scoped memory for tpu_custom_call.1']
    #allocation12 [shape = 'u8[1024]{0}', space=vmem, size = 0x400, scoped, tag = 'input window, operand 2, single buffered']
    #allocation13 [shape = 'u8[32768]{0}', space=vmem, size = 0x8000, scoped, tag = 'input window, operand 26']
    #allocation14 [shape = 'u8[1024]{0}', space=vmem, size = 0x400, scoped, tag = 'output window, operand 0, single buffered']
    #allocation15 [shape = 'u8[1024]{0}', space=vmem, size = 0x400, scoped, tag = 'output window, operand 1, single buffered']
    #allocation16 [shape = 's32[1]{0}', space=sflag, size = 0x4, scoped, tag = 'scoped memory for tpu_custom_call.1']
    #allocation17 [shape = 'u8[1024]{0}', space=vmem, size = 0x400, scoped, tag = 'output window, operand 2, single buffered']
    #allocation18 [shape = 'u8[1024]{0}', space=vmem, size = 0x400, scoped, tag = 'output window, operand 4, single buffered']
    #allocation19 [shape = 's32[1]{0}', space=sflag, size = 0x4, scoped, tag = 'scoped memory for tpu_custom_call.1']
    #allocation20 [shape = 'u8[1024]{0}', space=vmem, size = 0x400, scoped, tag = 'output window, operand 5, single buffered']
    #allocation21 [shape = 'u8[2048]{0}', space=vmem, size = 0x800, scoped, tag = 'output window, operand 6']
    #allocation22 [shape = 's32[2]{0}', space=sflag, size = 0x8, scoped, tag = 'scoped memory for tpu_custom_call.1']
    %81 = vsyncpa [#allocation8], 0
    %82 = vsyncpa [#allocation11], 0
    %83 = vsyncpa [#allocation9], 0
    %84 = vsyncpa [#allocation16], 0
    %85 = vsyncpa [#allocation19], 0
    %86 = vsyncpa [#allocation22], 0
    %s87 = scalar_lea.sflag [#allocation22], 1
    %88 = vsyncpa %s87, 0
    loop: start=0, step=1, limit=5
    $region2: #{tpu_custom_call.1} parent=1 // loop_pre_header
      _
    $region3: #{tpu_custom_call.1} parent=1 // loop_header
      %s90 = sphi 0, %s94
      %p91 = scmp.ge.s32.totalorder %s90, 5
      %s98 = sphi 0, %s98
      %s100 = sphi 0, %s98
      %s101 = sphi 0, %s100
      %s115 = sphi 0, %s101
      %s119 = sphi 0, %s119
      %s121 = sphi 0, %s119
      %s122 = sphi 0, %s121
      %s136 = sphi 0, %s122
      %s140 = sphi 0, %s140
      %s142 = sphi 0, %s140
      %s143 = sphi 0, %s142
      %s157 = sphi 0, %s143
      %s161 = sphi 0, %s161
      %s163 = sphi 0, %s161
      %s164 = sphi 0, %s163
      %s178 = sphi 0, %s164
      %s182 = sphi 0, %s182
      %s184 = sphi 0, %s182
      %s185 = sphi 0, %s184
      %s199 = sphi 0, %s185
      %s203 = sphi 0, %s203
      %s205 = sphi 0, %s203
      %s206 = sphi 0, %s205
      %s220 = sphi 0, %s206
      %s224 = sphi 0, %s224
      %s226 = sphi 0, %s224
      %s227 = sphi 0, %s226
      %s241 = sphi 0, %s227
      %s245 = sphi 0, %s245
      %s247 = sphi 0, %s245
      %s248 = sphi 0, %s247
      %s262 = sphi 0, %s248
      %s266 = sphi 0, %s266
      %s268 = sphi 0, %s266
      %s269 = sphi 0, %s268
      %s283 = sphi 0, %s269
      %s287 = sphi 0, %s287
      %s289 = sphi 0, %s287
      %s290 = sphi 0, %s289
      %s304 = sphi 0, %s290
      %s308 = sphi 0, %s308
      %s310 = sphi 0, %s308
      %s311 = sphi 0, %s310
      %s325 = sphi 0, %s311
      %s329 = sphi 0, %s329
      %s331 = sphi 0, %s329
      %s332 = sphi 0, %s331
      %s346 = sphi 0, %s332
      %s350 = sphi 0, %s350
      %s352 = sphi 0, %s350
      %s353 = sphi 0, %s352
      %s367 = sphi 0, %s353
      %s371 = sphi 0, %s371
      %s373 = sphi 0, %s371
      %s374 = sphi 0, %s373
      %s388 = sphi 0, %s374
      %s392 = sphi 0, %s392
      %s394 = sphi 0, %s392
      %s395 = sphi 0, %s394
      %s409 = sphi 0, %s395
      %s413 = sphi 0, %s413
      %s415 = sphi 0, %s413
      %s416 = sphi 0, %s415
      %s430 = sphi 0, %s416
      %s434 = sphi 0, %s434
      %s436 = sphi 0, %s434
      %s437 = sphi 0, %s436
      %s451 = sphi 0, %s437
      %s455 = sphi 0, %s455
      %s457 = sphi 0, %s455
      %s458 = sphi 0, %s457
      %s472 = sphi 0, %s458
      %s476 = sphi 0, %s476
      %s478 = sphi 0, %s476
      %s479 = sphi 0, %s478
      %s493 = sphi 0, %s479
      %s497 = sphi 0, %s497
      %s499 = sphi 0, %s497
      %s500 = sphi 0, %s499
      %s514 = sphi 0, %s500
      %s518 = sphi 0, %s518
      %s520 = sphi 0, %s518
      %s521 = sphi 0, %s520
      %s535 = sphi 0, %s521
      %s539 = sphi 0, %s539
      %s541 = sphi 0, %s539
      %s542 = sphi 0, %s541
      %s556 = sphi 0, %s542
      %s560 = sphi 0, %s560
      %s562 = sphi 0, %s560
      %s563 = sphi 0, %s562
      %s577 = sphi 0, %s563
      %s581 = sphi 0, %s581
      %s583 = sphi 0, %s581
      %s584 = sphi 0, %s583
      %s598 = sphi 0, %s584
      %s602 = sphi 0, %s602
      %s604 = sphi 0, %s602
      %s605 = sphi 0, %s604
      %s619 = sphi 0, %s605
      %s623 = sphi 0, %s623
      %s625 = sphi 0, %s623
      %s626 = sphi 0, %s625
      %s640 = sphi 0, %s626
      %s646 = sphi 0, %s648
      %s649 = sphi 0, %s646
      %s650 = sphi 0, %s649
      %s666 = sphi 0, %s650
      %s672 = sphi 0, %s674
      %s675 = sphi 0, %s672
      %s676 = sphi 0, %s675
      %s692 = sphi 0, %s676
      %s696 = sphi 0, %s696
      %s698 = sphi 0, %s696
      %s699 = sphi 0, %s698
      %s713 = sphi 0, %s699
      %s717 = sphi 0, %s717
      %s719 = sphi 0, %s717
      %s720 = sphi 0, %s719
      %s734 = sphi 0, %s720
      %s738 = sphi 0, %s738
      %s740 = sphi 0, %s738
      %s741 = sphi 0, %s740
      %s755 = sphi 0, %s741
      %s759 = sphi 0, %s759
      %s761 = sphi 0, %s759
      %s762 = sphi 0, %s761
      %s776 = sphi 0, %s762
      %s780 = sphi 0, %s780
      %s782 = sphi 0, %s780
      %s783 = sphi 0, %s782
      %s797 = sphi 0, %s783
      %s801 = sphi 0, %s801
      %s803 = sphi 0, %s801
      %s804 = sphi 0, %s803
      %s818 = sphi 0, %s804
      %s824 = sphi 0, %s826
      %s827 = sphi 0, %s824
      %s828 = sphi 0, %s827
      %s844 = sphi 0, %s828
      %s848 = sphi 0, %s848
      %s850 = sphi 0, %s848
      %s851 = sphi 0, %s850
      %s865 = sphi 0, %s851
      %s869 = sphi 0, %s869
      %s871 = sphi 0, %s869
      %s872 = sphi 0, %s871
      %s886 = sphi 0, %s872
    $region4: #{tpu_custom_call.1} parent=1 // loop_header_branch
      %93 = sbr.rel (%p91) target = $region8
    $region5: #{tpu_custom_call.1} parent=1 // loop_body
      %s95 = ssub.s32 %s90, 1
      %s96 = ssub.s32 %s90, 2
      %s97 = sadd.s32 %s90, 1
      %s99 = sadd.s32 %s98, 1
      %p102 = scmp.eq.s32.totalorder %s90, 2
      %p103 = scmp.ne.s32.totalorder %s98, %s100
      %p104 = scmp.eq.s32.totalorder %s90, 0
      %p105 = por %p103, %p104
      %p106 = scmp.ne.s32.totalorder %s98, %s100
      %p107 = scmp.eq.s32.totalorder %s95, 2
      %p108 = por %p106, %p107
      %p109 = scmp.ne.s32.totalorder %s100, %s101
      %p110 = scmp.eq.s32.totalorder %s95, 0
      %p111 = por %p109, %p110
      %p112 = scmp.ne.s32.totalorder %s100, %s101
      %p113 = scmp.eq.s32.totalorder %s96, 2
      %p114 = por %p112, %p113
      %p116 = scmp.ne.s32.totalorder %s101, %s115
      %p117 = scmp.eq.s32.totalorder %s96, 0
      %p118 = por %p116, %p117
      %s120 = sadd.s32 %s119, 1
      %p123 = scmp.eq.s32.totalorder %s90, 2
      %p124 = scmp.ne.s32.totalorder %s119, %s121
      %p125 = scmp.eq.s32.totalorder %s90, 0
      %p126 = por %p124, %p125
      %p127 = scmp.ne.s32.totalorder %s119, %s121
      %p128 = scmp.eq.s32.totalorder %s95, 2
      %p129 = por %p127, %p128
      %p130 = scmp.ne.s32.totalorder %s121, %s122
      %p131 = scmp.eq.s32.totalorder %s95, 0
      %p132 = por %p130, %p131
      %p133 = scmp.ne.s32.totalorder %s121, %s122
      %p134 = scmp.eq.s32.totalorder %s96, 2
      %p135 = por %p133, %p134
      %p137 = scmp.ne.s32.totalorder %s122, %s136
      %p138 = scmp.eq.s32.totalorder %s96, 0
      %p139 = por %p137, %p138
      %s141 = sadd.s32 %s140, 1
      %p144 = scmp.eq.s32.totalorder %s90, 2
      %p145 = scmp.ne.s32.totalorder %s140, %s142
      %p146 = scmp.eq.s32.totalorder %s90, 0
      %p147 = por %p145, %p146
      %p148 = scmp.ne.s32.totalorder %s140, %s142
      %p149 = scmp.eq.s32.totalorder %s95, 2
      %p150 = por %p148, %p149
      %p151 = scmp.ne.s32.totalorder %s142, %s143
      %p152 = scmp.eq.s32.totalorder %s95, 0
      %p153 = por %p151, %p152
      %p154 = scmp.ne.s32.totalorder %s142, %s143
      %p155 = scmp.eq.s32.totalorder %s96, 2
      %p156 = por %p154, %p155
      %p158 = scmp.ne.s32.totalorder %s143, %s157
      %p159 = scmp.eq.s32.totalorder %s96, 0
      %p160 = por %p158, %p159
      %s162 = sadd.s32 %s161, 1
      %p165 = scmp.eq.s32.totalorder %s90, 2
      %p166 = scmp.ne.s32.totalorder %s161, %s163
      %p167 = scmp.eq.s32.totalorder %s90, 0
      %p168 = por %p166, %p167
      %p169 = scmp.ne.s32.totalorder %s161, %s163
      %p170 = scmp.eq.s32.totalorder %s95, 2
      %p171 = por %p169, %p170
      %p172 = scmp.ne.s32.totalorder %s163, %s164
      %p173 = scmp.eq.s32.totalorder %s95, 0
      %p174 = por %p172, %p173
      %p175 = scmp.ne.s32.totalorder %s163, %s164
      %p176 = scmp.eq.s32.totalorder %s96, 2
      %p177 = por %p175, %p176
      %p179 = scmp.ne.s32.totalorder %s164, %s178
      %p180 = scmp.eq.s32.totalorder %s96, 0
      %p181 = por %p179, %p180
      %s183 = sadd.s32 %s182, 1
      %p186 = scmp.eq.s32.totalorder %s90, 2
      %p187 = scmp.ne.s32.totalorder %s182, %s184
      %p188 = scmp.eq.s32.totalorder %s90, 0
      %p189 = por %p187, %p188
      %p190 = scmp.ne.s32.totalorder %s182, %s184
      %p191 = scmp.eq.s32.totalorder %s95, 2
      %p192 = por %p190, %p191
      %p193 = scmp.ne.s32.totalorder %s184, %s185
      %p194 = scmp.eq.s32.totalorder %s95, 0
      %p195 = por %p193, %p194
      %p196 = scmp.ne.s32.totalorder %s184, %s185
      %p197 = scmp.eq.s32.totalorder %s96, 2
      %p198 = por %p196, %p197
      %p200 = scmp.ne.s32.totalorder %s185, %s199
      %p201 = scmp.eq.s32.totalorder %s96, 0
      %p202 = por %p200, %p201
      %s204 = sadd.s32 %s203, 1
      %p207 = scmp.eq.s32.totalorder %s90, 2
      %p208 = scmp.ne.s32.totalorder %s203, %s205
      %p209 = scmp.eq.s32.totalorder %s90, 0
      %p210 = por %p208, %p209
      %p211 = scmp.ne.s32.totalorder %s203, %s205
      %p212 = scmp.eq.s32.totalorder %s95, 2
      %p213 = por %p211, %p212
      %p214 = scmp.ne.s32.totalorder %s205, %s206
      %p215 = scmp.eq.s32.totalorder %s95, 0
      %p216 = por %p214, %p215
      %p217 = scmp.ne.s32.totalorder %s205, %s206
      %p218 = scmp.eq.s32.totalorder %s96, 2
      %p219 = por %p217, %p218
      %p221 = scmp.ne.s32.totalorder %s206, %s220
      %p222 = scmp.eq.s32.totalorder %s96, 0
      %p223 = por %p221, %p222
      %s225 = sadd.s32 %s224, 1
      %p228 = scmp.eq.s32.totalorder %s90, 2
      %p229 = scmp.ne.s32.totalorder %s224, %s226
      %p230 = scmp.eq.s32.totalorder %s90, 0
      %p231 = por %p229, %p230
      %p232 = scmp.ne.s32.totalorder %s224, %s226
      %p233 = scmp.eq.s32.totalorder %s95, 2
      %p234 = por %p232, %p233
      %p235 = scmp.ne.s32.totalorder %s226, %s227
      %p236 = scmp.eq.s32.totalorder %s95, 0
      %p237 = por %p235, %p236
      %p238 = scmp.ne.s32.totalorder %s226, %s227
      %p239 = scmp.eq.s32.totalorder %s96, 2
      %p240 = por %p238, %p239
      %p242 = scmp.ne.s32.totalorder %s227, %s241
      %p243 = scmp.eq.s32.totalorder %s96, 0
      %p244 = por %p242, %p243
      %s246 = sadd.s32 %s245, 1
      %p249 = scmp.eq.s32.totalorder %s90, 2
      %p250 = scmp.ne.s32.totalorder %s245, %s247
      %p251 = scmp.eq.s32.totalorder %s90, 0
      %p252 = por %p250, %p251
      %p253 = scmp.ne.s32.totalorder %s245, %s247
      %p254 = scmp.eq.s32.totalorder %s95, 2
      %p255 = por %p253, %p254
      %p256 = scmp.ne.s32.totalorder %s247, %s248
      %p257 = scmp.eq.s32.totalorder %s95, 0
      %p258 = por %p256, %p257
      %p259 = scmp.ne.s32.totalorder %s247, %s248
      %p260 = scmp.eq.s32.totalorder %s96, 2
      %p261 = por %p259, %p260
      %p263 = scmp.ne.s32.totalorder %s248, %s262
      %p264 = scmp.eq.s32.totalorder %s96, 0
      %p265 = por %p263, %p264
      %s267 = sadd.s32 %s266, 1
      %p270 = scmp.eq.s32.totalorder %s90, 2
      %p271 = scmp.ne.s32.totalorder %s266, %s268
      %p272 = scmp.eq.s32.totalorder %s90, 0
      %p273 = por %p271, %p272
      %p274 = scmp.ne.s32.totalorder %s266, %s268
      %p275 = scmp.eq.s32.totalorder %s95, 2
      %p276 = por %p274, %p275
      %p277 = scmp.ne.s32.totalorder %s268, %s269
      %p278 = scmp.eq.s32.totalorder %s95, 0
      %p279 = por %p277, %p278
      %p280 = scmp.ne.s32.totalorder %s268, %s269
      %p281 = scmp.eq.s32.totalorder %s96, 2
      %p282 = por %p280, %p281
      %p284 = scmp.ne.s32.totalorder %s269, %s283
      %p285 = scmp.eq.s32.totalorder %s96, 0
      %p286 = por %p284, %p285
      %s288 = sadd.s32 %s287, 1
      %p291 = scmp.eq.s32.totalorder %s90, 2
      %p292 = scmp.ne.s32.totalorder %s287, %s289
      %p293 = scmp.eq.s32.totalorder %s90, 0
      %p294 = por %p292, %p293
      %p295 = scmp.ne.s32.totalorder %s287, %s289
      %p296 = scmp.eq.s32.totalorder %s95, 2
      %p297 = por %p295, %p296
      %p298 = scmp.ne.s32.totalorder %s289, %s290
      %p299 = scmp.eq.s32.totalorder %s95, 0
      %p300 = por %p298, %p299
      %p301 = scmp.ne.s32.totalorder %s289, %s290
      %p302 = scmp.eq.s32.totalorder %s96, 2
      %p303 = por %p301, %p302
      %p305 = scmp.ne.s32.totalorder %s290, %s304
      %p306 = scmp.eq.s32.totalorder %s96, 0
      %p307 = por %p305, %p306
      %s309 = sadd.s32 %s308, 1
      %p312 = scmp.eq.s32.totalorder %s90, 2
      %p313 = scmp.ne.s32.totalorder %s308, %s310
      %p314 = scmp.eq.s32.totalorder %s90, 0
      %p315 = por %p313, %p314
      %p316 = scmp.ne.s32.totalorder %s308, %s310
      %p317 = scmp.eq.s32.totalorder %s95, 2
      %p318 = por %p316, %p317
      %p319 = scmp.ne.s32.totalorder %s310, %s311
      %p320 = scmp.eq.s32.totalorder %s95, 0
      %p321 = por %p319, %p320
      %p322 = scmp.ne.s32.totalorder %s310, %s311
      %p323 = scmp.eq.s32.totalorder %s96, 2
      %p324 = por %p322, %p323
      %p326 = scmp.ne.s32.totalorder %s311, %s325
      %p327 = scmp.eq.s32.totalorder %s96, 0
      %p328 = por %p326, %p327
      %s330 = sadd.s32 %s329, 1
      %p333 = scmp.eq.s32.totalorder %s90, 2
      %p334 = scmp.ne.s32.totalorder %s329, %s331
      %p335 = scmp.eq.s32.totalorder %s90, 0
      %p336 = por %p334, %p335
      %p337 = scmp.ne.s32.totalorder %s329, %s331
      %p338 = scmp.eq.s32.totalorder %s95, 2
      %p339 = por %p337, %p338
      %p340 = scmp.ne.s32.totalorder %s331, %s332
      %p341 = scmp.eq.s32.totalorder %s95, 0
      %p342 = por %p340, %p341
      %p343 = scmp.ne.s32.totalorder %s331, %s332
      %p344 = scmp.eq.s32.totalorder %s96, 2
      %p345 = por %p343, %p344
      %p347 = scmp.ne.s32.totalorder %s332, %s346
      %p348 = scmp.eq.s32.totalorder %s96, 0
      %p349 = por %p347, %p348
      %s351 = sadd.s32 %s350, 1
      %p354 = scmp.eq.s32.totalorder %s90, 2
      %p355 = scmp.ne.s32.totalorder %s350, %s352
      %p356 = scmp.eq.s32.totalorder %s90, 0
      %p357 = por %p355, %p356
      %p358 = scmp.ne.s32.totalorder %s350, %s352
      %p359 = scmp.eq.s32.totalorder %s95, 2
      %p360 = por %p358, %p359
      %p361 = scmp.ne.s32.totalorder %s352, %s353
      %p362 = scmp.eq.s32.totalorder %s95, 0
      %p363 = por %p361, %p362
      %p364 = scmp.ne.s32.totalorder %s352, %s353
      %p365 = scmp.eq.s32.totalorder %s96, 2
      %p366 = por %p364, %p365
      %p368 = scmp.ne.s32.totalorder %s353, %s367
      %p369 = scmp.eq.s32.totalorder %s96, 0
      %p370 = por %p368, %p369
      %s372 = sadd.s32 %s371, 1
      %p375 = scmp.eq.s32.totalorder %s90, 2
      %p376 = scmp.ne.s32.totalorder %s371, %s373
      %p377 = scmp.eq.s32.totalorder %s90, 0
      %p378 = por %p376, %p377
      %p379 = scmp.ne.s32.totalorder %s371, %s373
      %p380 = scmp.eq.s32.totalorder %s95, 2
      %p381 = por %p379, %p380
      %p382 = scmp.ne.s32.totalorder %s373, %s374
      %p383 = scmp.eq.s32.totalorder %s95, 0
      %p384 = por %p382, %p383
      %p385 = scmp.ne.s32.totalorder %s373, %s374
      %p386 = scmp.eq.s32.totalorder %s96, 2
      %p387 = por %p385, %p386
      %p389 = scmp.ne.s32.totalorder %s374, %s388
      %p390 = scmp.eq.s32.totalorder %s96, 0
      %p391 = por %p389, %p390
      %s393 = sadd.s32 %s392, 1
      %p396 = scmp.eq.s32.totalorder %s90, 2
      %p397 = scmp.ne.s32.totalorder %s392, %s394
      %p398 = scmp.eq.s32.totalorder %s90, 0
      %p399 = por %p397, %p398
      %p400 = scmp.ne.s32.totalorder %s392, %s394
      %p401 = scmp.eq.s32.totalorder %s95, 2
      %p402 = por %p400, %p401
      %p403 = scmp.ne.s32.totalorder %s394, %s395
      %p404 = scmp.eq.s32.totalorder %s95, 0
      %p405 = por %p403, %p404
      %p406 = scmp.ne.s32.totalorder %s394, %s395
      %p407 = scmp.eq.s32.totalorder %s96, 2
      %p408 = por %p406, %p407
      %p410 = scmp.ne.s32.totalorder %s395, %s409
      %p411 = scmp.eq.s32.totalorder %s96, 0
      %p412 = por %p410, %p411
      %s414 = sadd.s32 %s413, 1
      %p417 = scmp.eq.s32.totalorder %s90, 2
      %p418 = scmp.ne.s32.totalorder %s413, %s415
      %p419 = scmp.eq.s32.totalorder %s90, 0
      %p420 = por %p418, %p419
      %p421 = scmp.ne.s32.totalorder %s413, %s415
      %p422 = scmp.eq.s32.totalorder %s95, 2
      %p423 = por %p421, %p422
      %p424 = scmp.ne.s32.totalorder %s415, %s416
      %p425 = scmp.eq.s32.totalorder %s95, 0
      %p426 = por %p424, %p425
      %p427 = scmp.ne.s32.totalorder %s415, %s416
      %p428 = scmp.eq.s32.totalorder %s96, 2
      %p429 = por %p427, %p428
      %p431 = scmp.ne.s32.totalorder %s416, %s430
      %p432 = scmp.eq.s32.totalorder %s96, 0
      %p433 = por %p431, %p432
      %s435 = sadd.s32 %s434, 1
      %p438 = scmp.eq.s32.totalorder %s90, 2
      %p439 = scmp.ne.s32.totalorder %s434, %s436
      %p440 = scmp.eq.s32.totalorder %s90, 0
      %p441 = por %p439, %p440
      %p442 = scmp.ne.s32.totalorder %s434, %s436
      %p443 = scmp.eq.s32.totalorder %s95, 2
      %p444 = por %p442, %p443
      %p445 = scmp.ne.s32.totalorder %s436, %s437
      %p446 = scmp.eq.s32.totalorder %s95, 0
      %p447 = por %p445, %p446
      %p448 = scmp.ne.s32.totalorder %s436, %s437
      %p449 = scmp.eq.s32.totalorder %s96, 2
      %p450 = por %p448, %p449
      %p452 = scmp.ne.s32.totalorder %s437, %s451
      %p453 = scmp.eq.s32.totalorder %s96, 0
      %p454 = por %p452, %p453
      %s456 = sadd.s32 %s455, 1
      %p459 = scmp.eq.s32.totalorder %s90, 2
      %p460 = scmp.ne.s32.totalorder %s455, %s457
      %p461 = scmp.eq.s32.totalorder %s90, 0
      %p462 = por %p460, %p461
      %p463 = scmp.ne.s32.totalorder %s455, %s457
      %p464 = scmp.eq.s32.totalorder %s95, 2
      %p465 = por %p463, %p464
      %p466 = scmp.ne.s32.totalorder %s457, %s458
      %p467 = scmp.eq.s32.totalorder %s95, 0
      %p468 = por %p466, %p467
      %p469 = scmp.ne.s32.totalorder %s457, %s458
      %p470 = scmp.eq.s32.totalorder %s96, 2
      %p471 = por %p469, %p470
      %p473 = scmp.ne.s32.totalorder %s458, %s472
      %p474 = scmp.eq.s32.totalorder %s96, 0
      %p475 = por %p473, %p474
      %s477 = sadd.s32 %s476, 1
      %p480 = scmp.eq.s32.totalorder %s90, 2
      %p481 = scmp.ne.s32.totalorder %s476, %s478
      %p482 = scmp.eq.s32.totalorder %s90, 0
      %p483 = por %p481, %p482
      %p484 = scmp.ne.s32.totalorder %s476, %s478
      %p485 = scmp.eq.s32.totalorder %s95, 2
      %p486 = por %p484, %p485
      %p487 = scmp.ne.s32.totalorder %s478, %s479
      %p488 = scmp.eq.s32.totalorder %s95, 0
      %p489 = por %p487, %p488
      %p490 = scmp.ne.s32.totalorder %s478, %s479
      %p491 = scmp.eq.s32.totalorder %s96, 2
      %p492 = por %p490, %p491
      %p494 = scmp.ne.s32.totalorder %s479, %s493
      %p495 = scmp.eq.s32.totalorder %s96, 0
      %p496 = por %p494, %p495
      %s498 = sadd.s32 %s497, 1
      %p501 = scmp.eq.s32.totalorder %s90, 2
      %p502 = scmp.ne.s32.totalorder %s497, %s499
      %p503 = scmp.eq.s32.totalorder %s90, 0
      %p504 = por %p502, %p503
      %p505 = scmp.ne.s32.totalorder %s497, %s499
      %p506 = scmp.eq.s32.totalorder %s95, 2
      %p507 = por %p505, %p506
      %p508 = scmp.ne.s32.totalorder %s499, %s500
      %p509 = scmp.eq.s32.totalorder %s95, 0
      %p510 = por %p508, %p509
      %p511 = scmp.ne.s32.totalorder %s499, %s500
      %p512 = scmp.eq.s32.totalorder %s96, 2
      %p513 = por %p511, %p512
      %p515 = scmp.ne.s32.totalorder %s500, %s514
      %p516 = scmp.eq.s32.totalorder %s96, 0
      %p517 = por %p515, %p516
      %s519 = sadd.s32 %s518, 1
      %p522 = scmp.eq.s32.totalorder %s90, 2
      %p523 = scmp.ne.s32.totalorder %s518, %s520
      %p524 = scmp.eq.s32.totalorder %s90, 0
      %p525 = por %p523, %p524
      %p526 = scmp.ne.s32.totalorder %s518, %s520
      %p527 = scmp.eq.s32.totalorder %s95, 2
      %p528 = por %p526, %p527
      %p529 = scmp.ne.s32.totalorder %s520, %s521
      %p530 = scmp.eq.s32.totalorder %s95, 0
      %p531 = por %p529, %p530
      %p532 = scmp.ne.s32.totalorder %s520, %s521
      %p533 = scmp.eq.s32.totalorder %s96, 2
      %p534 = por %p532, %p533
      %p536 = scmp.ne.s32.totalorder %s521, %s535
      %p537 = scmp.eq.s32.totalorder %s96, 0
      %p538 = por %p536, %p537
      %s540 = sadd.s32 %s539, 1
      %p543 = scmp.eq.s32.totalorder %s90, 2
      %p544 = scmp.ne.s32.totalorder %s539, %s541
      %p545 = scmp.eq.s32.totalorder %s90, 0
      %p546 = por %p544, %p545
      %p547 = scmp.ne.s32.totalorder %s539, %s541
      %p548 = scmp.eq.s32.totalorder %s95, 2
      %p549 = por %p547, %p548
      %p550 = scmp.ne.s32.totalorder %s541, %s542
      %p551 = scmp.eq.s32.totalorder %s95, 0
      %p552 = por %p550, %p551
      %p553 = scmp.ne.s32.totalorder %s541, %s542
      %p554 = scmp.eq.s32.totalorder %s96, 2
      %p555 = por %p553, %p554
      %p557 = scmp.ne.s32.totalorder %s542, %s556
      %p558 = scmp.eq.s32.totalorder %s96, 0
      %p559 = por %p557, %p558
      %s561 = sadd.s32 %s560, 1
      %p564 = scmp.eq.s32.totalorder %s90, 2
      %p565 = scmp.ne.s32.totalorder %s560, %s562
      %p566 = scmp.eq.s32.totalorder %s90, 0
      %p567 = por %p565, %p566
      %p568 = scmp.ne.s32.totalorder %s560, %s562
      %p569 = scmp.eq.s32.totalorder %s95, 2
      %p570 = por %p568, %p569
      %p571 = scmp.ne.s32.totalorder %s562, %s563
      %p572 = scmp.eq.s32.totalorder %s95, 0
      %p573 = por %p571, %p572
      %p574 = scmp.ne.s32.totalorder %s562, %s563
      %p575 = scmp.eq.s32.totalorder %s96, 2
      %p576 = por %p574, %p575
      %p578 = scmp.ne.s32.totalorder %s563, %s577
      %p579 = scmp.eq.s32.totalorder %s96, 0
      %p580 = por %p578, %p579
      %s582 = sadd.s32 %s581, 1
      %p585 = scmp.eq.s32.totalorder %s90, 2
      %p586 = scmp.ne.s32.totalorder %s581, %s583
      %p587 = scmp.eq.s32.totalorder %s90, 0
      %p588 = por %p586, %p587
      %p589 = scmp.ne.s32.totalorder %s581, %s583
      %p590 = scmp.eq.s32.totalorder %s95, 2
      %p591 = por %p589, %p590
      %p592 = scmp.ne.s32.totalorder %s583, %s584
      %p593 = scmp.eq.s32.totalorder %s95, 0
      %p594 = por %p592, %p593
      %p595 = scmp.ne.s32.totalorder %s583, %s584
      %p596 = scmp.eq.s32.totalorder %s96, 2
      %p597 = por %p595, %p596
      %p599 = scmp.ne.s32.totalorder %s584, %s598
      %p600 = scmp.eq.s32.totalorder %s96, 0
      %p601 = por %p599, %p600
      %s603 = sadd.s32 %s602, 1
      %p606 = scmp.eq.s32.totalorder %s90, 2
      %p607 = scmp.ne.s32.totalorder %s602, %s604
      %p608 = scmp.eq.s32.totalorder %s90, 0
      %p609 = por %p607, %p608
      %p610 = scmp.ne.s32.totalorder %s602, %s604
      %p611 = scmp.eq.s32.totalorder %s95, 2
      %p612 = por %p610, %p611
      %p613 = scmp.ne.s32.totalorder %s604, %s605
      %p614 = scmp.eq.s32.totalorder %s95, 0
      %p615 = por %p613, %p614
      %p616 = scmp.ne.s32.totalorder %s604, %s605
      %p617 = scmp.eq.s32.totalorder %s96, 2
      %p618 = por %p616, %p617
      %p620 = scmp.ne.s32.totalorder %s605, %s619
      %p621 = scmp.eq.s32.totalorder %s96, 0
      %p622 = por %p620, %p621
      %s624 = sadd.s32 %s623, 1
      %p627 = scmp.eq.s32.totalorder %s90, 2
      %p628 = scmp.ne.s32.totalorder %s623, %s625
      %p629 = scmp.eq.s32.totalorder %s90, 0
      %p630 = por %p628, %p629
      %p631 = scmp.ne.s32.totalorder %s623, %s625
      %p632 = scmp.eq.s32.totalorder %s95, 2
      %p633 = por %p631, %p632
      %p634 = scmp.ne.s32.totalorder %s625, %s626
      %p635 = scmp.eq.s32.totalorder %s95, 0
      %p636 = por %p634, %p635
      %p637 = scmp.ne.s32.totalorder %s625, %s626
      %p638 = scmp.eq.s32.totalorder %s96, 2
      %p639 = por %p637, %p638
      %p641 = scmp.ne.s32.totalorder %s626, %s640
      %p642 = scmp.eq.s32.totalorder %s96, 0
      %p643 = por %p641, %p642
      %s644 = ssub.s32 %s90, %s97
      %p645 = scmp.eq.s32.totalorder %s644, 0
      %s647 = sadd.s32 %s646, 1
      %s648 = scalar_select %p645, %s646, %s647
      %p651 = pneg %p645
      %p652 = scmp.eq.s32.totalorder %s90, 2
      %p653 = por %p651, %p652
      %p654 = scmp.ne.s32.totalorder %s646, %s649
      %p655 = scmp.eq.s32.totalorder %s90, 0
      %p656 = por %p654, %p655
      %p657 = scmp.ne.s32.totalorder %s646, %s649
      %p658 = scmp.eq.s32.totalorder %s95, 2
      %p659 = por %p657, %p658
      %p660 = scmp.ne.s32.totalorder %s649, %s650
      %p661 = scmp.eq.s32.totalorder %s95, 0
      %p662 = por %p660, %p661
      %p663 = scmp.ne.s32.totalorder %s649, %s650
      %p664 = scmp.eq.s32.totalorder %s96, 2
      %p665 = por %p663, %p664
      %p667 = scmp.ne.s32.totalorder %s650, %s666
      %p668 = scmp.eq.s32.totalorder %s96, 0
      %p669 = por %p667, %p668
      %s670 = ssub.s32 %s90, %s97
      %p671 = scmp.eq.s32.totalorder %s670, 0
      %s673 = sadd.s32 %s672, 1
      %s674 = scalar_select %p671, %s672, %s673
      %p677 = pneg %p671
      %p678 = scmp.eq.s32.totalorder %s90, 2
      %p679 = por %p677, %p678
      %p680 = scmp.ne.s32.totalorder %s672, %s675
      %p681 = scmp.eq.s32.totalorder %s90, 0
      %p682 = por %p680, %p681
      %p683 = scmp.ne.s32.totalorder %s672, %s675
      %p684 = scmp.eq.s32.totalorder %s95, 2
      %p685 = por %p683, %p684
      %p686 = scmp.ne.s32.totalorder %s675, %s676
      %p687 = scmp.eq.s32.totalorder %s95, 0
      %p688 = por %p686, %p687
      %p689 = scmp.ne.s32.totalorder %s675, %s676
      %p690 = scmp.eq.s32.totalorder %s96, 2
      %p691 = por %p689, %p690
      %p693 = scmp.ne.s32.totalorder %s676, %s692
      %p694 = scmp.eq.s32.totalorder %s96, 0
      %p695 = por %p693, %p694
      %s697 = sadd.s32 %s696, 1
      %p700 = scmp.eq.s32.totalorder %s90, 2
      %p701 = scmp.ne.s32.totalorder %s696, %s698
      %p702 = scmp.eq.s32.totalorder %s90, 0
      %p703 = por %p701, %p702
      %p704 = scmp.ne.s32.totalorder %s696, %s698
      %p705 = scmp.eq.s32.totalorder %s95, 2
      %p706 = por %p704, %p705
      %p707 = scmp.ne.s32.totalorder %s698, %s699
      %p708 = scmp.eq.s32.totalorder %s95, 0
      %p709 = por %p707, %p708
      %p710 = scmp.ne.s32.totalorder %s698, %s699
      %p711 = scmp.eq.s32.totalorder %s96, 2
      %p712 = por %p710, %p711
      %p714 = scmp.ne.s32.totalorder %s699, %s713
      %p715 = scmp.eq.s32.totalorder %s96, 0
      %p716 = por %p714, %p715
      %s718 = sadd.s32 %s717, 1
      %p721 = scmp.eq.s32.totalorder %s90, 2
      %p722 = scmp.ne.s32.totalorder %s717, %s719
      %p723 = scmp.eq.s32.totalorder %s90, 0
      %p724 = por %p722, %p723
      %p725 = scmp.ne.s32.totalorder %s717, %s719
      %p726 = scmp.eq.s32.totalorder %s95, 2
      %p727 = por %p725, %p726
      %p728 = scmp.ne.s32.totalorder %s719, %s720
      %p729 = scmp.eq.s32.totalorder %s95, 0
      %p730 = por %p728, %p729
      %p731 = scmp.ne.s32.totalorder %s719, %s720
      %p732 = scmp.eq.s32.totalorder %s96, 2
      %p733 = por %p731, %p732
      %p735 = scmp.ne.s32.totalorder %s720, %s734
      %p736 = scmp.eq.s32.totalorder %s96, 0
      %p737 = por %p735, %p736
      %s739 = sadd.s32 %s738, 1
      %p742 = scmp.eq.s32.totalorder %s90, 2
      %p743 = scmp.ne.s32.totalorder %s738, %s740
      %p744 = scmp.eq.s32.totalorder %s90, 0
      %p745 = por %p743, %p744
      %p746 = scmp.ne.s32.totalorder %s738, %s740
      %p747 = scmp.eq.s32.totalorder %s95, 2
      %p748 = por %p746, %p747
      %p749 = scmp.ne.s32.totalorder %s740, %s741
      %p750 = scmp.eq.s32.totalorder %s95, 0
      %p751 = por %p749, %p750
      %p752 = scmp.ne.s32.totalorder %s740, %s741
      %p753 = scmp.eq.s32.totalorder %s96, 2
      %p754 = por %p752, %p753
      %p756 = scmp.ne.s32.totalorder %s741, %s755
      %p757 = scmp.eq.s32.totalorder %s96, 0
      %p758 = por %p756, %p757
      %s760 = sadd.s32 %s759, 1
      %p763 = scmp.eq.s32.totalorder %s90, 2
      %p764 = scmp.ne.s32.totalorder %s759, %s761
      %p765 = scmp.eq.s32.totalorder %s90, 0
      %p766 = por %p764, %p765
      %p767 = scmp.ne.s32.totalorder %s759, %s761
      %p768 = scmp.eq.s32.totalorder %s95, 2
      %p769 = por %p767, %p768
      %p770 = scmp.ne.s32.totalorder %s761, %s762
      %p771 = scmp.eq.s32.totalorder %s95, 0
      %p772 = por %p770, %p771
      %p773 = scmp.ne.s32.totalorder %s761, %s762
      %p774 = scmp.eq.s32.totalorder %s96, 2
      %p775 = por %p773, %p774
      %p777 = scmp.ne.s32.totalorder %s762, %s776
      %p778 = scmp.eq.s32.totalorder %s96, 0
      %p779 = por %p777, %p778
      %s781 = sadd.s32 %s780, 1
      %p784 = scmp.eq.s32.totalorder %s90, 2
      %p785 = scmp.ne.s32.totalorder %s780, %s782
      %p786 = scmp.eq.s32.totalorder %s90, 0
      %p787 = por %p785, %p786
      %p788 = scmp.ne.s32.totalorder %s780, %s782
      %p789 = scmp.eq.s32.totalorder %s95, 2
      %p790 = por %p788, %p789
      %p791 = scmp.ne.s32.totalorder %s782, %s783
      %p792 = scmp.eq.s32.totalorder %s95, 0
      %p793 = por %p791, %p792
      %p794 = scmp.ne.s32.totalorder %s782, %s783
      %p795 = scmp.eq.s32.totalorder %s96, 2
      %p796 = por %p794, %p795
      %p798 = scmp.ne.s32.totalorder %s783, %s797
      %p799 = scmp.eq.s32.totalorder %s96, 0
      %p800 = por %p798, %p799
      %s802 = sadd.s32 %s801, 1
      %p805 = scmp.eq.s32.totalorder %s90, 2
      %p806 = scmp.ne.s32.totalorder %s801, %s803
      %p807 = scmp.eq.s32.totalorder %s90, 0
      %p808 = por %p806, %p807
      %p809 = scmp.ne.s32.totalorder %s801, %s803
      %p810 = scmp.eq.s32.totalorder %s95, 2
      %p811 = por %p809, %p810
      %p812 = scmp.ne.s32.totalorder %s803, %s804
      %p813 = scmp.eq.s32.totalorder %s95, 0
      %p814 = por %p812, %p813
      %p815 = scmp.ne.s32.totalorder %s803, %s804
      %p816 = scmp.eq.s32.totalorder %s96, 2
      %p817 = por %p815, %p816
      %p819 = scmp.ne.s32.totalorder %s804, %s818
      %p820 = scmp.eq.s32.totalorder %s96, 0
      %p821 = por %p819, %p820
      %s822 = ssub.s32 %s90, %s97
      %p823 = scmp.eq.s32.totalorder %s822, 0
      %s825 = sadd.s32 %s824, 1
      %s826 = scalar_select %p823, %s824, %s825
      %p829 = pneg %p823
      %p830 = scmp.eq.s32.totalorder %s90, 2
      %p831 = por %p829, %p830
      %p832 = scmp.ne.s32.totalorder %s824, %s827
      %p833 = scmp.eq.s32.totalorder %s90, 0
      %p834 = por %p832, %p833
      %p835 = scmp.ne.s32.totalorder %s824, %s827
      %p836 = scmp.eq.s32.totalorder %s95, 2
      %p837 = por %p835, %p836
      %p838 = scmp.ne.s32.totalorder %s827, %s828
      %p839 = scmp.eq.s32.totalorder %s95, 0
      %p840 = por %p838, %p839
      %p841 = scmp.ne.s32.totalorder %s827, %s828
      %p842 = scmp.eq.s32.totalorder %s96, 2
      %p843 = por %p841, %p842
      %p845 = scmp.ne.s32.totalorder %s828, %s844
      %p846 = scmp.eq.s32.totalorder %s96, 0
      %p847 = por %p845, %p846
      %s849 = sadd.s32 %s848, 1
      %p852 = scmp.eq.s32.totalorder %s90, 2
      %p853 = scmp.ne.s32.totalorder %s848, %s850
      %p854 = scmp.eq.s32.totalorder %s90, 0
      %p855 = por %p853, %p854
      %p856 = scmp.ne.s32.totalorder %s848, %s850
      %p857 = scmp.eq.s32.totalorder %s95, 2
      %p858 = por %p856, %p857
      %p859 = scmp.ne.s32.totalorder %s850, %s851
      %p860 = scmp.eq.s32.totalorder %s95, 0
      %p861 = por %p859, %p860
      %p862 = scmp.ne.s32.totalorder %s850, %s851
      %p863 = scmp.eq.s32.totalorder %s96, 2
      %p864 = por %p862, %p863
      %p866 = scmp.ne.s32.totalorder %s851, %s865
      %p867 = scmp.eq.s32.totalorder %s96, 0
      %p868 = por %p866, %p867
      %s870 = sadd.s32 %s869, 1
      %p873 = scmp.eq.s32.totalorder %s90, 2
      %p874 = scmp.ne.s32.totalorder %s869, %s871
      %p875 = scmp.eq.s32.totalorder %s90, 0
      %p876 = por %p874, %p875
      %p877 = scmp.ne.s32.totalorder %s869, %s871
      %p878 = scmp.eq.s32.totalorder %s95, 2
      %p879 = por %p877, %p878
      %p880 = scmp.ne.s32.totalorder %s871, %s872
      %p881 = scmp.eq.s32.totalorder %s95, 0
      %p882 = por %p880, %p881
      %p883 = scmp.ne.s32.totalorder %s871, %s872
      %p884 = scmp.eq.s32.totalorder %s96, 2
      %p885 = por %p883, %p884
      %p887 = scmp.ne.s32.totalorder %s872, %s886
      %p888 = scmp.eq.s32.totalorder %s96, 0
      %p889 = por %p887, %p888
      %p890 = scmp.le.s32.totalorder 1, %s90
      %p891 = scmp.lt.s32.totalorder %s90, 4
      %p892 = pnand %p890, %p891
      %p893 = pneg %p892
      // Predicated region
      $region9: #{tpu_custom_call.1} parent=5 // pred_check
        _
      $region10: #{tpu_custom_call.1} parent=5 // pred_check_branch
        %895 = sbr.rel (%p892) target = $region12
      $region11: #{tpu_custom_call.1} parent=5 // pred_region
        %s896 = ssub.s32 %s90, 1
        // Predicated region
        $region13: #{tpu_custom_call.1} parent=11 // pred_check
          %p897 = pneg %p111
        $region14: #{tpu_custom_call.1} parent=11 // pred_check_branch
          %899 = sbr.rel (%p897) target = $region16
        $region15: #{tpu_custom_call.1} parent=11 // pred_region
          %s901 = ssub.s32 32, 32
          %902 = vsyncadd [#allocation8], %s901
          %s904 = sshll.u32 [#allocation7], 4
          %s905 = int_to_ptr.vmem [resolvable:$true] %s904
          %907 = dma.hbm_to_vmem [thread:$0]  %s1, 32, %s905, [#allocation8]
        $region16: #{tpu_custom_call.1} parent=11 // pred_fallthru
          _
        // Predicated region
        $region17: #{tpu_custom_call.1} parent=11 // pred_check
          %p908 = pneg %p132
        $region18: #{tpu_custom_call.1} parent=11 // pred_check_branch
          %910 = sbr.rel (%p908) target = $region20
        $region19: #{tpu_custom_call.1} parent=11 // pred_region
          %s912 = ssub.s32 32, 32
          %913 = vsyncadd [#allocation11], %s912
          %s915 = sshll.u32 [#allocation10], 4
          %s916 = int_to_ptr.vmem [resolvable:$true] %s915
          %918 = dma.hbm_to_vmem [thread:$0]  %s3, 32, %s916, [#allocation11]
        $region20: #{tpu_custom_call.1} parent=11 // pred_fallthru
          _
        // Predicated region
        $region21: #{tpu_custom_call.1} parent=11 // pred_check
          %p919 = pneg %p153
        $region22: #{tpu_custom_call.1} parent=11 // pred_check_branch
          %921 = sbr.rel (%p919) target = $region24
        $region23: #{tpu_custom_call.1} parent=11 // pred_region
          %s923 = ssub.s32 32, 32
          %924 = vsyncadd [#allocation11], %s923
          %s926 = sshll.u32 [#allocation12], 4
          %s927 = int_to_ptr.vmem [resolvable:$true] %s926
          %929 = dma.hbm_to_vmem [thread:$0]  %s5, 32, %s927, [#allocation11]
        $region24: #{tpu_custom_call.1} parent=11 // pred_fallthru
          _
        // Predicated region
        $region25: #{tpu_custom_call.1} parent=11 // pred_check
          %p930 = pneg %p174
        $region26: #{tpu_custom_call.1} parent=11 // pred_check_branch
          %932 = sbr.rel (%p930) target = $region28
        $region27: #{tpu_custom_call.1} parent=11 // pred_region
          _
        $region28: #{tpu_custom_call.1} parent=11 // pred_fallthru
          _
        // Predicated region
        $region29: #{tpu_custom_call.1} parent=11 // pred_check
          %p933 = pneg %p195
        $region30: #{tpu_custom_call.1} parent=11 // pred_check_branch
          %935 = sbr.rel (%p933) target = $region32
        $region31: #{tpu_custom_call.1} parent=11 // pred_region
          _
        $region32: #{tpu_custom_call.1} parent=11 // pred_fallthru
          _
        // Predicated region
        $region33: #{tpu_custom_call.1} parent=11 // pred_check
          %p936 = pneg %p216
        $region34: #{tpu_custom_call.1} parent=11 // pred_check_branch
          %938 = sbr.rel (%p936) target = $region36
        $region35: #{tpu_custom_call.1} parent=11 // pred_region
          _
        $region36: #{tpu_custom_call.1} parent=11 // pred_fallthru
          _
        // Predicated region
        $region37: #{tpu_custom_call.1} parent=11 // pred_check
          %p939 = pneg %p237
        $region38: #{tpu_custom_call.1} parent=11 // pred_check_branch
          %941 = sbr.rel (%p939) target = $region40
        $region39: #{tpu_custom_call.1} parent=11 // pred_region
          _
        $region40: #{tpu_custom_call.1} parent=11 // pred_fallthru
          _
        // Predicated region
        $region41: #{tpu_custom_call.1} parent=11 // pred_check
          %p942 = pneg %p258
        $region42: #{tpu_custom_call.1} parent=11 // pred_check_branch
          %944 = sbr.rel (%p942) target = $region44
        $region43: #{tpu_custom_call.1} parent=11 // pred_region
          _
        $region44: #{tpu_custom_call.1} parent=11 // pred_fallthru
          _
        // Predicated region
        $region45: #{tpu_custom_call.1} parent=11 // pred_check
          %p945 = pneg %p279
        $region46: #{tpu_custom_call.1} parent=11 // pred_check_branch
          %947 = sbr.rel (%p945) target = $region48
        $region47: #{tpu_custom_call.1} parent=11 // pred_region
          _
        $region48: #{tpu_custom_call.1} parent=11 // pred_fallthru
          _
        // Predicated region
        $region49: #{tpu_custom_call.1} parent=11 // pred_check
          %p948 = pneg %p300
        $region50: #{tpu_custom_call.1} parent=11 // pred_check_branch
          %950 = sbr.rel (%p948) target = $region52
        $region51: #{tpu_custom_call.1} parent=11 // pred_region
          _
        $region52: #{tpu_custom_call.1} parent=11 // pred_fallthru
          _
        // Predicated region
        $region53: #{tpu_custom_call.1} parent=11 // pred_check
          %p951 = pneg %p321
        $region54: #{tpu_custom_call.1} parent=11 // pred_check_branch
          %953 = sbr.rel (%p951) target = $region56
        $region55: #{tpu_custom_call.1} parent=11 // pred_region
          _
        $region56: #{tpu_custom_call.1} parent=11 // pred_fallthru
          _
        // Predicated region
        $region57: #{tpu_custom_call.1} parent=11 // pred_check
          %p954 = pneg %p342
        $region58: #{tpu_custom_call.1} parent=11 // pred_check_branch
          %956 = sbr.rel (%p954) target = $region60
        $region59: #{tpu_custom_call.1} parent=11 // pred_region
          _
        $region60: #{tpu_custom_call.1} parent=11 // pred_fallthru
          _
        // Predicated region
        $region61: #{tpu_custom_call.1} parent=11 // pred_check
          %p957 = pneg %p363
        $region62: #{tpu_custom_call.1} parent=11 // pred_check_branch
          %959 = sbr.rel (%p957) target = $region64
        $region63: #{tpu_custom_call.1} parent=11 // pred_region
          _
        $region64: #{tpu_custom_call.1} parent=11 // pred_fallthru
          _
        // Predicated region
        $region65: #{tpu_custom_call.1} parent=11 // pred_check
          %p960 = pneg %p384
        $region66: #{tpu_custom_call.1} parent=11 // pred_check_branch
          %962 = sbr.rel (%p960) target = $region68
        $region67: #{tpu_custom_call.1} parent=11 // pred_region
          _
        $region68: #{tpu_custom_call.1} parent=11 // pred_fallthru
          _
        // Predicated region
        $region69: #{tpu_custom_call.1} parent=11 // pred_check
          %p963 = pneg %p405
        $region70: #{tpu_custom_call.1} parent=11 // pred_check_branch
          %965 = sbr.rel (%p963) target = $region72
        $region71: #{tpu_custom_call.1} parent=11 // pred_region
          _
        $region72: #{tpu_custom_call.1} parent=11 // pred_fallthru
          _
        // Predicated region
        $region73: #{tpu_custom_call.1} parent=11 // pred_check
          %p966 = pneg %p426
        $region74: #{tpu_custom_call.1} parent=11 // pred_check_branch
          %968 = sbr.rel (%p966) target = $region76
        $region75: #{tpu_custom_call.1} parent=11 // pred_region
          _
        $region76: #{tpu_custom_call.1} parent=11 // pred_fallthru
          _
        // Predicated region
        $region77: #{tpu_custom_call.1} parent=11 // pred_check
          %p969 = pneg %p447
        $region78: #{tpu_custom_call.1} parent=11 // pred_check_branch
          %971 = sbr.rel (%p969) target = $region80
        $region79: #{tpu_custom_call.1} parent=11 // pred_region
          _
        $region80: #{tpu_custom_call.1} parent=11 // pred_fallthru
          _
        // Predicated region
        $region81: #{tpu_custom_call.1} parent=11 // pred_check
          %p972 = pneg %p468
        $region82: #{tpu_custom_call.1} parent=11 // pred_check_branch
          %974 = sbr.rel (%p972) target = $region84
        $region83: #{tpu_custom_call.1} parent=11 // pred_region
          _
        $region84: #{tpu_custom_call.1} parent=11 // pred_fallthru
          _
        // Predicated region
        $region85: #{tpu_custom_call.1} parent=11 // pred_check
          %p975 = pneg %p489
        $region86: #{tpu_custom_call.1} parent=11 // pred_check_branch
          %977 = sbr.rel (%p975) target = $region88
        $region87: #{tpu_custom_call.1} parent=11 // pred_region
          _
        $region88: #{tpu_custom_call.1} parent=11 // pred_fallthru
          _
        // Predicated region
        $region89: #{tpu_custom_call.1} parent=11 // pred_check
          %p978 = pneg %p510
        $region90: #{tpu_custom_call.1} parent=11 // pred_check_branch
          %980 = sbr.rel (%p978) target = $region92
        $region91: #{tpu_custom_call.1} parent=11 // pred_region
          _
        $region92: #{tpu_custom_call.1} parent=11 // pred_fallthru
          _
        // Predicated region
        $region93: #{tpu_custom_call.1} parent=11 // pred_check
          %p981 = pneg %p531
        $region94: #{tpu_custom_call.1} parent=11 // pred_check_branch
          %983 = sbr.rel (%p981) target = $region96
        $region95: #{tpu_custom_call.1} parent=11 // pred_region
          _
        $region96: #{tpu_custom_call.1} parent=11 // pred_fallthru
          _
        // Predicated region
        $region97: #{tpu_custom_call.1} parent=11 // pred_check
          %p984 = pneg %p552
        $region98: #{tpu_custom_call.1} parent=11 // pred_check_branch
          %986 = sbr.rel (%p984) target = $region100
        $region99: #{tpu_custom_call.1} parent=11 // pred_region
          _
        $region100: #{tpu_custom_call.1} parent=11 // pred_fallthru
          _
        // Predicated region
        $region101: #{tpu_custom_call.1} parent=11 // pred_check
          %p987 = pneg %p573
        $region102: #{tpu_custom_call.1} parent=11 // pred_check_branch
          %989 = sbr.rel (%p987) target = $region104
        $region103: #{tpu_custom_call.1} parent=11 // pred_region
          _
        $region104: #{tpu_custom_call.1} parent=11 // pred_fallthru
          _
        // Predicated region
        $region105: #{tpu_custom_call.1} parent=11 // pred_check
          %p990 = pneg %p594
        $region106: #{tpu_custom_call.1} parent=11 // pred_check_branch
          %992 = sbr.rel (%p990) target = $region108
        $region107: #{tpu_custom_call.1} parent=11 // pred_region
          _
        $region108: #{tpu_custom_call.1} parent=11 // pred_fallthru
          _
        // Predicated region
        $region109: #{tpu_custom_call.1} parent=11 // pred_check
          %p993 = pneg %p615
        $region110: #{tpu_custom_call.1} parent=11 // pred_check_branch
          %995 = sbr.rel (%p993) target = $region112
        $region111: #{tpu_custom_call.1} parent=11 // pred_region
          _
        $region112: #{tpu_custom_call.1} parent=11 // pred_fallthru
          _
        // Predicated region
        $region113: #{tpu_custom_call.1} parent=11 // pred_check
          %p996 = pneg %p636
        $region114: #{tpu_custom_call.1} parent=11 // pred_check_branch
          %998 = sbr.rel (%p996) target = $region116
        $region115: #{tpu_custom_call.1} parent=11 // pred_region
          _
        $region116: #{tpu_custom_call.1} parent=11 // pred_fallthru
          _
      $region12: #{tpu_custom_call.1} parent=5 // pred_fallthru
        _
      %p999 = scmp.lt.s32.totalorder %s90, 3
      // Predicated region
      $region117: #{tpu_custom_call.1} parent=5 // pred_check
        %p1000 = pneg %p999
      $region118: #{tpu_custom_call.1} parent=5 // pred_check_branch
        %1002 = sbr.rel (%p1000) target = $region120
      $region119: #{tpu_custom_call.1} parent=5 // pred_region
        // Predicated region
        $region121: #{tpu_custom_call.1} parent=119 // pred_check
          %p1003 = pneg %p656
        $region122: #{tpu_custom_call.1} parent=119 // pred_check_branch
          %1005 = sbr.rel (%p1003) target = $region124
        $region123: #{tpu_custom_call.1} parent=119 // pred_region
          %s1006 = sand.u32 %s646, 1
          %s1007 = sand.u32 %s646, 1
          %s1008 = smul.addr %s1007, 32
          %s1009 = scalar_lea.vmem [#allocation13], %s1008
          %s1010 = smul.addr %s90, 8
          %s1011 = scalar_lea.vmem %s53, %s1010
          // Predicated region
          $region125: #{tpu_custom_call.1} parent=123 // pred_check
            _
          $region126: #{tpu_custom_call.1} parent=123 // pred_check_branch
            %1013 = sbr.rel (0) target = $region128
          $region127: #{tpu_custom_call.1} parent=123 // pred_region
            // Predicated region
            $region129: #{tpu_custom_call.1} parent=127 // pred_check
              _
            $region130: #{tpu_custom_call.1} parent=127 // pred_check_branch
              %1015 = sbr.rel (0) target = $region132
            $region131: #{tpu_custom_call.1} parent=127 // pred_region
              // Predicated region
              $region144: #{tpu_custom_call.1} parent=131 // pred_check
                _
              $region145: #{tpu_custom_call.1} parent=131 // pred_check_branch
                %1036 = sbr.rel (0) target = $region147
              $region146: #{tpu_custom_call.1} parent=131 // pred_region
                loop: start=0, step=1, limit=1
                $region148: #{tpu_custom_call.1} parent=146 // loop_pre_header
                  _
                $region149: #{tpu_custom_call.1} parent=146 // loop_header
                  %s1038 = sphi 0, %s1042
                  %p1039 = scmp.ge.s32.totalorder %s1038, 1
                  %s1043 = sphi %s1011, %s1011
                  %s1044 = sphi %s1009, %s1009
                $region150: #{tpu_custom_call.1} parent=146 // loop_header_branch
                  %1041 = sbr.rel (%p1039) target = $region154
                $region151: #{tpu_custom_call.1} parent=146 // loop_body
                  %v1045 = vld [vmem:[%s1043] sm:$0xff]
                  %1046 = vst [vmem:[%s1044] sm:$0xff] %v1045
                  %v1047 = vld [vmem:[%s1043 + $0x18] sm:$0xff]
                  %1048 = vst [vmem:[%s1044 + $0x8] sm:$0xff] %v1047
                  %v1049 = vld [vmem:[%s1043 + $0x30] sm:$0xff]
                  %1050 = vst [vmem:[%s1044 + $0x10] sm:$0xff] %v1049
                  %v1051 = vld [vmem:[%s1043 + $0x48] sm:$0xff]
                  %1052 = vst [vmem:[%s1044 + $0x18] sm:$0xff] %v1051
                $region152: #{tpu_custom_call.1} parent=146 // loop_footer
                  %s1042 = sadd.s32 1, %s1038
                $region153: #{tpu_custom_call.1} parent=146 // loop_footer_branch
                  %1037 = sbr.rel target = $region149
                $region154: #{tpu_custom_call.1} parent=146 // loop_exit
                  _
              $region147: #{tpu_custom_call.1} parent=131 // pred_fallthru
                _
              // Predicated region
              $region155: #{tpu_custom_call.1} parent=131 // pred_check
                _
              $region156: #{tpu_custom_call.1} parent=131 // pred_check_branch
                %1054 = sbr.rel target = $region158
              $region157: #{tpu_custom_call.1} parent=131 // pred_region
                _
              $region158: #{tpu_custom_call.1} parent=131 // pred_fallthru
                _
            $region132: #{tpu_custom_call.1} parent=127 // pred_fallthru
              _
            // Predicated region
            $region133: #{tpu_custom_call.1} parent=127 // pred_check
              _
            $region134: #{tpu_custom_call.1} parent=127 // pred_check_branch
              %1017 = sbr.rel target = $region136
            $region135: #{tpu_custom_call.1} parent=127 // pred_region
              loop: start=0, step=1, limit=1
              $region137: #{tpu_custom_call.1} parent=135 // loop_pre_header
                _
              $region138: #{tpu_custom_call.1} parent=135 // loop_header
                %s1020 = sphi 0, %s1024
                %p1021 = scmp.ge.s32.totalorder %s1020, 1
                %s1025 = sphi %s1011, %s1011
                %s1026 = sphi %s1009, %s1009
              $region139: #{tpu_custom_call.1} parent=135 // loop_header_branch
                %1023 = sbr.rel (%p1021) target = $region143
              $region140: #{tpu_custom_call.1} parent=135 // loop_body
                %v1027 = vld [vmem:[%s1025] sm:$0xff]
                %1028 = vst [vmem:[%s1026] sm:$0xff] %v1027
                %v1029 = vld [vmem:[%s1025 + $0x18] sm:$0xff]
                %1030 = vst [vmem:[%s1026 + $0x8] sm:$0xff] %v1029
                %v1031 = vld [vmem:[%s1025 + $0x30] sm:$0xff]
                %1032 = vst [vmem:[%s1026 + $0x10] sm:$0xff] %v1031
                %v1033 = vld [vmem:[%s1025 + $0x48] sm:$0xff]
                %1034 = vst [vmem:[%s1026 + $0x18] sm:$0xff] %v1033
              $region141: #{tpu_custom_call.1} parent=135 // loop_footer
                %s1024 = sadd.s32 1, %s1020
              $region142: #{tpu_custom_call.1} parent=135 // loop_footer_branch
                %1019 = sbr.rel target = $region138
              $region143: #{tpu_custom_call.1} parent=135 // loop_exit
                _
            $region136: #{tpu_custom_call.1} parent=127 // pred_fallthru
              _
          $region128: #{tpu_custom_call.1} parent=123 // pred_fallthru
            _
          %1055 = vnop
        $region124: #{tpu_custom_call.1} parent=119 // pred_fallthru
          _
        // Predicated region
        $region159: #{tpu_custom_call.1} parent=119 // pred_check
          %p1056 = pneg %p682
        $region160: #{tpu_custom_call.1} parent=119 // pred_check_branch
          %1058 = sbr.rel (%p1056) target = $region162
        $region161: #{tpu_custom_call.1} parent=119 // pred_region
          %p1059 = scmp.lt.s32.totalorder %s90, 2
          %s1060 = scalar_select %p1059, %s90, 2
          %s1061 = scalar_lea.vmem %s55, %s1060
        $region162: #{tpu_custom_call.1} parent=119 // pred_fallthru
          _
      $region120: #{tpu_custom_call.1} parent=5 // pred_fallthru
        _
      %p1062 = scmp.le.s32.totalorder 1, %s90
      %p1063 = scmp.lt.s32.totalorder %s90, 4
      %p1064 = pnand %p1062, %p1063
      %p1065 = pneg %p1064
      // Predicated region
      $region163: #{tpu_custom_call.1} parent=5 // pred_check
        _
      $region164: #{tpu_custom_call.1} parent=5 // pred_check_branch
        %1067 = sbr.rel (%p1064) target = $region166
      $region165: #{tpu_custom_call.1} parent=5 // pred_region
        %s1068 = ssub.s32 %s90, 1
        // Predicated region
        $region167: #{tpu_custom_call.1} parent=165 // pred_check
          %p1069 = pneg %p111
        $region168: #{tpu_custom_call.1} parent=165 // pred_check_branch
          %1071 = sbr.rel (%p1069) target = $region170
        $region169: #{tpu_custom_call.1} parent=165 // pred_region
          %1072 = dma.done [#allocation8], 32
        $region170: #{tpu_custom_call.1} parent=165 // pred_fallthru
          _
        // Predicated region
        $region171: #{tpu_custom_call.1} parent=165 // pred_check
          %p1073 = pneg %p132
        $region172: #{tpu_custom_call.1} parent=165 // pred_check_branch
          %1075 = sbr.rel (%p1073) target = $region174
        $region173: #{tpu_custom_call.1} parent=165 // pred_region
          %1076 = dma.done [#allocation11], 32
        $region174: #{tpu_custom_call.1} parent=165 // pred_fallthru
          _
        // Predicated region
        $region175: #{tpu_custom_call.1} parent=165 // pred_check
          %p1077 = pneg %p153
        $region176: #{tpu_custom_call.1} parent=165 // pred_check_branch
          %1079 = sbr.rel (%p1077) target = $region178
        $region177: #{tpu_custom_call.1} parent=165 // pred_region
          %1080 = dma.done [#allocation11], 32
        $region178: #{tpu_custom_call.1} parent=165 // pred_fallthru
          _
        %s1081 = sand.u32 %s649, 1
        %s1082 = sand.u32 %s649, 1
        %s1083 = smul.addr %s1082, 32
        %s1084 = scalar_lea.vmem [#allocation13], %s1083
        // Predicated region
        $region179: #{tpu_custom_call.1} parent=165 // pred_check
          %p1085 = pneg %p662
        $region180: #{tpu_custom_call.1} parent=165 // pred_check_branch
          %1087 = sbr.rel (%p1085) target = $region182
        $region181: #{tpu_custom_call.1} parent=165 // pred_region
          _
        $region182: #{tpu_custom_call.1} parent=165 // pred_fallthru
          _
        %p1088 = pneg %p111
        %p1089 = pneg %p108
        %p1090 = pneg %p132
        %p1091 = pneg %p129
        %p1092 = pneg %p153
        %p1093 = pneg %p150
        %p1094 = pneg %p174
        %p1095 = pneg %p171
        %p1096 = pneg %p195
        %p1097 = pneg %p192
        %p1098 = pneg %p216
        %p1099 = pneg %p213
        %p1100 = pneg %p237
        %p1101 = pneg %p234
        %p1102 = pneg %p258
        %p1103 = pneg %p255
        %p1104 = pneg %p279
        %p1105 = pneg %p276
        %p1106 = pneg %p300
        %p1107 = pneg %p297
        %p1108 = pneg %p321
        %p1109 = pneg %p318
        %p1110 = pneg %p342
        %p1111 = pneg %p339
        %p1112 = pneg %p363
        %p1113 = pneg %p360
        %p1114 = pneg %p384
        %p1115 = pneg %p381
        %p1116 = pneg %p405
        %p1117 = pneg %p402
        %p1118 = pneg %p426
        %p1119 = pneg %p423
        %p1120 = pneg %p447
        %p1121 = pneg %p444
        %p1122 = pneg %p468
        %p1123 = pneg %p465
        %p1124 = pneg %p489
        %p1125 = pneg %p486
        %p1126 = pneg %p510
        %p1127 = pneg %p507
        %p1128 = pneg %p531
        %p1129 = pneg %p528
        %p1130 = pneg %p552
        %p1131 = pneg %p549
        %p1132 = pneg %p573
        %p1133 = pneg %p570
        %p1134 = pneg %p594
        %p1135 = pneg %p591
        %p1136 = pneg %p615
        %p1137 = pneg %p612
        %p1138 = pneg %p636
        %p1139 = pneg %p633
        %s1140 = sand.u32 %s649, 1
        %s1141 = sand.u32 %s649, 1
        %s1142 = smul.addr %s1141, 32
        %s1143 = scalar_lea.vmem [#allocation13], %s1142
        %p1144 = pneg %p662
        %p1145 = pneg %p659
        %p1146 = scmp.lt.s32.totalorder %s95, 2
        %s1147 = scalar_select %p1146, %s95, 2
        %s1148 = scalar_lea.vmem %s55, %s1147
        %p1149 = pneg %p688
        %p1150 = pneg %p685
        %p1151 = pneg %p709
        %p1152 = pneg %p706
        %p1153 = pneg %p730
        %p1154 = pneg %p727
        %p1155 = pneg %p751
        %p1156 = pneg %p748
        %p1157 = pneg %p772
        %p1158 = pneg %p769
        %p1159 = pneg %p793
        %p1160 = pneg %p790
        %p1161 = pneg %p814
        %p1162 = pneg %p811
        %p1163 = pneg %p840
        %p1164 = pneg %p837
        %s1165 = sand.u32 %s827, 1
        %s1166 = scalar_lea.sflag [#allocation22], %s1165
        %s1167 = sand.u32 %s827, 1
        %s1168 = smul.addr %s1167, 2
        %s1169 = scalar_lea.vmem [#allocation21], %s1168
        %p1170 = pneg %p861
        %p1171 = pneg %p858
        %p1172 = pneg %p882
        %p1173 = pneg %p879
        %p1174 = scmp.lt.s32.totalorder %s95, 2
        %s1175 = scalar_select %p1174, %s95, 2
        %s1176 = scalar_lea.vmem %s55, %s1175
        %p1177 = scmp.eq.s32.totalorder %s95, 0
        // Predicated region
        $region183: #{tpu_custom_call.1} parent=165 // pred_check
          %p1178 = pneg %p1177
        $region184: #{tpu_custom_call.1} parent=165 // pred_check_branch
          %1180 = sbr.rel (%p1178) target = $region186
        $region185: #{tpu_custom_call.1} parent=165 // pred_region
          %v1181 = vld [vmem:[%s11] sm:$0x3]
          %v1182 = vld [vmem:[#allocation7] sm:$0x3]
          %v1183 = vld [vmem:[%s15] sm:$0xff]
          %v1184 = vld [vmem:[%s15 + $0x8] sm:$0xff]
          %v1185 = vld [vmem:[%s15 + $0x10] sm:$0xff]
          %v1186 = vld [vmem:[%s15 + $0x18] sm:$0xff]
          %v1187 = vld [vmem:[%s15 + $0x20] sm:$0xff]
          %v1188 = vld [vmem:[%s15 + $0x28] sm:$0xff]
          %v1189 = vld [vmem:[%s15 + $0x30] sm:$0xff]
          %v1190 = vld [vmem:[%s15 + $0x38] sm:$0xff]
          %v1191 = vld [vmem:[%s17] sm:$0xff]
          %v1192 = vld [vmem:[%s17 + $0x8] sm:$0xff]
          %v1193 = vld [vmem:[%s17 + $0x10] sm:$0xff]
          %v1194 = vld [vmem:[%s17 + $0x18] sm:$0xff]
          %vm1195 = vcmask 261120
          %v1197 = vsel %vm1195, %v1182, 0
          %1199 = vmatprep.subr.mxu0 0.0
          %1200 = vmatpush1.msra.mxu0 %v1191
          %1201 = vmatprep.subr.mxu0 0.0
          %1202 = vmatpush1.msra.mxu0 %v1192
          %1203 = vmatprep.subr.mxu0 0.0
          %1204 = vmatpush1.msra.mxu0 %v1193
          %1205 = vmatprep.subr.mxu0 0.0
          %1206 = vmatpush1.msra.mxu0 %v1194
          %1207 = vmatprep.subr.mxu0 0.0
          %1208 = vmatpush1.msra.mxu0 0.0
          %1209 = vmatprep.subr.mxu0 0.0
          %1210 = vmatpush1.msra.mxu0 0.0
          %1211 = vmatprep.subr.mxu0 0.0
          %1212 = vmatpush1.msra.mxu0 0.0
          %1213 = vmatprep.subr.mxu0 0.0
          %1214 = vmatpush1.msra.mxu0 0.0
          %1215 = vmatprep.subr.mxu0 0.0
          %1216 = vmatpush1.msra.mxu0 0.0
          %1217 = vmatprep.subr.mxu0 0.0
          %1218 = vmatpush1.msra.mxu0 0.0
          %1219 = vmatprep.subr.mxu0 0.0
          %1220 = vmatpush1.msra.mxu0 0.0
          %1221 = vmatprep.subr.mxu0 0.0
          %1222 = vmatpush1.msra.mxu0 0.0
          %1223 = vmatprep.subr.mxu0 0.0
          %1224 = vmatpush1.msra.mxu0 0.0
          %1225 = vmatprep.subr.mxu0 0.0
          %1226 = vmatpush1.msra.mxu0 0.0
          %1227 = vmatprep.subr.mxu0 0.0
          %1228 = vmatpush1.msra.mxu0 0.0
          %1229 = vmatprep.subr.mxu0 0.0
          %1230 = vmatpush1.msra.mxu0 0.0
          %1231 = vmatprep.subr.mxu0 0.0
          %1232 = vmatpush1.msra.mxu0 0.0
          %1233 = vmatprep.subr.mxu0 0.0
          %1234 = vmatpush1.msra.mxu0 0.0
          %1235 = vmatprep.subr.mxu0 0.0
          %1236 = vmatpush1.msra.mxu0 0.0
          %1237 = vmatprep.subr.mxu0 0.0
          %1238 = vmatpush1.msra.mxu0 0.0
          %1239 = vmatprep.subr.mxu0 0.0
          %1240 = vmatpush1.msra.mxu0 0.0
          %1241 = vmatprep.subr.mxu0 0.0
          %1242 = vmatpush1.msra.mxu0 0.0
          %1243 = vmatprep.subr.mxu0 0.0
          %1244 = vmatpush1.msra.mxu0 0.0
          %1245 = vmatprep.subr.mxu0 0.0
          %1246 = vmatpush1.msra.mxu0 0.0
          %1247 = vmatprep.subr.mxu0 0.0
          %1248 = vmatpush1.msra.mxu0 0.0
          %1249 = vmatprep.subr.mxu0 0.0
          %1250 = vmatpush1.msra.mxu0 0.0
          %1251 = vmatprep.subr.mxu0 0.0
          %1252 = vmatpush1.msra.mxu0 0.0
          %1253 = vmatprep.subr.mxu0 0.0
          %1254 = vmatpush1.msra.mxu0 0.0
          %1255 = vmatprep.subr.mxu0 0.0
          %1256 = vmatpush1.msra.mxu0 0.0
          %1257 = vmatprep.subr.mxu0 0.0
          %1258 = vmatpush1.msra.mxu0 0.0
          %1259 = vmatprep.subr.mxu0 0.0
          %1260 = vmatpush1.msra.mxu0 0.0
          %1261 = vmatprep.subr.mxu0 0.0
          %1262 = vmatpush1.msra.mxu0 0.0
          %1263 = vmatprep.mubr.f32.mxu0 0.0
          %1264 = vmatmul.mubr.f32.gmra.mrb[0].mxu0 %v1197
          %v1265 = vpop.f32.mrb[0].mxu0
          %v1266 = vadd.f32 0.0, %v1265
          %v1267 = vpop.f32.mrb[0].mxu0
          %1268 = vdwg.mxu0
          %vm1269 = vcmask 523264
          %v1271 = vsel %vm1269, %v1181, 0
          %1273 = vmatprep.subr.mxu0 0.0
          %1274 = vmatpush1.msra.mxu0 %v1183
          %1275 = vmatprep.subr.mxu0 0.0
          %1276 = vmatpush1.msra.mxu0 %v1184
          %1277 = vmatprep.subr.mxu0 0.0
          %1278 = vmatpush1.msra.mxu0 %v1185
          %1279 = vmatprep.subr.mxu0 0.0
          %1280 = vmatpush1.msra.mxu0 %v1186
          %1281 = vmatprep.subr.mxu0 0.0
          %1282 = vmatpush1.msra.mxu0 %v1187
          %1283 = vmatprep.subr.mxu0 0.0
          %1284 = vmatpush1.msra.mxu0 %v1188
          %1285 = vmatprep.subr.mxu0 0.0
          %1286 = vmatpush1.msra.mxu0 %v1189
          %1287 = vmatprep.subr.mxu0 0.0
          %1288 = vmatpush1.msra.mxu0 %v1190
          %1289 = vmatprep.subr.mxu0 0.0
          %1290 = vmatpush1.msra.mxu0 0.0
          %1291 = vmatprep.subr.mxu0 0.0
          %1292 = vmatpush1.msra.mxu0 0.0
          %1293 = vmatprep.subr.mxu0 0.0
          %1294 = vmatpush1.msra.mxu0 0.0
          %1295 = vmatprep.subr.mxu0 0.0
          %1296 = vmatpush1.msra.mxu0 0.0
          %1297 = vmatprep.subr.mxu0 0.0
          %1298 = vmatpush1.msra.mxu0 0.0
          %1299 = vmatprep.subr.mxu0 0.0
          %1300 = vmatpush1.msra.mxu0 0.0
          %1301 = vmatprep.subr.mxu0 0.0
          %1302 = vmatpush1.msra.mxu0 0.0
          %1303 = vmatprep.subr.mxu0 0.0
          %1304 = vmatpush1.msra.mxu0 0.0
          %1305 = vmatprep.subr.mxu0 0.0
          %1306 = vmatpush1.msra.mxu0 0.0
          %1307 = vmatprep.subr.mxu0 0.0
          %1308 = vmatpush1.msra.mxu0 0.0
          %1309 = vmatprep.subr.mxu0 0.0
          %1310 = vmatpush1.msra.mxu0 0.0
          %1311 = vmatprep.subr.mxu0 0.0
          %1312 = vmatpush1.msra.mxu0 0.0
          %1313 = vmatprep.subr.mxu0 0.0
          %1314 = vmatpush1.msra.mxu0 0.0
          %1315 = vmatprep.subr.mxu0 0.0
          %1316 = vmatpush1.msra.mxu0 0.0
          %1317 = vmatprep.subr.mxu0 0.0
          %1318 = vmatpush1.msra.mxu0 0.0
          %1319 = vmatprep.subr.mxu0 0.0
          %1320 = vmatpush1.msra.mxu0 0.0
          %1321 = vmatprep.subr.mxu0 0.0
          %1322 = vmatpush1.msra.mxu0 0.0
          %1323 = vmatprep.subr.mxu0 0.0
          %1324 = vmatpush1.msra.mxu0 0.0
          %1325 = vmatprep.subr.mxu0 0.0
          %1326 = vmatpush1.msra.mxu0 0.0
          %1327 = vmatprep.subr.mxu0 0.0
          %1328 = vmatpush1.msra.mxu0 0.0
          %1329 = vmatprep.subr.mxu0 0.0
          %1330 = vmatpush1.msra.mxu0 0.0
          %1331 = vmatprep.subr.mxu0 0.0
          %1332 = vmatpush1.msra.mxu0 0.0
          %1333 = vmatprep.subr.mxu0 0.0
          %1334 = vmatpush1.msra.mxu0 0.0
          %1335 = vmatprep.subr.mxu0 0.0
          %1336 = vmatpush1.msra.mxu0 0.0
          %1337 = vmatprep.mubr.f32.mxu0 0.0
          %1338 = vmatmul.mubr.f32.gmra.mrb[0].mxu0 %v1271
          %v1339 = vpop.f32.mrb[0].mxu0
          %v1340 = vadd.f32 %v1266, %v1339
          %v1341 = vpop.f32.mrb[0].mxu0
          %1342 = vdwg.mxu0
          %v1343 = vld [vmem:[%s19] sm:$0x1]
          %v1345 = vlaneseq
          %v1346 = vshrl.u32 %v1345, 7
          %v1347 = vsub.s32 0, %v1346
          %v1348 = vrot.slane %v1343, %v1347
          %v1350 = vadd.f32 %v1340, %v1348
          %v1351 = vld [vmem:[%s21] sm:$0xff]
          %v1352 = vld [vmem:[%s21 + $0x8] sm:$0xff]
          %v1353 = vld [vmem:[%s21 + $0x10] sm:$0xff]
          %v1354 = vld [vmem:[%s21 + $0x18] sm:$0xff]
          %v1355 = vld [vmem:[#allocation10] sm:$0x3]
          %v1356 = vld [vmem:[%s23] sm:$0xff]
          %v1357 = vld [vmem:[%s23 + $0x8] sm:$0xff]
          %v1358 = vld [vmem:[%s23 + $0x10] sm:$0xff]
          %v1359 = vld [vmem:[%s23 + $0x18] sm:$0xff]
          %v1361 = vsel %vm1195, %v1355, 0
          %1363 = vmatprep.subr.mxu0 0.0
          %1364 = vmatpush1.msra.mxu0 %v1356
          %1365 = vmatprep.subr.mxu0 0.0
          %1366 = vmatpush1.msra.mxu0 %v1357
          %1367 = vmatprep.subr.mxu0 0.0
          %1368 = vmatpush1.msra.mxu0 %v1358
          %1369 = vmatprep.subr.mxu0 0.0
          %1370 = vmatpush1.msra.mxu0 %v1359
          %1371 = vmatprep.subr.mxu0 0.0
          %1372 = vmatpush1.msra.mxu0 0.0
          %1373 = vmatprep.subr.mxu0 0.0
          %1374 = vmatpush1.msra.mxu0 0.0
          %1375 = vmatprep.subr.mxu0 0.0
          %1376 = vmatpush1.msra.mxu0 0.0
          %1377 = vmatprep.subr.mxu0 0.0
          %1378 = vmatpush1.msra.mxu0 0.0
          %1379 = vmatprep.subr.mxu0 0.0
          %1380 = vmatpush1.msra.mxu0 0.0
          %1381 = vmatprep.subr.mxu0 0.0
          %1382 = vmatpush1.msra.mxu0 0.0
          %1383 = vmatprep.subr.mxu0 0.0
          %1384 = vmatpush1.msra.mxu0 0.0
          %1385 = vmatprep.subr.mxu0 0.0
          %1386 = vmatpush1.msra.mxu0 0.0
          %1387 = vmatprep.subr.mxu0 0.0
          %1388 = vmatpush1.msra.mxu0 0.0
          %1389 = vmatprep.subr.mxu0 0.0
          %1390 = vmatpush1.msra.mxu0 0.0
          %1391 = vmatprep.subr.mxu0 0.0
          %1392 = vmatpush1.msra.mxu0 0.0
          %1393 = vmatprep.subr.mxu0 0.0
          %1394 = vmatpush1.msra.mxu0 0.0
          %1395 = vmatprep.subr.mxu0 0.0
          %1396 = vmatpush1.msra.mxu0 0.0
          %1397 = vmatprep.subr.mxu0 0.0
          %1398 = vmatpush1.msra.mxu0 0.0
          %1399 = vmatprep.subr.mxu0 0.0
          %1400 = vmatpush1.msra.mxu0 0.0
          %1401 = vmatprep.subr.mxu0 0.0
          %1402 = vmatpush1.msra.mxu0 0.0
          %1403 = vmatprep.subr.mxu0 0.0
          %1404 = vmatpush1.msra.mxu0 0.0
          %1405 = vmatprep.subr.mxu0 0.0
          %1406 = vmatpush1.msra.mxu0 0.0
          %1407 = vmatprep.subr.mxu0 0.0
          %1408 = vmatpush1.msra.mxu0 0.0
          %1409 = vmatprep.subr.mxu0 0.0
          %1410 = vmatpush1.msra.mxu0 0.0
          %1411 = vmatprep.subr.mxu0 0.0
          %1412 = vmatpush1.msra.mxu0 0.0
          %1413 = vmatprep.subr.mxu0 0.0
          %1414 = vmatpush1.msra.mxu0 0.0
          %1415 = vmatprep.subr.mxu0 0.0
          %1416 = vmatpush1.msra.mxu0 0.0
          %1417 = vmatprep.subr.mxu0 0.0
          %1418 = vmatpush1.msra.mxu0 0.0
          %1419 = vmatprep.subr.mxu0 0.0
          %1420 = vmatpush1.msra.mxu0 0.0
          %1421 = vmatprep.subr.mxu0 0.0
          %1422 = vmatpush1.msra.mxu0 0.0
          %1423 = vmatprep.subr.mxu0 0.0
          %1424 = vmatpush1.msra.mxu0 0.0
          %1425 = vmatprep.subr.mxu0 0.0
          %1426 = vmatpush1.msra.mxu0 0.0
          %1427 = vmatprep.mubr.f32.mxu0 0.0
          %1428 = vmatmul.mubr.f32.gmra.mrb[0].mxu0 %v1361
          %v1429 = vpop.f32.mrb[0].mxu0
          %v1430 = vadd.f32 0.0, %v1429
          %v1431 = vpop.f32.mrb[0].mxu0
          %1432 = vdwg.mxu0
          %v1434 = vsel %vm1195, %v1350, 0
          %1436 = vmatprep.subr.mxu0 0.0
          %1437 = vmatpush1.msra.mxu0 %v1351
          %1438 = vmatprep.subr.mxu0 0.0
          %1439 = vmatpush1.msra.mxu0 %v1352
          %1440 = vmatprep.subr.mxu0 0.0
          %1441 = vmatpush1.msra.mxu0 %v1353
          %1442 = vmatprep.subr.mxu0 0.0
          %1443 = vmatpush1.msra.mxu0 %v1354
          %1444 = vmatprep.subr.mxu0 0.0
          %1445 = vmatpush1.msra.mxu0 0.0
          %1446 = vmatprep.subr.mxu0 0.0
          %1447 = vmatpush1.msra.mxu0 0.0
          %1448 = vmatprep.subr.mxu0 0.0
          %1449 = vmatpush1.msra.mxu0 0.0
          %1450 = vmatprep.subr.mxu0 0.0
          %1451 = vmatpush1.msra.mxu0 0.0
          %1452 = vmatprep.subr.mxu0 0.0
          %1453 = vmatpush1.msra.mxu0 0.0
          %1454 = vmatprep.subr.mxu0 0.0
          %1455 = vmatpush1.msra.mxu0 0.0
          %1456 = vmatprep.subr.mxu0 0.0
          %1457 = vmatpush1.msra.mxu0 0.0
          %1458 = vmatprep.subr.mxu0 0.0
          %1459 = vmatpush1.msra.mxu0 0.0
          %1460 = vmatprep.subr.mxu0 0.0
          %1461 = vmatpush1.msra.mxu0 0.0
          %1462 = vmatprep.subr.mxu0 0.0
          %1463 = vmatpush1.msra.mxu0 0.0
          %1464 = vmatprep.subr.mxu0 0.0
          %1465 = vmatpush1.msra.mxu0 0.0
          %1466 = vmatprep.subr.mxu0 0.0
          %1467 = vmatpush1.msra.mxu0 0.0
          %1468 = vmatprep.subr.mxu0 0.0
          %1469 = vmatpush1.msra.mxu0 0.0
          %1470 = vmatprep.subr.mxu0 0.0
          %1471 = vmatpush1.msra.mxu0 0.0
          %1472 = vmatprep.subr.mxu0 0.0
          %1473 = vmatpush1.msra.mxu0 0.0
          %1474 = vmatprep.subr.mxu0 0.0
          %1475 = vmatpush1.msra.mxu0 0.0
          %1476 = vmatprep.subr.mxu0 0.0
          %1477 = vmatpush1.msra.mxu0 0.0
          %1478 = vmatprep.subr.mxu0 0.0
          %1479 = vmatpush1.msra.mxu0 0.0
          %1480 = vmatprep.subr.mxu0 0.0
          %1481 = vmatpush1.msra.mxu0 0.0
          %1482 = vmatprep.subr.mxu0 0.0
          %1483 = vmatpush1.msra.mxu0 0.0
          %1484 = vmatprep.subr.mxu0 0.0
          %1485 = vmatpush1.msra.mxu0 0.0
          %1486 = vmatprep.subr.mxu0 0.0
          %1487 = vmatpush1.msra.mxu0 0.0
          %1488 = vmatprep.subr.mxu0 0.0
          %1489 = vmatpush1.msra.mxu0 0.0
          %1490 = vmatprep.subr.mxu0 0.0
          %1491 = vmatpush1.msra.mxu0 0.0
          %1492 = vmatprep.subr.mxu0 0.0
          %1493 = vmatpush1.msra.mxu0 0.0
          %1494 = vmatprep.subr.mxu0 0.0
          %1495 = vmatpush1.msra.mxu0 0.0
          %1496 = vmatprep.subr.mxu0 0.0
          %1497 = vmatpush1.msra.mxu0 0.0
          %1498 = vmatprep.subr.mxu0 0.0
          %1499 = vmatpush1.msra.mxu0 0.0
          %1500 = vmatprep.mubr.f32.mxu0 0.0
          %1501 = vmatmul.mubr.f32.gmra.mrb[0].mxu0 %v1434
          %v1502 = vpop.f32.mrb[0].mxu0
          %v1503 = vadd.f32 %v1430, %v1502
          %v1504 = vpop.f32.mrb[0].mxu0
          %1505 = vdwg.mxu0
          %v1506 = vld [vmem:[%s25] sm:$0x1]
          %v1508 = vlaneseq
          %v1509 = vshrl.u32 %v1508, 7
          %v1510 = vsub.s32 0, %v1509
          %v1511 = vrot.slane %v1506, %v1510
          %v1513 = vadd.f32 %v1503, %v1511
          %v1514 = vxor.u32 %v1513, 2147483648
          %v1515 = vmul.f32 %v1514, 1.442695
          %v1516 = vpow.pop %v1515
          %v1517 = vadd.f32 %v1516, 1.0
          %v1518 = vrcp.pop %v1517
          %v1519 = vmul.f32 1.0, %v1518
          %v1520 = vtanh.pop %v1513
          %v1521 = vld [vmem:[#allocation12] sm:$0x3]
          %1523 = vrot.lane.b32.xlu0 %v1521, 32
          %v1524 = vpop.permute.xlu0 %1523
          %v1526 = vmul.f32 %v1519, %v1524
          %1528 = vrot.lane.b32.xlu0 %v1520, 64
          %v1529 = vpop.permute.xlu0 %1528
          %v1531 = vmul.f32 %v1519, %v1529
          %1533 = vrot.lane.b32.xlu0 %v1531, 32
          %v1534 = vpop.permute.xlu0 %1533
          %v1536 = vadd.f32 %v1526, %v1534
          %v1537 = vtanh.pop %v1536
          %1539 = vrot.lane.b32.xlu0 %v1537, 64
          %v1540 = vpop.permute.xlu0 %1539
          %v1542 = vmul.f32 %v1519, %v1540
          %1544 = vrot.lane.b32.xlu0 %v1542, 32
          %v1545 = vpop.permute.xlu0 %1544
          %vm1547 = vcmask 254976
          %1548 = vst.msk [vmem:[#allocation14] sm:$0x3] %vm1547, %v1545
          %1550 = vrot.lane.b32.xlu0 %v1536, 96
          %v1551 = vpop.permute.xlu0 %1550
          %1553 = vst.msk [vmem:[#allocation15] sm:$0x3] %vm1547, %v1551
          %v1554 = vld [vmem:[%s27] sm:$0xff]
          %v1555 = vld [vmem:[%s27 + $0x8] sm:$0xff]
          %v1556 = vld [vmem:[%s27 + $0x10] sm:$0xff]
          %v1557 = vld [vmem:[%s27 + $0x18] sm:$0xff]
          %v1558 = vld [vmem:[%s29] sm:$0xff]
          %v1559 = vld [vmem:[%s29 + $0x8] sm:$0xff]
          %v1560 = vld [vmem:[%s29 + $0x10] sm:$0xff]
          %v1561 = vld [vmem:[%s29 + $0x18] sm:$0xff]
          %v1562 = vsel %vm1195, %v1551, 0
          %1564 = vmatprep.subr.mxu0 0.0
          %1565 = vmatpush1.msra.mxu0 %v1558
          %1566 = vmatprep.subr.mxu0 0.0
          %1567 = vmatpush1.msra.mxu0 %v1559
          %1568 = vmatprep.subr.mxu0 0.0
          %1569 = vmatpush1.msra.mxu0 %v1560
          %1570 = vmatprep.subr.mxu0 0.0
          %1571 = vmatpush1.msra.mxu0 %v1561
          %1572 = vmatprep.subr.mxu0 0.0
          %1573 = vmatpush1.msra.mxu0 0.0
          %1574 = vmatprep.subr.mxu0 0.0
          %1575 = vmatpush1.msra.mxu0 0.0
          %1576 = vmatprep.subr.mxu0 0.0
          %1577 = vmatpush1.msra.mxu0 0.0
          %1578 = vmatprep.subr.mxu0 0.0
          %1579 = vmatpush1.msra.mxu0 0.0
          %1580 = vmatprep.subr.mxu0 0.0
          %1581 = vmatpush1.msra.mxu0 0.0
          %1582 = vmatprep.subr.mxu0 0.0
          %1583 = vmatpush1.msra.mxu0 0.0
          %1584 = vmatprep.subr.mxu0 0.0
          %1585 = vmatpush1.msra.mxu0 0.0
          %1586 = vmatprep.subr.mxu0 0.0
          %1587 = vmatpush1.msra.mxu0 0.0
          %1588 = vmatprep.subr.mxu0 0.0
          %1589 = vmatpush1.msra.mxu0 0.0
          %1590 = vmatprep.subr.mxu0 0.0
          %1591 = vmatpush1.msra.mxu0 0.0
          %1592 = vmatprep.subr.mxu0 0.0
          %1593 = vmatpush1.msra.mxu0 0.0
          %1594 = vmatprep.subr.mxu0 0.0
          %1595 = vmatpush1.msra.mxu0 0.0
          %1596 = vmatprep.subr.mxu0 0.0
          %1597 = vmatpush1.msra.mxu0 0.0
          %1598 = vmatprep.subr.mxu0 0.0
          %1599 = vmatpush1.msra.mxu0 0.0
          %1600 = vmatprep.subr.mxu0 0.0
          %1601 = vmatpush1.msra.mxu0 0.0
          %1602 = vmatprep.subr.mxu0 0.0
          %1603 = vmatpush1.msra.mxu0 0.0
          %1604 = vmatprep.subr.mxu0 0.0
          %1605 = vmatpush1.msra.mxu0 0.0
          %1606 = vmatprep.subr.mxu0 0.0
          %1607 = vmatpush1.msra.mxu0 0.0
          %1608 = vmatprep.subr.mxu0 0.0
          %1609 = vmatpush1.msra.mxu0 0.0
          %1610 = vmatprep.subr.mxu0 0.0
          %1611 = vmatpush1.msra.mxu0 0.0
          %1612 = vmatprep.subr.mxu0 0.0
          %1613 = vmatpush1.msra.mxu0 0.0
          %1614 = vmatprep.subr.mxu0 0.0
          %1615 = vmatpush1.msra.mxu0 0.0
          %1616 = vmatprep.subr.mxu0 0.0
          %1617 = vmatpush1.msra.mxu0 0.0
          %1618 = vmatprep.subr.mxu0 0.0
          %1619 = vmatpush1.msra.mxu0 0.0
          %1620 = vmatprep.subr.mxu0 0.0
          %1621 = vmatpush1.msra.mxu0 0.0
          %1622 = vmatprep.subr.mxu0 0.0
          %1623 = vmatpush1.msra.mxu0 0.0
          %1624 = vmatprep.subr.mxu0 0.0
          %1625 = vmatpush1.msra.mxu0 0.0
          %1626 = vmatprep.subr.mxu0 0.0
          %1627 = vmatpush1.msra.mxu0 0.0
          %1628 = vmatprep.mubr.f32.mxu0 0.0
          %1629 = vmatmul.mubr.f32.gmra.mrb[0].mxu0 %v1562
          %v1630 = vpop.f32.mrb[0].mxu0
          %v1631 = vadd.f32 0.0, %v1630
          %v1632 = vpop.f32.mrb[0].mxu0
          %1633 = vdwg.mxu0
          %v1634 = vsel %vm1195, %v1545, 0
          %1636 = vmatprep.subr.mxu0 0.0
          %1637 = vmatpush1.msra.mxu0 %v1554
          %1638 = vmatprep.subr.mxu0 0.0
          %1639 = vmatpush1.msra.mxu0 %v1555
          %1640 = vmatprep.subr.mxu0 0.0
          %1641 = vmatpush1.msra.mxu0 %v1556
          %1642 = vmatprep.subr.mxu0 0.0
          %1643 = vmatpush1.msra.mxu0 %v1557
          %1644 = vmatprep.subr.mxu0 0.0
          %1645 = vmatpush1.msra.mxu0 0.0
          %1646 = vmatprep.subr.mxu0 0.0
          %1647 = vmatpush1.msra.mxu0 0.0
          %1648 = vmatprep.subr.mxu0 0.0
          %1649 = vmatpush1.msra.mxu0 0.0
          %1650 = vmatprep.subr.mxu0 0.0
          %1651 = vmatpush1.msra.mxu0 0.0
          %1652 = vmatprep.subr.mxu0 0.0
          %1653 = vmatpush1.msra.mxu0 0.0
          %1654 = vmatprep.subr.mxu0 0.0
          %1655 = vmatpush1.msra.mxu0 0.0
          %1656 = vmatprep.subr.mxu0 0.0
          %1657 = vmatpush1.msra.mxu0 0.0
          %1658 = vmatprep.subr.mxu0 0.0
          %1659 = vmatpush1.msra.mxu0 0.0
          %1660 = vmatprep.subr.mxu0 0.0
          %1661 = vmatpush1.msra.mxu0 0.0
          %1662 = vmatprep.subr.mxu0 0.0
          %1663 = vmatpush1.msra.mxu0 0.0
          %1664 = vmatprep.subr.mxu0 0.0
          %1665 = vmatpush1.msra.mxu0 0.0
          %1666 = vmatprep.subr.mxu0 0.0
          %1667 = vmatpush1.msra.mxu0 0.0
          %1668 = vmatprep.subr.mxu0 0.0
          %1669 = vmatpush1.msra.mxu0 0.0
          %1670 = vmatprep.subr.mxu0 0.0
          %1671 = vmatpush1.msra.mxu0 0.0
          %1672 = vmatprep.subr.mxu0 0.0
          %1673 = vmatpush1.msra.mxu0 0.0
          %1674 = vmatprep.subr.mxu0 0.0
          %1675 = vmatpush1.msra.mxu0 0.0
          %1676 = vmatprep.subr.mxu0 0.0
          %1677 = vmatpush1.msra.mxu0 0.0
          %1678 = vmatprep.subr.mxu0 0.0
          %1679 = vmatpush1.msra.mxu0 0.0
          %1680 = vmatprep.subr.mxu0 0.0
          %1681 = vmatpush1.msra.mxu0 0.0
          %1682 = vmatprep.subr.mxu0 0.0
          %1683 = vmatpush1.msra.mxu0 0.0
          %1684 = vmatprep.subr.mxu0 0.0
          %1685 = vmatpush1.msra.mxu0 0.0
          %1686 = vmatprep.subr.mxu0 0.0
          %1687 = vmatpush1.msra.mxu0 0.0
          %1688 = vmatprep.subr.mxu0 0.0
          %1689 = vmatpush1.msra.mxu0 0.0
          %1690 = vmatprep.subr.mxu0 0.0
          %1691 = vmatpush1.msra.mxu0 0.0
          %1692 = vmatprep.subr.mxu0 0.0
          %1693 = vmatpush1.msra.mxu0 0.0
          %1694 = vmatprep.subr.mxu0 0.0
          %1695 = vmatpush1.msra.mxu0 0.0
          %1696 = vmatprep.subr.mxu0 0.0
          %1697 = vmatpush1.msra.mxu0 0.0
          %1698 = vmatprep.subr.mxu0 0.0
          %1699 = vmatpush1.msra.mxu0 0.0
          %1700 = vmatprep.mubr.f32.mxu0 0.0
          %1701 = vmatmul.mubr.f32.gmra.mrb[0].mxu0 %v1634
          %v1702 = vpop.f32.mrb[0].mxu0
          %v1703 = vadd.f32 %v1631, %v1702
          %v1704 = vpop.f32.mrb[0].mxu0
          %1705 = vdwg.mxu0
          %v1706 = vld [vmem:[%s31] sm:$0x1]
          %v1708 = vlaneseq
          %v1709 = vshrl.u32 %v1708, 7
          %v1710 = vsub.s32 0, %v1709
          %v1711 = vrot.slane %v1706, %v1710
          %v1713 = vadd.f32 %v1703, %v1711
          %v1714 = vld [vmem:[%s13] sm:$0x3]
          %v1715 = vld [vmem:[%s7] sm:$0xff]
          %v1716 = vld [vmem:[%s7 + $0x8] sm:$0xff]
          %v1719 = vunpack.c.l.s4 1966171168
          %v1720 = vunpack.c.0.s8 %v1719
          %v1721 = vlaneseq
          %v1722 = vshrl.u32 %v1721, 7
          %v1723 = vsub.s32 %v1720, %v1722
          %v1724 = vrot.slane %v1713, %v1723
          %v1725 = vcombine.high %v1724, %v1724
          %v1727 = vunpack.c.l.s4 1966171168
          %v1728 = vunpack.c.0.s8 %v1727
          %v1729 = vlaneseq
          %v1730 = vshrl.u32 %v1729, 7
          %v1731 = vsub.s32 %v1728, %v1730
          %v1732 = vrot.slane %v1724, %v1731
          %v1734 = vunpack.c.l.s4 1966171168
          %v1735 = vunpack.c.0.s8 %v1734
          %v1736 = vlaneseq
          %v1737 = vshrl.u32 %v1736, 7
          %v1738 = vsub.s32 %v1735, %v1737
          %v1739 = vrot.slane %v1725, %v1738
          %v1740 = vlaneseq
          %v1741 = vshrl.u32 %v1740, 7
          %v1742 = vsub.s32 0, %v1741
          %v1743 = vrot.slane %v1732, %v1742
          %v1744 = vlaneseq
          %v1745 = vshrl.u32 %v1744, 7
          %v1746 = vsub.s32 0, %v1745
          %v1747 = vrot.slane %v1739, %v1746
          %v1750 = vadd.f32 %v1715, %v1743
          %v1751 = vadd.f32 %v1716, %v1747
          %v1752 = vlaneseq
          %v1753 = vshrl.u32 %v1752, 7
          %v1754 = vsub.s32 0, %v1753
          %v1755 = vrot.slane %v1714, %v1754
          %1757 = vbcast.lane.b32.xlu0 %v1755, 256
          %v1758 = vpop.permute.xlu0 %1757
          %v1759 = vlaneseq
          %v1760 = vshrl.u32 %v1759, 7
          %v1761 = vsub.s32 1, %v1760
          %v1762 = vrot.slane %v1714, %v1761
          %1764 = vbcast.lane.b32.xlu0 %v1762, 256
          %v1765 = vpop.permute.xlu0 %1764
          %v1766 = vld [vmem:[%s33] sm:$0x1]
          %v1768 = vlaneseq
          %v1769 = vshrl.u32 %v1768, 7
          %v1770 = vsub.s32 0, %v1769
          %v1771 = vrot.slane %v1766, %v1770
          %v1773 = vmul.f32 %v1758, %v1771
          %v1774 = vmul.f32 %v1765, %v1771
          %v1775 = vadd.f32 %v1750, %v1773
          %v1776 = vadd.f32 %v1751, %v1774
          %v1777 = vtanh.pop %v1775
          %v1778 = vtanh.pop %v1776
          %v1779 = vld [vmem:[%s35] sm:$0x1]
          %v1781 = vlaneseq
          %v1782 = vshrl.u32 %v1781, 7
          %v1783 = vsub.s32 0, %v1782
          %v1784 = vrot.slane %v1779, %v1783
          %v1786 = vmul.f32 %v1777, %v1784
          %v1787 = vmul.f32 %v1778, %v1784
          %v1788 = vsel %vm1269, %v1786, 0.0
          %1789 = vadd.xlane.f32.xlu0 %v1788
          %v1790 = vpop.xlane.xlu0 %1789
          %v1791 = vsel %vm1269, %v1787, 0.0
          %1792 = vadd.xlane.f32.xlu0 %v1791
          %v1793 = vpop.xlane.xlu0 %1792
          %v1796 = vlaneseq
          %v1797 = vand.u32 %v1796, 127
          %v1798 = vlaneseq
          %v1799 = vshrl.u32 %v1798, 7
          %v1800 = vsub.s32 %v1797, %v1799
          %v1801 = vrot.slane %v1790, %v1800
          %v1802 = vlaneseq
          %v1803 = vshrl.u32 %v1802, 7
          %v1804 = vsub.s32 %v1797, %v1803
          %v1805 = vrot.slane %v1793, %v1804
          %vm1806 = vcmask 1041409
          %v1807 = vsel %vm1806, %v1805, %v1801
          %vm1809 = vcmask 58368
          %v1810 = vsel %vm1809, %v1807, -inf
          %1811 = vmax.xlane.f32.xlu0 %v1810
          %v1812 = vpop.xlane.xlu0 %1811
          %v1814 = vlaneseq
          %v1815 = vshrl.u32 %v1814, 7
          %v1816 = vsub.s32 0, %v1815
          %v1817 = vrot.slane %v1812, %v1816
          %v1818 = vlaneseq
          %v1819 = vshrl.u32 %v1818, 7
          %v1820 = vsub.s32 1, %v1819
          %v1821 = vrot.slane %v1812, %v1820
          %v1824 = vsub.f32 %v1790, %v1817
          %v1825 = vsub.f32 %v1793, %v1821
          %v1826 = vmul.f32 %v1824, 1.442695
          %v1827 = vpow.pop %v1826
          %v1828 = vmul.f32 %v1825, 1.442695
          %v1829 = vpow.pop %v1828
          %1832 = vset.pattern.permute.xlu0 0
          %1833 = vperm.xlu0 %1832, %v1827
          %v1834 = vpop.permute.xlu0 %1833
          %1835 = vset.pattern.permute.xlu0 0
          %1836 = vperm.xlu0 %1835, %v1829
          %v1837 = vpop.permute.xlu0 %1836
          %v1838 = vlaneseq
          %v1839 = vshrl.u32 %v1838, 7
          %v1840 = vsub.s32 %v1797, %v1839
          %v1841 = vrot.slane %v1834, %v1840
          %v1842 = vlaneseq
          %v1843 = vshrl.u32 %v1842, 7
          %v1844 = vsub.s32 %v1797, %v1843
          %v1845 = vrot.slane %v1837, %v1844
          %v1846 = vsel %vm1806, %v1845, %v1841
          %v1848 = vsel %vm1809, %v1846, 0.0
          %1849 = vadd.xlane.f32.xlu0 %v1848
          %v1850 = vpop.xlane.xlu0 %1849
          %v1852 = vlaneseq
          %v1853 = vshrl.u32 %v1852, 7
          %v1854 = vsub.s32 0, %v1853
          %v1855 = vrot.slane %v1850, %v1854
          %v1856 = vlaneseq
          %v1857 = vshrl.u32 %v1856, 7
          %v1858 = vsub.s32 1, %v1857
          %v1859 = vrot.slane %v1850, %v1858
          %v1862 = vrcp.pop %v1855
          %v1863 = vmul.f32 %v1827, %v1862
          %v1864 = vrcp.pop %v1859
          %v1865 = vmul.f32 %v1829, %v1864
          %v1866 = vld [vmem:[%s9] sm:$0x3]
          %v1867 = vsub.f32 1.0, %v1866
          %v1869 = vlaneseq
          %v1870 = vshrl.u32 %v1869, 7
          %v1871 = vsub.s32 0, %v1870
          %v1872 = vrot.slane %v1867, %v1871
          %1874 = vbcast.lane.b32.xlu0 %v1872, 256
          %v1875 = vpop.permute.xlu0 %1874
          %v1876 = vlaneseq
          %v1877 = vshrl.u32 %v1876, 7
          %v1878 = vsub.s32 1, %v1877
          %v1879 = vrot.slane %v1867, %v1878
          %1881 = vbcast.lane.b32.xlu0 %v1879, 256
          %v1882 = vpop.permute.xlu0 %1881
          %v1885 = vmul.f32 %v1863, %v1875
          %v1886 = vmul.f32 %v1865, %v1882
          %1889 = vset.pattern.permute.xlu0 0
          %1890 = vperm.xlu0 %1889, %v1885
          %v1891 = vpop.permute.xlu0 %1890
          %1892 = vset.pattern.permute.xlu0 0
          %1893 = vperm.xlu0 %1892, %v1886
          %v1894 = vpop.permute.xlu0 %1893
          %v1895 = vlaneseq
          %v1896 = vshrl.u32 %v1895, 7
          %v1897 = vsub.s32 %v1797, %v1896
          %v1898 = vrot.slane %v1891, %v1897
          %v1899 = vlaneseq
          %v1900 = vshrl.u32 %v1899, 7
          %v1901 = vsub.s32 %v1797, %v1900
          %v1902 = vrot.slane %v1894, %v1901
          %v1903 = vsel %vm1806, %v1902, %v1898
          %v1905 = vsel %vm1809, %v1903, 0.0
          %1906 = vadd.xlane.f32.xlu0 %v1905
          %v1907 = vpop.xlane.xlu0 %1906
          %v1909 = vlaneseq
          %v1910 = vshrl.u32 %v1909, 7
          %v1911 = vsub.s32 0, %v1910
          %v1912 = vrot.slane %v1907, %v1911
          %v1913 = vlaneseq
          %v1914 = vshrl.u32 %v1913, 7
          %v1915 = vsub.s32 1, %v1914
          %v1916 = vrot.slane %v1907, %v1915
          %v1919 = vrcp.pop %v1912
          %v1920 = vmul.f32 %v1885, %v1919
          %v1921 = vrcp.pop %v1916
          %v1922 = vmul.f32 %v1886, %v1921
          %1925 = vset.pattern.permute.xlu0 0
          %1926 = vperm.xlu0 %1925, %v1920
          %v1927 = vpop.permute.xlu0 %1926
          %1928 = vset.pattern.permute.xlu0 0
          %1929 = vperm.xlu0 %1928, %v1922
          %v1930 = vpop.permute.xlu0 %1929
          %v1931 = vlaneseq
          %v1932 = vshrl.u32 %v1931, 7
          %v1933 = vsub.s32 %v1797, %v1932
          %v1934 = vrot.slane %v1927, %v1933
          %v1935 = vlaneseq
          %v1936 = vshrl.u32 %v1935, 7
          %v1937 = vsub.s32 %v1797, %v1936
          %v1938 = vrot.slane %v1930, %v1937
          %v1939 = vsel %vm1806, %v1938, %v1934
          %1941 = vst.msk [vmem:[#allocation17] sm:$0x3] %vm1809, %v1939
          %v1942 = vadd.f32 %v1714, %v1939
          %1943 = vst.msk [vmem:[#allocation18] sm:$0x3] %vm1809, %v1942
          %v1944 = vld [vmem:[%s37] sm:$0xff]
          %v1945 = vld [vmem:[%s37 + $0x8] sm:$0xff]
          %v1946 = vld [vmem:[%s37 + $0x10] sm:$0xff]
          %v1947 = vld [vmem:[%s37 + $0x18] sm:$0xff]
          %v1948 = vld [vmem:[%s37 + $0x20] sm:$0xff]
          %v1949 = vld [vmem:[%s37 + $0x28] sm:$0xff]
          %v1950 = vld [vmem:[%s37 + $0x30] sm:$0xff]
          %v1951 = vld [vmem:[%s37 + $0x38] sm:$0xff]
          %v1952 = vld [vmem:[%s39] sm:$0xff]
          %v1953 = vld [vmem:[%s39 + $0x8] sm:$0xff]
          %v1954 = vld [vmem:[%s39 + $0x10] sm:$0xff]
          %v1955 = vld [vmem:[%s39 + $0x18] sm:$0xff]
          %1956 = vmatprep.subr.mxu0 0.0
          %1957 = vmatpush1.msra.mxu0 %v1952
          %1958 = vmatprep.subr.mxu0 0.0
          %1959 = vmatpush1.msra.mxu0 %v1953
          %1960 = vmatprep.subr.mxu0 0.0
          %1961 = vmatpush1.msra.mxu0 %v1954
          %1962 = vmatprep.subr.mxu0 0.0
          %1963 = vmatpush1.msra.mxu0 %v1955
          %1964 = vmatprep.subr.mxu0 0.0
          %1965 = vmatpush1.msra.mxu0 0.0
          %1966 = vmatprep.subr.mxu0 0.0
          %1967 = vmatpush1.msra.mxu0 0.0
          %1968 = vmatprep.subr.mxu0 0.0
          %1969 = vmatpush1.msra.mxu0 0.0
          %1970 = vmatprep.subr.mxu0 0.0
          %1971 = vmatpush1.msra.mxu0 0.0
          %1972 = vmatprep.subr.mxu0 0.0
          %1973 = vmatpush1.msra.mxu0 0.0
          %1974 = vmatprep.subr.mxu0 0.0
          %1975 = vmatpush1.msra.mxu0 0.0
          %1976 = vmatprep.subr.mxu0 0.0
          %1977 = vmatpush1.msra.mxu0 0.0
          %1978 = vmatprep.subr.mxu0 0.0
          %1979 = vmatpush1.msra.mxu0 0.0
          %1980 = vmatprep.subr.mxu0 0.0
          %1981 = vmatpush1.msra.mxu0 0.0
          %1982 = vmatprep.subr.mxu0 0.0
          %1983 = vmatpush1.msra.mxu0 0.0
          %1984 = vmatprep.subr.mxu0 0.0
          %1985 = vmatpush1.msra.mxu0 0.0
          %1986 = vmatprep.subr.mxu0 0.0
          %1987 = vmatpush1.msra.mxu0 0.0
          %1988 = vmatprep.subr.mxu0 0.0
          %1989 = vmatpush1.msra.mxu0 0.0
          %1990 = vmatprep.subr.mxu0 0.0
          %1991 = vmatpush1.msra.mxu0 0.0
          %1992 = vmatprep.subr.mxu0 0.0
          %1993 = vmatpush1.msra.mxu0 0.0
          %1994 = vmatprep.subr.mxu0 0.0
          %1995 = vmatpush1.msra.mxu0 0.0
          %1996 = vmatprep.subr.mxu0 0.0
          %1997 = vmatpush1.msra.mxu0 0.0
          %1998 = vmatprep.subr.mxu0 0.0
          %1999 = vmatpush1.msra.mxu0 0.0
          %2000 = vmatprep.subr.mxu0 0.0
          %2001 = vmatpush1.msra.mxu0 0.0
          %2002 = vmatprep.subr.mxu0 0.0
          %2003 = vmatpush1.msra.mxu0 0.0
          %2004 = vmatprep.subr.mxu0 0.0
          %2005 = vmatpush1.msra.mxu0 0.0
          %2006 = vmatprep.subr.mxu0 0.0
          %2007 = vmatpush1.msra.mxu0 0.0
          %2008 = vmatprep.subr.mxu0 0.0
          %2009 = vmatpush1.msra.mxu0 0.0
          %2010 = vmatprep.subr.mxu0 0.0
          %2011 = vmatpush1.msra.mxu0 0.0
          %2012 = vmatprep.subr.mxu0 0.0
          %2013 = vmatpush1.msra.mxu0 0.0
          %2014 = vmatprep.subr.mxu0 0.0
          %2015 = vmatpush1.msra.mxu0 0.0
          %2016 = vmatprep.subr.mxu0 0.0
          %2017 = vmatpush1.msra.mxu0 0.0
          %2018 = vmatprep.subr.mxu0 0.0
          %2019 = vmatpush1.msra.mxu0 0.0
          %2020 = vmatprep.mubr.f32.mxu0 0.0
          %2021 = vmatmul.mubr.f32.gmra.mrb[0].mxu0 %v1634
          %v2022 = vpop.f32.mrb[0].mxu0
          %v2023 = vadd.f32 0.0, %v2022
          %v2024 = vpop.f32.mrb[0].mxu0
          %2025 = vdwg.mxu0
          %2026 = vmatprep.subr.mxu0 0.0
          %2027 = vmatpush1.msra.mxu0 %v1944
          %2028 = vmatprep.subr.mxu0 0.0
          %2029 = vmatpush1.msra.mxu0 %v1945
          %2030 = vmatprep.subr.mxu0 0.0
          %2031 = vmatpush1.msra.mxu0 %v1946
          %2032 = vmatprep.subr.mxu0 0.0
          %2033 = vmatpush1.msra.mxu0 %v1947
          %2034 = vmatprep.subr.mxu0 0.0
          %2035 = vmatpush1.msra.mxu0 %v1948
          %2036 = vmatprep.subr.mxu0 0.0
          %2037 = vmatpush1.msra.mxu0 %v1949
          %2038 = vmatprep.subr.mxu0 0.0
          %2039 = vmatpush1.msra.mxu0 %v1950
          %2040 = vmatprep.subr.mxu0 0.0
          %2041 = vmatpush1.msra.mxu0 %v1951
          %2042 = vmatprep.subr.mxu0 0.0
          %2043 = vmatpush1.msra.mxu0 0.0
          %2044 = vmatprep.subr.mxu0 0.0
          %2045 = vmatpush1.msra.mxu0 0.0
          %2046 = vmatprep.subr.mxu0 0.0
          %2047 = vmatpush1.msra.mxu0 0.0
          %2048 = vmatprep.subr.mxu0 0.0
          %2049 = vmatpush1.msra.mxu0 0.0
          %2050 = vmatprep.subr.mxu0 0.0
          %2051 = vmatpush1.msra.mxu0 0.0
          %2052 = vmatprep.subr.mxu0 0.0
          %2053 = vmatpush1.msra.mxu0 0.0
          %2054 = vmatprep.subr.mxu0 0.0
          %2055 = vmatpush1.msra.mxu0 0.0
          %2056 = vmatprep.subr.mxu0 0.0
          %2057 = vmatpush1.msra.mxu0 0.0
          %2058 = vmatprep.subr.mxu0 0.0
          %2059 = vmatpush1.msra.mxu0 0.0
          %2060 = vmatprep.subr.mxu0 0.0
          %2061 = vmatpush1.msra.mxu0 0.0
          %2062 = vmatprep.subr.mxu0 0.0
          %2063 = vmatpush1.msra.mxu0 0.0
          %2064 = vmatprep.subr.mxu0 0.0
          %2065 = vmatpush1.msra.mxu0 0.0
          %2066 = vmatprep.subr.mxu0 0.0
          %2067 = vmatpush1.msra.mxu0 0.0
          %2068 = vmatprep.subr.mxu0 0.0
          %2069 = vmatpush1.msra.mxu0 0.0
          %2070 = vmatprep.subr.mxu0 0.0
          %2071 = vmatpush1.msra.mxu0 0.0
          %2072 = vmatprep.subr.mxu0 0.0
          %2073 = vmatpush1.msra.mxu0 0.0
          %2074 = vmatprep.subr.mxu0 0.0
          %2075 = vmatpush1.msra.mxu0 0.0
          %2076 = vmatprep.subr.mxu0 0.0
          %2077 = vmatpush1.msra.mxu0 0.0
          %2078 = vmatprep.subr.mxu0 0.0
          %2079 = vmatpush1.msra.mxu0 0.0
          %2080 = vmatprep.subr.mxu0 0.0
          %2081 = vmatpush1.msra.mxu0 0.0
          %2082 = vmatprep.subr.mxu0 0.0
          %2083 = vmatpush1.msra.mxu0 0.0
          %2084 = vmatprep.subr.mxu0 0.0
          %2085 = vmatpush1.msra.mxu0 0.0
          %2086 = vmatprep.subr.mxu0 0.0
          %2087 = vmatpush1.msra.mxu0 0.0
          %2088 = vmatprep.subr.mxu0 0.0
          %2089 = vmatpush1.msra.mxu0 0.0
          %2090 = vmatprep.mubr.f32.mxu0 0.0
          %2091 = vmatmul.mubr.f32.gmra.mrb[0].mxu0 %v1271
          %v2092 = vpop.f32.mrb[0].mxu0
          %v2093 = vadd.f32 %v2023, %v2092
          %v2094 = vpop.f32.mrb[0].mxu0
          %2095 = vdwg.mxu0
          %v2096 = vld [vmem:[%s41] sm:$0xff]
          %v2097 = vld [vmem:[%s41 + $0x8] sm:$0xff]
          %v2098 = vld [vmem:[%s41 + $0x10] sm:$0xff]
          %v2099 = vld [vmem:[%s41 + $0x18] sm:$0xff]
          %2100 = vmatprep.subr.mxu0 0.0
          %2101 = vmatpush1.msra.mxu0 %v2096
          %2102 = vmatprep.subr.mxu0 0.0
          %2103 = vmatpush1.msra.mxu0 %v2097
          %2104 = vmatprep.subr.mxu0 0.0
          %2105 = vmatpush1.msra.mxu0 %v2098
          %2106 = vmatprep.subr.mxu0 0.0
          %2107 = vmatpush1.msra.mxu0 %v2099
          %2108 = vmatprep.subr.mxu0 0.0
          %2109 = vmatpush1.msra.mxu0 0.0
          %2110 = vmatprep.subr.mxu0 0.0
          %2111 = vmatpush1.msra.mxu0 0.0
          %2112 = vmatprep.subr.mxu0 0.0
          %2113 = vmatpush1.msra.mxu0 0.0
          %2114 = vmatprep.subr.mxu0 0.0
          %2115 = vmatpush1.msra.mxu0 0.0
          %2116 = vmatprep.subr.mxu0 0.0
          %2117 = vmatpush1.msra.mxu0 0.0
          %2118 = vmatprep.subr.mxu0 0.0
          %2119 = vmatpush1.msra.mxu0 0.0
          %2120 = vmatprep.subr.mxu0 0.0
          %2121 = vmatpush1.msra.mxu0 0.0
          %2122 = vmatprep.subr.mxu0 0.0
          %2123 = vmatpush1.msra.mxu0 0.0
          %2124 = vmatprep.subr.mxu0 0.0
          %2125 = vmatpush1.msra.mxu0 0.0
          %2126 = vmatprep.subr.mxu0 0.0
          %2127 = vmatpush1.msra.mxu0 0.0
          %2128 = vmatprep.subr.mxu0 0.0
          %2129 = vmatpush1.msra.mxu0 0.0
          %2130 = vmatprep.subr.mxu0 0.0
          %2131 = vmatpush1.msra.mxu0 0.0
          %2132 = vmatprep.subr.mxu0 0.0
          %2133 = vmatpush1.msra.mxu0 0.0
          %2134 = vmatprep.subr.mxu0 0.0
          %2135 = vmatpush1.msra.mxu0 0.0
          %2136 = vmatprep.subr.mxu0 0.0
          %2137 = vmatpush1.msra.mxu0 0.0
          %2138 = vmatprep.subr.mxu0 0.0
          %2139 = vmatpush1.msra.mxu0 0.0
          %2140 = vmatprep.subr.mxu0 0.0
          %2141 = vmatpush1.msra.mxu0 0.0
          %2142 = vmatprep.subr.mxu0 0.0
          %2143 = vmatpush1.msra.mxu0 0.0
          %2144 = vmatprep.subr.mxu0 0.0
          %2145 = vmatpush1.msra.mxu0 0.0
          %2146 = vmatprep.subr.mxu0 0.0
          %2147 = vmatpush1.msra.mxu0 0.0
          %2148 = vmatprep.subr.mxu0 0.0
          %2149 = vmatpush1.msra.mxu0 0.0
          %2150 = vmatprep.subr.mxu0 0.0
          %2151 = vmatpush1.msra.mxu0 0.0
          %2152 = vmatprep.subr.mxu0 0.0
          %2153 = vmatpush1.msra.mxu0 0.0
          %2154 = vmatprep.subr.mxu0 0.0
          %2155 = vmatpush1.msra.mxu0 0.0
          %2156 = vmatprep.subr.mxu0 0.0
          %2157 = vmatpush1.msra.mxu0 0.0
          %2158 = vmatprep.subr.mxu0 0.0
          %2159 = vmatpush1.msra.mxu0 0.0
          %2160 = vmatprep.subr.mxu0 0.0
          %2161 = vmatpush1.msra.mxu0 0.0
          %2162 = vmatprep.subr.mxu0 0.0
          %2163 = vmatpush1.msra.mxu0 0.0
          %2164 = vmatprep.mubr.f32.mxu0 0.0
          %2165 = vmatmul.mubr.f32.gmra.mrb[0].mxu0 %v1562
          %v2166 = vpop.f32.mrb[0].mxu0
          %v2167 = vadd.f32 0.0, %v2166
          %v2168 = vpop.f32.mrb[0].mxu0
          %2169 = vdwg.mxu0
          %v2170 = vadd.f32 %v2093, %v2167
          %v2171 = vld [vmem:[%s43] sm:$0xff]
          %v2172 = vld [vmem:[%s43 + $0x8] sm:$0xff]
          %v2173 = vld [vmem:[%s43 + $0x10] sm:$0xff]
          %v2174 = vld [vmem:[%s43 + $0x18] sm:$0xff]
          %2175 = vmatprep.subr.mxu0 0.0
          %2176 = vmatpush1.msra.mxu0 %v2171
          %2177 = vmatprep.subr.mxu0 0.0
          %2178 = vmatpush1.msra.mxu0 %v2172
          %2179 = vmatprep.subr.mxu0 0.0
          %2180 = vmatpush1.msra.mxu0 %v2173
          %2181 = vmatprep.subr.mxu0 0.0
          %2182 = vmatpush1.msra.mxu0 %v2174
          %2183 = vmatprep.subr.mxu0 0.0
          %2184 = vmatpush1.msra.mxu0 0.0
          %2185 = vmatprep.subr.mxu0 0.0
          %2186 = vmatpush1.msra.mxu0 0.0
          %2187 = vmatprep.subr.mxu0 0.0
          %2188 = vmatpush1.msra.mxu0 0.0
          %2189 = vmatprep.subr.mxu0 0.0
          %2190 = vmatpush1.msra.mxu0 0.0
          %2191 = vmatprep.subr.mxu0 0.0
          %2192 = vmatpush1.msra.mxu0 0.0
          %2193 = vmatprep.subr.mxu0 0.0
          %2194 = vmatpush1.msra.mxu0 0.0
          %2195 = vmatprep.subr.mxu0 0.0
          %2196 = vmatpush1.msra.mxu0 0.0
          %2197 = vmatprep.subr.mxu0 0.0
          %2198 = vmatpush1.msra.mxu0 0.0
          %2199 = vmatprep.subr.mxu0 0.0
          %2200 = vmatpush1.msra.mxu0 0.0
          %2201 = vmatprep.subr.mxu0 0.0
          %2202 = vmatpush1.msra.mxu0 0.0
          %2203 = vmatprep.subr.mxu0 0.0
          %2204 = vmatpush1.msra.mxu0 0.0
          %2205 = vmatprep.subr.mxu0 0.0
          %2206 = vmatpush1.msra.mxu0 0.0
          %2207 = vmatprep.subr.mxu0 0.0
          %2208 = vmatpush1.msra.mxu0 0.0
          %2209 = vmatprep.subr.mxu0 0.0
          %2210 = vmatpush1.msra.mxu0 0.0
          %2211 = vmatprep.subr.mxu0 0.0
          %2212 = vmatpush1.msra.mxu0 0.0
          %2213 = vmatprep.subr.mxu0 0.0
          %2214 = vmatpush1.msra.mxu0 0.0
          %2215 = vmatprep.subr.mxu0 0.0
          %2216 = vmatpush1.msra.mxu0 0.0
          %2217 = vmatprep.subr.mxu0 0.0
          %2218 = vmatpush1.msra.mxu0 0.0
          %2219 = vmatprep.subr.mxu0 0.0
          %2220 = vmatpush1.msra.mxu0 0.0
          %2221 = vmatprep.subr.mxu0 0.0
          %2222 = vmatpush1.msra.mxu0 0.0
          %2223 = vmatprep.subr.mxu0 0.0
          %2224 = vmatpush1.msra.mxu0 0.0
          %2225 = vmatprep.subr.mxu0 0.0
          %2226 = vmatpush1.msra.mxu0 0.0
          %2227 = vmatprep.subr.mxu0 0.0
          %2228 = vmatpush1.msra.mxu0 0.0
          %2229 = vmatprep.subr.mxu0 0.0
          %2230 = vmatpush1.msra.mxu0 0.0
          %2231 = vmatprep.subr.mxu0 0.0
          %2232 = vmatpush1.msra.mxu0 0.0
          %2233 = vmatprep.subr.mxu0 0.0
          %2234 = vmatpush1.msra.mxu0 0.0
          %2235 = vmatprep.subr.mxu0 0.0
          %2236 = vmatpush1.msra.mxu0 0.0
          %2237 = vmatprep.subr.mxu0 0.0
          %2238 = vmatpush1.msra.mxu0 0.0
          %2239 = vmatprep.mubr.f32.mxu0 0.0
          %2240 = vmatmul.mubr.f32.gmra.mrb[0].mxu0 %v1434
          %v2241 = vpop.f32.mrb[0].mxu0
          %v2242 = vadd.f32 0.0, %v2241
          %v2243 = vpop.f32.mrb[0].mxu0
          %2244 = vdwg.mxu0
          %v2245 = vadd.f32 %v2170, %v2242
          %v2246 = vld [vmem:[#allocation6] sm:$0x1]
          %v2248 = vlaneseq
          %v2249 = vshrl.u32 %v2248, 7
          %v2250 = vsub.s32 0, %v2249
          %v2251 = vrot.slane %v2246, %v2250
          %v2253 = vadd.f32 %v2245, %v2251
          %v2254 = vxor.u32 %v2253, 2147483648
          %v2255 = vmul.f32 %v2254, 1.442695
          %v2256 = vpow.pop %v2255
          %v2257 = vadd.f32 %v2256, 1.0
          %v2258 = vrcp.pop %v2257
          %v2259 = vmul.f32 1.0, %v2258
          %vm2260 = vcmask 1024
          %2261 = vst.msk [vmem:[%s63] sm:$0x3] %vm2260, %v2259
          %2262 = vst.msk [vmem:[#allocation3] sm:$0x3] %vm2260, %v2259
          %v2263 = vld [vmem:[%s47] sm:$0xff]
          %v2264 = vld [vmem:[%s47 + $0x8] sm:$0xff]
          %v2265 = vld [vmem:[%s47 + $0x10] sm:$0xff]
          %v2266 = vld [vmem:[%s47 + $0x18] sm:$0xff]
          %v2267 = vld [vmem:[%s49] sm:$0xff]
          %v2268 = vld [vmem:[%s49 + $0x8] sm:$0xff]
          %v2269 = vld [vmem:[%s49 + $0x10] sm:$0xff]
          %v2270 = vld [vmem:[%s49 + $0x18] sm:$0xff]
          %v2271 = vld [vmem:[%s49 + $0x20] sm:$0xff]
          %v2272 = vld [vmem:[%s49 + $0x28] sm:$0xff]
          %v2273 = vld [vmem:[%s49 + $0x30] sm:$0xff]
          %v2274 = vld [vmem:[%s49 + $0x38] sm:$0xff]
          %2275 = vmatprep.subr.mxu0 0.0
          %2276 = vmatpush1.msra.mxu0 %v2267
          %2277 = vmatprep.subr.mxu0 0.0
          %2278 = vmatpush1.msra.mxu0 %v2268
          %2279 = vmatprep.subr.mxu0 0.0
          %2280 = vmatpush1.msra.mxu0 %v2269
          %2281 = vmatprep.subr.mxu0 0.0
          %2282 = vmatpush1.msra.mxu0 %v2270
          %2283 = vmatprep.subr.mxu0 0.0
          %2284 = vmatpush1.msra.mxu0 %v2271
          %2285 = vmatprep.subr.mxu0 0.0
          %2286 = vmatpush1.msra.mxu0 %v2272
          %2287 = vmatprep.subr.mxu0 0.0
          %2288 = vmatpush1.msra.mxu0 %v2273
          %2289 = vmatprep.subr.mxu0 0.0
          %2290 = vmatpush1.msra.mxu0 %v2274
          %2291 = vmatprep.subr.mxu0 0.0
          %2292 = vmatpush1.msra.mxu0 0.0
          %2293 = vmatprep.subr.mxu0 0.0
          %2294 = vmatpush1.msra.mxu0 0.0
          %2295 = vmatprep.subr.mxu0 0.0
          %2296 = vmatpush1.msra.mxu0 0.0
          %2297 = vmatprep.subr.mxu0 0.0
          %2298 = vmatpush1.msra.mxu0 0.0
          %2299 = vmatprep.subr.mxu0 0.0
          %2300 = vmatpush1.msra.mxu0 0.0
          %2301 = vmatprep.subr.mxu0 0.0
          %2302 = vmatpush1.msra.mxu0 0.0
          %2303 = vmatprep.subr.mxu0 0.0
          %2304 = vmatpush1.msra.mxu0 0.0
          %2305 = vmatprep.subr.mxu0 0.0
          %2306 = vmatpush1.msra.mxu0 0.0
          %2307 = vmatprep.subr.mxu0 0.0
          %2308 = vmatpush1.msra.mxu0 0.0
          %2309 = vmatprep.subr.mxu0 0.0
          %2310 = vmatpush1.msra.mxu0 0.0
          %2311 = vmatprep.subr.mxu0 0.0
          %2312 = vmatpush1.msra.mxu0 0.0
          %2313 = vmatprep.subr.mxu0 0.0
          %2314 = vmatpush1.msra.mxu0 0.0
          %2315 = vmatprep.subr.mxu0 0.0
          %2316 = vmatpush1.msra.mxu0 0.0
          %2317 = vmatprep.subr.mxu0 0.0
          %2318 = vmatpush1.msra.mxu0 0.0
          %2319 = vmatprep.subr.mxu0 0.0
          %2320 = vmatpush1.msra.mxu0 0.0
          %2321 = vmatprep.subr.mxu0 0.0
          %2322 = vmatpush1.msra.mxu0 0.0
          %2323 = vmatprep.subr.mxu0 0.0
          %2324 = vmatpush1.msra.mxu0 0.0
          %2325 = vmatprep.subr.mxu0 0.0
          %2326 = vmatpush1.msra.mxu0 0.0
          %2327 = vmatprep.subr.mxu0 0.0
          %2328 = vmatpush1.msra.mxu0 0.0
          %2329 = vmatprep.subr.mxu0 0.0
          %2330 = vmatpush1.msra.mxu0 0.0
          %2331 = vmatprep.subr.mxu0 0.0
          %2332 = vmatpush1.msra.mxu0 0.0
          %2333 = vmatprep.subr.mxu0 0.0
          %2334 = vmatpush1.msra.mxu0 0.0
          %2335 = vmatprep.subr.mxu0 0.0
          %2336 = vmatpush1.msra.mxu0 0.0
          %2337 = vmatprep.subr.mxu0 0.0
          %2338 = vmatpush1.msra.mxu0 0.0
          %2339 = vmatprep.mubr.f32.mxu0 0.0
          %2340 = vmatmul.mubr.f32.gmra.mrb[0].mxu0 %v1271
          %v2341 = vpop.f32.mrb[0].mxu0
          %v2342 = vadd.f32 0.0, %v2341
          %v2343 = vpop.f32.mrb[0].mxu0
          %2344 = vdwg.mxu0
          %2345 = vmatprep.subr.mxu0 0.0
          %2346 = vmatpush1.msra.mxu0 %v2263
          %2347 = vmatprep.subr.mxu0 0.0
          %2348 = vmatpush1.msra.mxu0 %v2264
          %2349 = vmatprep.subr.mxu0 0.0
          %2350 = vmatpush1.msra.mxu0 %v2265
          %2351 = vmatprep.subr.mxu0 0.0
          %2352 = vmatpush1.msra.mxu0 %v2266
          %2353 = vmatprep.subr.mxu0 0.0
          %2354 = vmatpush1.msra.mxu0 0.0
          %2355 = vmatprep.subr.mxu0 0.0
          %2356 = vmatpush1.msra.mxu0 0.0
          %2357 = vmatprep.subr.mxu0 0.0
          %2358 = vmatpush1.msra.mxu0 0.0
          %2359 = vmatprep.subr.mxu0 0.0
          %2360 = vmatpush1.msra.mxu0 0.0
          %2361 = vmatprep.subr.mxu0 0.0
          %2362 = vmatpush1.msra.mxu0 0.0
          %2363 = vmatprep.subr.mxu0 0.0
          %2364 = vmatpush1.msra.mxu0 0.0
          %2365 = vmatprep.subr.mxu0 0.0
          %2366 = vmatpush1.msra.mxu0 0.0
          %2367 = vmatprep.subr.mxu0 0.0
          %2368 = vmatpush1.msra.mxu0 0.0
          %2369 = vmatprep.subr.mxu0 0.0
          %2370 = vmatpush1.msra.mxu0 0.0
          %2371 = vmatprep.subr.mxu0 0.0
          %2372 = vmatpush1.msra.mxu0 0.0
          %2373 = vmatprep.subr.mxu0 0.0
          %2374 = vmatpush1.msra.mxu0 0.0
          %2375 = vmatprep.subr.mxu0 0.0
          %2376 = vmatpush1.msra.mxu0 0.0
          %2377 = vmatprep.subr.mxu0 0.0
          %2378 = vmatpush1.msra.mxu0 0.0
          %2379 = vmatprep.subr.mxu0 0.0
          %2380 = vmatpush1.msra.mxu0 0.0
          %2381 = vmatprep.subr.mxu0 0.0
          %2382 = vmatpush1.msra.mxu0 0.0
          %2383 = vmatprep.subr.mxu0 0.0
          %2384 = vmatpush1.msra.mxu0 0.0
          %2385 = vmatprep.subr.mxu0 0.0
          %2386 = vmatpush1.msra.mxu0 0.0
          %2387 = vmatprep.subr.mxu0 0.0
          %2388 = vmatpush1.msra.mxu0 0.0
          %2389 = vmatprep.subr.mxu0 0.0
          %2390 = vmatpush1.msra.mxu0 0.0
          %2391 = vmatprep.subr.mxu0 0.0
          %2392 = vmatpush1.msra.mxu0 0.0
          %2393 = vmatprep.subr.mxu0 0.0
          %2394 = vmatpush1.msra.mxu0 0.0
          %2395 = vmatprep.subr.mxu0 0.0
          %2396 = vmatpush1.msra.mxu0 0.0
          %2397 = vmatprep.subr.mxu0 0.0
          %2398 = vmatpush1.msra.mxu0 0.0
          %2399 = vmatprep.subr.mxu0 0.0
          %2400 = vmatpush1.msra.mxu0 0.0
          %2401 = vmatprep.subr.mxu0 0.0
          %2402 = vmatpush1.msra.mxu0 0.0
          %2403 = vmatprep.subr.mxu0 0.0
          %2404 = vmatpush1.msra.mxu0 0.0
          %2405 = vmatprep.subr.mxu0 0.0
          %2406 = vmatpush1.msra.mxu0 0.0
          %2407 = vmatprep.subr.mxu0 0.0
          %2408 = vmatpush1.msra.mxu0 0.0
          %2409 = vmatprep.mubr.f32.mxu0 0.0
          %2410 = vmatmul.mubr.f32.gmra.mrb[0].mxu0 %v1634
          %v2411 = vpop.f32.mrb[0].mxu0
          %v2412 = vadd.f32 %v2342, %v2411
          %v2413 = vpop.f32.mrb[0].mxu0
          %2414 = vdwg.mxu0
          %v2415 = vld [vmem:[%s51] sm:$0x1]
          %v2417 = vlaneseq
          %v2418 = vshrl.u32 %v2417, 7
          %v2419 = vsub.s32 0, %v2418
          %v2420 = vrot.slane %v2415, %v2419
          %v2422 = vadd.f32 %v2412, %v2420
          %2423 = vst.msk [vmem:[#allocation2] sm:$0x3] %vm1547, %v2422
          %v2424 = vsub.f32 1.0, %v2259
          %2426 = vset.pattern.permute.xlu0 0
          %2427 = vperm.xlu0 %2426, %v2424
          %v2428 = vpop.permute.xlu0 %2427
          %v2430 = vmul.f32 %v2428, %v1939
          %2432 = vrot.lane.b32.xlu0 %v2430, 8
          %v2433 = vpop.permute.xlu0 %2432
          %vm2435 = vcmask 64512
          %v2436 = vsel %vm2435, %v2430, %v2433
          %v2437 = vlaneseq
          %v2438 = vshrl.u32 %v2437, 7
          %v2439 = vmul.u32 %v2438, 8
          %vm2440 = vcmp.ge.s32.totalorder %v1797, %v2439
          %v2441 = vadd.s32 %v2438, 1
          %v2442 = vmul.u32 %v2441, 8
          %vm2443 = vcmp.lt.s32.totalorder %v1797, %v2442
          %vm2444 = vmand %vm2440, %vm2443
          %v2445 = vsel %vm2444, %v2436, 0.0
          %vm2446 = vcmask 123904
          %2447 = vst.msk [vmem:[#allocation20] sm:$0x3] %vm2446, %v2445
          %2448 = vst.msk [vmem:[#allocation4] sm:$0x3] %vm2260, -1e+30
          %2449 = vst.msk [vmem:[#allocation5] sm:$0x3] %vm2260, 0.0
        $region186: #{tpu_custom_call.1} parent=165 // pred_fallthru
          _
        %v2450 = vld [vmem:[#allocation2] sm:$0x3]
        %v2451 = vld [vmem:[%s1084] sm:$0xff]
        %v2452 = vld [vmem:[%s1084 + $0x8] sm:$0xff]
        %v2453 = vld [vmem:[%s1084 + $0x10] sm:$0xff]
        %v2454 = vld [vmem:[%s1084 + $0x18] sm:$0xff]
        %v2455 = vld [vmem:[%s1176] sm:$0x1]
        %v2457 = vlaneseq
        %v2458 = vshrl.u32 %v2457, 7
        %v2459 = vsub.s32 0, %v2458
        %v2460 = vrot.slane %v2455, %v2459
        %vm2462 = vcmask 261120
        %v2464 = vsel %vm2462, %v2450, 0
        %2466 = vmatprep.subr.mxu0 0.0
        %2467 = vmatpush1.msra.mxu0 %v2451
        %2468 = vmatprep.subr.mxu0 0.0
        %2469 = vmatpush1.msra.mxu0 %v2452
        %2470 = vmatprep.subr.mxu0 0.0
        %2471 = vmatpush1.msra.mxu0 %v2453
        %2472 = vmatprep.subr.mxu0 0.0
        %2473 = vmatpush1.msra.mxu0 %v2454
        %2474 = vmatprep.subr.mxu0 0.0
        %2475 = vmatpush1.msra.mxu0 0.0
        %2476 = vmatprep.subr.mxu0 0.0
        %2477 = vmatpush1.msra.mxu0 0.0
        %2478 = vmatprep.subr.mxu0 0.0
        %2479 = vmatpush1.msra.mxu0 0.0
        %2480 = vmatprep.subr.mxu0 0.0
        %2481 = vmatpush1.msra.mxu0 0.0
        %2482 = vmatprep.subr.mxu0 0.0
        %2483 = vmatpush1.msra.mxu0 0.0
        %2484 = vmatprep.subr.mxu0 0.0
        %2485 = vmatpush1.msra.mxu0 0.0
        %2486 = vmatprep.subr.mxu0 0.0
        %2487 = vmatpush1.msra.mxu0 0.0
        %2488 = vmatprep.subr.mxu0 0.0
        %2489 = vmatpush1.msra.mxu0 0.0
        %2490 = vmatprep.subr.mxu0 0.0
        %2491 = vmatpush1.msra.mxu0 0.0
        %2492 = vmatprep.subr.mxu0 0.0
        %2493 = vmatpush1.msra.mxu0 0.0
        %2494 = vmatprep.subr.mxu0 0.0
        %2495 = vmatpush1.msra.mxu0 0.0
        %2496 = vmatprep.subr.mxu0 0.0
        %2497 = vmatpush1.msra.mxu0 0.0
        %2498 = vmatprep.subr.mxu0 0.0
        %2499 = vmatpush1.msra.mxu0 0.0
        %2500 = vmatprep.subr.mxu0 0.0
        %2501 = vmatpush1.msra.mxu0 0.0
        %2502 = vmatprep.subr.mxu0 0.0
        %2503 = vmatpush1.msra.mxu0 0.0
        %2504 = vmatprep.subr.mxu0 0.0
        %2505 = vmatpush1.msra.mxu0 0.0
        %2506 = vmatprep.subr.mxu0 0.0
        %2507 = vmatpush1.msra.mxu0 0.0
        %2508 = vmatprep.subr.mxu0 0.0
        %2509 = vmatpush1.msra.mxu0 0.0
        %2510 = vmatprep.subr.mxu0 0.0
        %2511 = vmatpush1.msra.mxu0 0.0
        %2512 = vmatprep.subr.mxu0 0.0
        %2513 = vmatpush1.msra.mxu0 0.0
        %2514 = vmatprep.subr.mxu0 0.0
        %2515 = vmatpush1.msra.mxu0 0.0
        %2516 = vmatprep.subr.mxu0 0.0
        %2517 = vmatpush1.msra.mxu0 0.0
        %2518 = vmatprep.subr.mxu0 0.0
        %2519 = vmatpush1.msra.mxu0 0.0
        %2520 = vmatprep.subr.mxu0 0.0
        %2521 = vmatpush1.msra.mxu0 0.0
        %2522 = vmatprep.subr.mxu0 0.0
        %2523 = vmatpush1.msra.mxu0 0.0
        %2524 = vmatprep.subr.mxu0 0.0
        %2525 = vmatpush1.msra.mxu0 0.0
        %2526 = vmatprep.subr.mxu0 0.0
        %2527 = vmatpush1.msra.mxu0 0.0
        %2528 = vmatprep.subr.mxu0 0.0
        %2529 = vmatpush1.msra.mxu0 0.0
        %2530 = vmatprep.mubr.f32.mxu0 0.0
        %2531 = vmatmul.mubr.f32.gmra.mrb[0].mxu0 %v2464
        %v2532 = vpop.f32.mrb[0].mxu0
        %v2533 = vadd.f32 %v2460, %v2532
        %v2534 = vpop.f32.mrb[0].mxu0
        %2535 = vdwg.mxu0
        %2536 = vst [vmem:[%s1169] sm:$0x3] %v2533
        %v2537 = vld [vmem:[#allocation4] sm:$0x3]
        %vm2538 = vcmask 1041408
        %v2539 = vsel %vm2538, %v2533, -inf
        %2540 = vmax.xlane.f32.xlu0 %v2539
        %v2541 = vpop.xlane.xlu0 %2540
        %v2542 = vmax.f32 %v2537, %v2541
        %v2543 = vld [vmem:[#allocation5] sm:$0x3]
        %v2544 = vsub.f32 %v2537, %v2542
        %v2545 = vmul.f32 %v2544, 1.442695
        %v2546 = vpow.pop %v2545
        %v2547 = vmul.f32 %v2543, %v2546
        %2549 = vset.pattern.permute.xlu0 0
        %2550 = vperm.xlu0 %2549, %v2542
        %v2551 = vpop.permute.xlu0 %2550
        %v2553 = vsub.f32 %v2533, %v2551
        %v2554 = vmul.f32 %v2553, 1.442695
        %v2555 = vpow.pop %v2554
        %v2556 = vsel %vm2538, %v2555, 0.0
        %2557 = vadd.xlane.f32.xlu0 %v2556
        %v2558 = vpop.xlane.xlu0 %2557
        %v2559 = vadd.f32 %v2547, %v2558
        %vm2560 = vcmask 1024
        %2561 = vst.msk [vmem:[#allocation5] sm:$0x3] %vm2560, %v2559
        %2562 = vst.msk [vmem:[#allocation4] sm:$0x3] %vm2560, %v2542
        %p2563 = scmp.eq.s32.totalorder %s95, 2
        // Predicated region
        $region187: #{tpu_custom_call.1} parent=165 // pred_check
          %p2564 = pneg %p2563
        $region188: #{tpu_custom_call.1} parent=165 // pred_check_branch
          %2566 = sbr.rel (%p2564) target = $region190
        $region189: #{tpu_custom_call.1} parent=165 // pred_region
          %v2567 = vld [vmem:[#allocation4] sm:$0x3]
          %2568 = vst.msk [vmem:[%s71] sm:$0x3] %vm2560, %v2567
          %v2569 = vld [vmem:[#allocation3] sm:$0x3]
          %v2570 = vld [vmem:[#allocation5] sm:$0x3]
          %v2571 = vrcp.pop %v2570
          %v2572 = vmul.f32 %v2569, %v2571
          %2573 = vst.msk [vmem:[%s73] sm:$0x3] %vm2560, %v2572
        $region190: #{tpu_custom_call.1} parent=165 // pred_fallthru
          _
        %s2574 = sand.u32 %s827, 1
        %s2575 = scalar_lea.sflag [#allocation22], %s2574
        %s2576 = sand.u32 %s827, 1
        %s2577 = smul.addr %s2576, 2
        %s2578 = scalar_lea.vmem [#allocation21], %s2577
        // Predicated region
        $region191: #{tpu_custom_call.1} parent=165 // pred_check
          %p2579 = pneg %p706
        $region192: #{tpu_custom_call.1} parent=165 // pred_check_branch
          %2581 = sbr.rel (%p2579) target = $region194
        $region193: #{tpu_custom_call.1} parent=165 // pred_region
          %s2583 = ssub.s32 32, 32
          %2584 = vsyncadd [#allocation9], %s2583
          %s2586 = sshll.u32 [#allocation14], 4
          %s2587 = int_to_ptr.vmem [resolvable:$true] %s2586
          %2589 = dma.vmem_to_hbm [thread:$0]  %s2587, 32, %s57, [#allocation9]
        $region194: #{tpu_custom_call.1} parent=165 // pred_fallthru
          _
        // Predicated region
        $region195: #{tpu_custom_call.1} parent=165 // pred_check
          %p2590 = pneg %p727
        $region196: #{tpu_custom_call.1} parent=165 // pred_check_branch
          %2592 = sbr.rel (%p2590) target = $region198
        $region197: #{tpu_custom_call.1} parent=165 // pred_region
          %s2594 = ssub.s32 32, 32
          %2595 = vsyncadd [#allocation16], %s2594
          %s2597 = sshll.u32 [#allocation15], 4
          %s2598 = int_to_ptr.vmem [resolvable:$true] %s2597
          %2600 = dma.vmem_to_hbm [thread:$0]  %s2598, 32, %s59, [#allocation16]
        $region198: #{tpu_custom_call.1} parent=165 // pred_fallthru
          _
        // Predicated region
        $region199: #{tpu_custom_call.1} parent=165 // pred_check
          %p2601 = pneg %p748
        $region200: #{tpu_custom_call.1} parent=165 // pred_check_branch
          %2603 = sbr.rel (%p2601) target = $region202
        $region201: #{tpu_custom_call.1} parent=165 // pred_region
          %s2605 = ssub.s32 32, 32
          %2606 = vsyncadd [#allocation16], %s2605
          %s2608 = sshll.u32 [#allocation17], 4
          %s2609 = int_to_ptr.vmem [resolvable:$true] %s2608
          %2611 = dma.vmem_to_hbm [thread:$0]  %s2609, 32, %s61, [#allocation16]
        $region202: #{tpu_custom_call.1} parent=165 // pred_fallthru
          _
        // Predicated region
        $region203: #{tpu_custom_call.1} parent=165 // pred_check
          %p2612 = pneg %p769
        $region204: #{tpu_custom_call.1} parent=165 // pred_check_branch
          %2614 = sbr.rel (%p2612) target = $region206
        $region205: #{tpu_custom_call.1} parent=165 // pred_region
          _
        $region206: #{tpu_custom_call.1} parent=165 // pred_fallthru
          _
        // Predicated region
        $region207: #{tpu_custom_call.1} parent=165 // pred_check
          %p2615 = pneg %p790
        $region208: #{tpu_custom_call.1} parent=165 // pred_check_branch
          %2617 = sbr.rel (%p2615) target = $region210
        $region209: #{tpu_custom_call.1} parent=165 // pred_region
          %s2619 = ssub.s32 32, 32
          %2620 = vsyncadd [#allocation19], %s2619
          %s2622 = sshll.u32 [#allocation18], 4
          %s2623 = int_to_ptr.vmem [resolvable:$true] %s2622
          %2625 = dma.vmem_to_hbm [thread:$0]  %s2623, 32, %s65, [#allocation19]
        $region210: #{tpu_custom_call.1} parent=165 // pred_fallthru
          _
        // Predicated region
        $region211: #{tpu_custom_call.1} parent=165 // pred_check
          %p2626 = pneg %p811
        $region212: #{tpu_custom_call.1} parent=165 // pred_check_branch
          %2628 = sbr.rel (%p2626) target = $region214
        $region213: #{tpu_custom_call.1} parent=165 // pred_region
          %s2630 = ssub.s32 32, 32
          %2631 = vsyncadd [#allocation19], %s2630
          %s2633 = sshll.u32 [#allocation20], 4
          %s2634 = int_to_ptr.vmem [resolvable:$true] %s2633
          %2636 = dma.vmem_to_hbm [thread:$0]  %s2634, 32, %s67, [#allocation19]
        $region214: #{tpu_custom_call.1} parent=165 // pred_fallthru
          _
        // Predicated region
        $region215: #{tpu_custom_call.1} parent=165 // pred_check
          %p2637 = pneg %p837
        $region216: #{tpu_custom_call.1} parent=165 // pred_check_branch
          %2639 = sbr.rel (%p2637) target = $region218
        $region217: #{tpu_custom_call.1} parent=165 // pred_region
          %s2641 = ssub.s32 32, 32
          %2642 = vsyncadd %s2575, %s2641
          %s2643 = smul.addr %s95, 32
          %s2644 = scalar_lea.hbm %s69, %s2643
          %s2646 = sshll.u32 %s2578, 4
          %s2647 = int_to_ptr.vmem [resolvable:$true] %s2646
          %2649 = dma.vmem_to_hbm [thread:$0]  %s2647, 32, %s2644, %s2575
        $region218: #{tpu_custom_call.1} parent=165 // pred_fallthru
          _
        // Predicated region
        $region219: #{tpu_custom_call.1} parent=165 // pred_check
          %p2650 = pneg %p858
        $region220: #{tpu_custom_call.1} parent=165 // pred_check_branch
          %2652 = sbr.rel (%p2650) target = $region222
        $region221: #{tpu_custom_call.1} parent=165 // pred_region
          _
        $region222: #{tpu_custom_call.1} parent=165 // pred_fallthru
          _
        // Predicated region
        $region223: #{tpu_custom_call.1} parent=165 // pred_check
          %p2653 = pneg %p879
        $region224: #{tpu_custom_call.1} parent=165 // pred_check_branch
          %2655 = sbr.rel (%p2653) target = $region226
        $region225: #{tpu_custom_call.1} parent=165 // pred_region
          _
        $region226: #{tpu_custom_call.1} parent=165 // pred_fallthru
          _
        // Predicated region
        $region227: #{tpu_custom_call.1} parent=165 // pred_check
          %p2656 = pneg %p706
        $region228: #{tpu_custom_call.1} parent=165 // pred_check_branch
          %2658 = sbr.rel (%p2656) target = $region230
        $region229: #{tpu_custom_call.1} parent=165 // pred_region
          %2659 = dma.done [#allocation9], 32
        $region230: #{tpu_custom_call.1} parent=165 // pred_fallthru
          _
        // Predicated region
        $region231: #{tpu_custom_call.1} parent=165 // pred_check
          %p2660 = pneg %p727
        $region232: #{tpu_custom_call.1} parent=165 // pred_check_branch
          %2662 = sbr.rel (%p2660) target = $region234
        $region233: #{tpu_custom_call.1} parent=165 // pred_region
          %2663 = dma.done [#allocation16], 32
        $region234: #{tpu_custom_call.1} parent=165 // pred_fallthru
          _
        // Predicated region
        $region235: #{tpu_custom_call.1} parent=165 // pred_check
          %p2664 = pneg %p748
        $region236: #{tpu_custom_call.1} parent=165 // pred_check_branch
          %2666 = sbr.rel (%p2664) target = $region238
        $region237: #{tpu_custom_call.1} parent=165 // pred_region
          %2667 = dma.done [#allocation16], 32
        $region238: #{tpu_custom_call.1} parent=165 // pred_fallthru
          _
        // Predicated region
        $region239: #{tpu_custom_call.1} parent=165 // pred_check
          %p2668 = pneg %p769
        $region240: #{tpu_custom_call.1} parent=165 // pred_check_branch
          %2670 = sbr.rel (%p2668) target = $region242
        $region241: #{tpu_custom_call.1} parent=165 // pred_region
          _
        $region242: #{tpu_custom_call.1} parent=165 // pred_fallthru
          _
        // Predicated region
        $region243: #{tpu_custom_call.1} parent=165 // pred_check
          %p2671 = pneg %p790
        $region244: #{tpu_custom_call.1} parent=165 // pred_check_branch
          %2673 = sbr.rel (%p2671) target = $region246
        $region245: #{tpu_custom_call.1} parent=165 // pred_region
          %2674 = dma.done [#allocation19], 32
        $region246: #{tpu_custom_call.1} parent=165 // pred_fallthru
          _
        // Predicated region
        $region247: #{tpu_custom_call.1} parent=165 // pred_check
          %p2675 = pneg %p811
        $region248: #{tpu_custom_call.1} parent=165 // pred_check_branch
          %2677 = sbr.rel (%p2675) target = $region250
        $region249: #{tpu_custom_call.1} parent=165 // pred_region
          %2678 = dma.done [#allocation19], 32
        $region250: #{tpu_custom_call.1} parent=165 // pred_fallthru
          _
        // Predicated region
        $region251: #{tpu_custom_call.1} parent=165 // pred_check
          %p2679 = pneg %p858
        $region252: #{tpu_custom_call.1} parent=165 // pred_check_branch
          %2681 = sbr.rel (%p2679) target = $region254
        $region253: #{tpu_custom_call.1} parent=165 // pred_region
          _
        $region254: #{tpu_custom_call.1} parent=165 // pred_fallthru
          _
        // Predicated region
        $region255: #{tpu_custom_call.1} parent=165 // pred_check
          %p2682 = pneg %p879
        $region256: #{tpu_custom_call.1} parent=165 // pred_check_branch
          %2684 = sbr.rel (%p2682) target = $region258
        $region257: #{tpu_custom_call.1} parent=165 // pred_region
          _
        $region258: #{tpu_custom_call.1} parent=165 // pred_fallthru
          _
      $region166: #{tpu_custom_call.1} parent=5 // pred_fallthru
        _
      %p2685 = scmp.le.s32.totalorder 2, %s90
      // Predicated region
      $region259: #{tpu_custom_call.1} parent=5 // pred_check
        %p2686 = pneg %p2685
      $region260: #{tpu_custom_call.1} parent=5 // pred_check_branch
        %2688 = sbr.rel (%p2686) target = $region262
      $region261: #{tpu_custom_call.1} parent=5 // pred_region
        %s2689 = ssub.s32 %s90, 2
        // Predicated region
        $region263: #{tpu_custom_call.1} parent=261 // pred_check
          %p2690 = pneg %p843
        $region264: #{tpu_custom_call.1} parent=261 // pred_check_branch
          %2692 = sbr.rel (%p2690) target = $region266
        $region265: #{tpu_custom_call.1} parent=261 // pred_region
          %s2693 = sand.u32 %s828, 1
          %s2694 = scalar_lea.sflag [#allocation22], %s2693
          %s2695 = sand.u32 %s828, 1
          %s2696 = smul.addr %s2695, 2
          %s2697 = scalar_lea.vmem [#allocation21], %s2696
          %2698 = dma.done %s2694, 32
        $region266: #{tpu_custom_call.1} parent=261 // pred_fallthru
          _
      $region262: #{tpu_custom_call.1} parent=5 // pred_fallthru
        _
    $region6: #{tpu_custom_call.1} parent=1 // loop_footer
      %s94 = sadd.s32 1, %s90
    $region7: #{tpu_custom_call.1} parent=1 // loop_footer_branch
      %89 = sbr.rel target = $region3
    $region8: #{tpu_custom_call.1} parent=1 // loop_exit
      _
    %2699 = vsyncpa [#allocation8], 1
    %s2700 = scalar_lea.sflag [#allocation8], 1
    %2701 = vsyncpa %s2700, 1
    %2702 = vsyncpa [#allocation11], 1
    %2703 = vsyncpa [#allocation9], 1
    %s2704 = scalar_lea.sflag [#allocation9], 1
    %2705 = vsyncpa %s2704, 1
    %2706 = vsyncpa [#allocation16], 1
    %2707 = vsyncpa [#allocation19], 1
    %2708 = vsyncpa [#allocation22], 1
    %s2709 = scalar_lea.sflag [#allocation22], 1
    %2710 = vsyncpa %s2709, 1

</llo_original>
